<compile_context>
chip_gen: v7x
topology: tpu7x:2x2x1
jax: 0.10.0
libtpu: 0.0.40
codegen_flags: <defaults>
</compile_context>

<pallas_src>
import functools

import jax
import jax.numpy as jnp
from jax.experimental import pallas as pl
from jax.experimental.pallas import tpu as pltpu

IN_DIM = 784
HID_DIM = 400
LAT_DIM = 40
VAR_OFF = 128          # var columns start on a 128-lane (vreg) boundary
ENC_OUT = 256          # fused/padded encoder-head width: mu @ [0,40), var @ [128,168)


def _vae_kernel(x_ref,
                w1_ref, b1_ref,
                wenc_ref, benc_ref,
                w3_ref, b3_ref,
                w4_ref, b4_ref,
                eps_ref,
                recon_ref, y_ref):
    # ---- encoder: fc1 + relu (bf16 x bf16 -> f32 on the MXU, f32 epilogue) ----
    h1 = jnp.dot(x_ref[...], w1_ref[...], preferred_element_type=jnp.float32)
    h1 = jnp.maximum(h1 + b1_ref[...], 0.0)

    # ---- encoder head: fused fc21|fc22, lane-padded so var starts at lane 128 ----
    y = jnp.dot(h1.astype(jnp.bfloat16), wenc_ref[...],
                preferred_element_type=jnp.float32) + benc_ref[...]
    y_ref[...] = y                                    # lane-dense [TM, 256] store
    mu = y[:, :LAT_DIM]                               # lanes 0..39   (aligned @ 0)
    var = y[:, VAR_OFF:VAR_OFF + LAT_DIM]             # lanes 128..167 (vreg aligned)

    # ---- reparameterization: z = eps * var + mu (matches e.mul(var).add(mu)) ----
    z = eps_ref[...] * var + mu                       # f32 elementwise

    # ---- decoder: fc3 + relu ----
    h3 = jnp.dot(z.astype(jnp.bfloat16), w3_ref[...],
                 preferred_element_type=jnp.float32)
    h3 = jnp.maximum(h3 + b3_ref[...], 0.0)

    # ---- decoder output: fc4 + sigmoid (exp on EUP, exact divide -> BCE-safe) ----
    logits = jnp.dot(h3.astype(jnp.bfloat16), w4_ref[...],
                     preferred_element_type=jnp.float32) + b4_ref[...]
    recon = 1.0 / (1.0 + jnp.exp(-logits))
    recon_ref[...] = recon.astype(recon_ref.dtype)


def _round_up(n, m):
    return ((n + m - 1) // m) * m


def vae_dnn_forward(x, params, eps, *, tm=512):
    """Fused VAE forward. x: [B, 784], eps: [B, 40]. Returns (recon, mu, var, B)."""
    B = x.shape[0]

    # Batch tile: up to `tm` rows (sublane-aligned); small batches get the
    # smallest 8-aligned tile covering the batch.
    TM = _round_up(min(tm, _round_up(B, 8)), 8)
    Bp = _round_up(B, TM)

    x_bf = x.astype(jnp.bfloat16)
    eps = eps.astype(jnp.float32)
    if Bp != B:
        pad = Bp - B
        x_bf = jnp.pad(x_bf, ((0, pad), (0, 0)))
        eps = jnp.pad(eps, ((0, pad), (0, 0)))

    # ---- pack parameters: bf16 weights; fc21|fc22 fused into a 256-wide head
    #      with var's columns starting at lane 128 (vreg-aligned in-kernel slice).
    w1 = params["w1"].astype(jnp.bfloat16)
    w_enc = jnp.zeros((HID_DIM, ENC_OUT), jnp.float32)
    w_enc = w_enc.at[:, :LAT_DIM].set(params["w21"])
    w_enc = w_enc.at[:, VAR_OFF:VAR_OFF + LAT_DIM].set(params["w22"])
    w_enc = w_enc.astype(jnp.bfloat16)
    b_enc = jnp.zeros((1, ENC_OUT), jnp.float32)
    b_enc = b_enc.at[:, :LAT_DIM].set(params["b21"])
    b_enc = b_enc.at[:, VAR_OFF:VAR_OFF + LAT_DIM].set(params["b22"])
    w3 = params["w3"].astype(jnp.bfloat16)
    w4 = params["w4"].astype(jnp.bfloat16)
    b1, b3, b4 = params["b1"], params["b3"], params["b4"]

    grid = (Bp // TM,)

    def batched(width):
        return pl.BlockSpec((TM, width), lambda i: (i, 0))

    def resident(shape):
        # Constant block index -> DMA'd once, stays resident in VMEM across the
        # grid. (pl.Buffered(1) would drop the unused second buffer, but the
        # ~1.4 MB it saves is well inside the 32 MiB budget here.)
        return pl.BlockSpec(shape, lambda i: (0, 0))

    in_specs = [
        batched(IN_DIM),                    # x (bf16)
        resident((IN_DIM, HID_DIM)),        # w1 (bf16)
        resident((1, HID_DIM)),             # b1 (f32)
        resident((HID_DIM, ENC_OUT)),       # w21|w22 fused, lane-padded (bf16)
        resident((1, ENC_OUT)),             # b21|b22 fused, lane-padded (f32)
        resident((LAT_DIM, HID_DIM)),       # w3 (bf16)
        resident((1, HID_DIM)),             # b3 (f32)
        resident((HID_DIM, IN_DIM)),        # w4 (bf16)
        resident((1, IN_DIM)),              # b4 (f32)
        batched(LAT_DIM),                   # eps (f32)
    ]
    out_specs = (
        batched(IN_DIM),                    # recon (bf16, 784-wide stream)
        batched(ENC_OUT),                   # y = mu|0|var|0 (f32, lane-dense 256-wide)
    )
    out_shapes = (
        jax.ShapeDtypeStruct((Bp, IN_DIM), jnp.bfloat16),
        jax.ShapeDtypeStruct((Bp, ENC_OUT), jnp.float32),
    )

    flops = 2 * Bp * (IN_DIM * HID_DIM + HID_DIM * ENC_OUT
                      + LAT_DIM * HID_DIM + HID_DIM * IN_DIM)
    weight_bytes = 2 * (w1.size + w_enc.size + w3.size + w4.size) \
        + 4 * (b1.size + b_enc.size + b3.size + b4.size)
    io_bytes = 2 * x_bf.size + 4 * eps.size + 2 * Bp * IN_DIM + 4 * Bp * ENC_OUT
    cost = pl.CostEstimate(flops=flops,
                           transcendentals=Bp * IN_DIM,
                           bytes_accessed=weight_bytes + io_bytes)

    recon, y = pl.pallas_call(
        _vae_kernel,
        out_shape=out_shapes,
        grid=grid,
        in_specs=in_specs,
        out_specs=out_specs,
        compiler_params=pltpu.CompilerParams(
            # Batch axis is embarrassingly parallel (megacore sharding when the
            # grid has >= 2 steps); lift v5e's 16 MiB scoped-VMEM default so
            # TM up to 1024 can be swept on every generation.
            dimension_semantics=("parallel",),
            vmem_limit_bytes=32 * 1024 * 1024),
        cost_estimate=cost,
    )(x_bf, w1, b1, w_enc, b_enc, w3, b3, w4, b4, eps)

    recon = recon[:B].astype(jnp.float32)
    mu = y[:B, :LAT_DIM]
    var = y[:B, VAR_OFF:VAR_OFF + LAT_DIM]
    return recon, mu, var, B


def init_params(key):
    """Deterministic parameter init matching the PyTorch layer shapes.

    PyTorch stores Linear weights as [out, in]; we store them pre-transposed
    as [in, out] for x @ W.
    """
    def linear(k, fan_in, fan_out):
        kw, kb = jax.random.split(k)
        bound = 1.0 / jnp.sqrt(jnp.float32(fan_in))
        w = jax.random.uniform(kw, (fan_in, fan_out), jnp.float32, -bound, bound)
        b = jax.random.uniform(kb, (1, fan_out), jnp.float32, -bound, bound)
        return w, b

    k1, k21, k22, k3, k4 = jax.random.split(key, 5)
    w1, b1 = linear(k1, IN_DIM, HID_DIM)
    w21, b21 = linear(k21, HID_DIM, LAT_DIM)
    w22, b22 = linear(k22, HID_DIM, LAT_DIM)
    w3, b3 = linear(k3, LAT_DIM, HID_DIM)
    w4, b4 = linear(k4, HID_DIM, IN_DIM)
    return dict(w1=w1, b1=b1, w21=w21, b21=b21, w22=w22, b22=b22,
                w3=w3, b3=b3, w4=w4, b4=b4)


if __name__ == "__main__":
    key = jax.random.PRNGKey(0)
    k_params, k_x, k_eps = jax.random.split(key, 3)

    B = 24
    params = init_params(k_params)
    x = jax.random.uniform(k_x, (B, IN_DIM), jnp.float32)     # MNIST-like input in [0,1)
    # TODO(synk): torch.randn inside reparameterization has no in-kernel analog;
    # eps is sampled host-side and passed in (same math: z = eps*var + mu).
    eps = jax.random.normal(k_eps, (B, LAT_DIM), jnp.float32)

    # tm=16 -> 2 grid steps at this toy batch, exercising padding + pipelining.
    fwd = jax.jit(functools.partial(vae_dnn_forward, params=params, eps=eps, tm=16))
    recon, mu, var, bsz = fwd(x)
    jax.block_until_ready((recon, mu, var))

    # ---- plain-JAX reference applying the same bf16 roundings as the kernel ----
    hp = jax.lax.Precision.HIGHEST
    bf = lambda a: a.astype(jnp.bfloat16).astype(jnp.float32)
    h1 = jnp.maximum(jnp.dot(bf(x), bf(params["w1"]), precision=hp) + params["b1"], 0.0)
    h1b = bf(h1)
    mu_ref = jnp.dot(h1b, bf(params["w21"]), precision=hp) + params["b21"]
    var_ref = jnp.dot(h1b, bf(params["w22"]), precision=hp) + params["b22"]
    z_ref = eps * var_ref + mu_ref
    h3 = jnp.maximum(jnp.dot(bf(z_ref), bf(params["w3"]), precision=hp) + params["b3"], 0.0)
    recon_ref = jax.nn.sigmoid(jnp.dot(bf(h3), bf(params["w4"]), precision=hp) + params["b4"])

    assert recon.shape == (B, IN_DIM) and mu.shape == (B, LAT_DIM) and var.shape == (B, LAT_DIM)
    assert int(bsz) == B
    assert jnp.allclose(mu, mu_ref, atol=1e-2, rtol=1e-2)
    assert jnp.allclose(var, var_ref, atol=1e-2, rtol=1e-2)
    # recon is stored as bf16 -> looser tolerance.
    assert jnp.allclose(recon, recon_ref, atol=2e-2)

    print("KERNEL_OK")
</pallas_src>

<mosaic_0001>
module attributes {stable_mosaic.version = 11 : i64} {
  func.func @_vae_kernel(%arg0: i32, %arg1: memref<16x784xbf16, #tpu.memory_space<vmem>>, %arg2: memref<784x400xbf16, #tpu.memory_space<vmem>>, %arg3: memref<1x400xf32, #tpu.memory_space<vmem>>, %arg4: memref<400x256xbf16, #tpu.memory_space<vmem>>, %arg5: memref<1x256xf32, #tpu.memory_space<vmem>>, %arg6: memref<40x400xbf16, #tpu.memory_space<vmem>>, %arg7: memref<1x400xf32, #tpu.memory_space<vmem>>, %arg8: memref<400x784xbf16, #tpu.memory_space<vmem>>, %arg9: memref<1x784xf32, #tpu.memory_space<vmem>>, %arg10: memref<16x40xf32, #tpu.memory_space<vmem>>, %arg11: memref<16x784xbf16, #tpu.memory_space<vmem>>, %arg12: memref<16x256xf32, #tpu.memory_space<vmem>>) attributes {dimension_semantics = [#tpu.dimension_semantics<parallel>], iteration_bounds = array<i64: 2>, scalar_prefetch = 0 : i64, scratch_operands = 0 : i64, tpu.core_type = #tpu.core_type<tc>, window_params = [{transform_indices = @transform_0, window_bounds = array<i64: 16, 784>}, {pipeline_mode = #tpu.pipeline_mode<synchronous>, transform_indices = @transform_1, window_bounds = array<i64: 784, 400>}, {pipeline_mode = #tpu.pipeline_mode<synchronous>, transform_indices = @transform_2, window_bounds = array<i64: 1, 400>}, {pipeline_mode = #tpu.pipeline_mode<synchronous>, transform_indices = @transform_3, window_bounds = array<i64: 400, 256>}, {pipeline_mode = #tpu.pipeline_mode<synchronous>, transform_indices = @transform_4, window_bounds = array<i64: 1, 256>}, {pipeline_mode = #tpu.pipeline_mode<synchronous>, transform_indices = @transform_5, window_bounds = array<i64: 40, 400>}, {pipeline_mode = #tpu.pipeline_mode<synchronous>, transform_indices = @transform_6, window_bounds = array<i64: 1, 400>}, {pipeline_mode = #tpu.pipeline_mode<synchronous>, transform_indices = @transform_7, window_bounds = array<i64: 400, 784>}, {pipeline_mode = #tpu.pipeline_mode<synchronous>, transform_indices = @transform_8, window_bounds = array<i64: 1, 784>}, {transform_indices = @transform_9, window_bounds = array<i64: 16, 40>}, {transform_indices = @transform_10, window_bounds = array<i64: 16, 784>}, {transform_indices = @transform_11, window_bounds = array<i64: 16, 256>}]} {
    %c0 = arith.constant 0 : index
    %c0_0 = arith.constant 0 : index
    %0 = vector.load %arg1[%c0, %c0_0] : memref<16x784xbf16, #tpu.memory_space<vmem>>, vector<16x784xbf16>
    %c0_1 = arith.constant 0 : index
    %c0_2 = arith.constant 0 : index
    %1 = vector.load %arg2[%c0_1, %c0_2] : memref<784x400xbf16, #tpu.memory_space<vmem>>, vector<784x400xbf16>
    %cst = arith.constant dense<0.000000e+00> : vector<16x400xf32>
    %2 = tpu.matmul %0, %1, %cst {dimension_numbers = #tpu.dot_dimension_numbers<[1], [0], [0], [1], [0, 0, 1, 1], [], []>} : vector<16x784xbf16>, vector<784x400xbf16>, vector<16x400xf32> -> vector<16x400xf32>
    %c0_3 = arith.constant 0 : index
    %c0_4 = arith.constant 0 : index
    %3 = vector.load %arg3[%c0_3, %c0_4] : memref<1x400xf32, #tpu.memory_space<vmem>>, vector<1x400xf32>
    %4 = vector.broadcast %3 : vector<1x400xf32> to vector<16x400xf32>
    %5 = arith.addf %2, %4 : vector<16x400xf32>
    %cst_5 = arith.constant 0.000000e+00 : f32
    %6 = vector.broadcast %cst_5 : f32 to vector<16x400xf32>
    %7 = arith.maximumf %5, %6 : vector<16x400xf32>
    %8 = arith.truncf %7 : vector<16x400xf32> to vector<16x400xbf16>
    %c0_6 = arith.constant 0 : index
    %c0_7 = arith.constant 0 : index
    %9 = vector.load %arg4[%c0_6, %c0_7] : memref<400x256xbf16, #tpu.memory_space<vmem>>, vector<400x256xbf16>
    %cst_8 = arith.constant dense<0.000000e+00> : vector<16x256xf32>
    %10 = tpu.matmul %8, %9, %cst_8 {dimension_numbers = #tpu.dot_dimension_numbers<[1], [0], [0], [1], [0, 0, 1, 1], [], []>} : vector<16x400xbf16>, vector<400x256xbf16>, vector<16x256xf32> -> vector<16x256xf32>
    %c0_9 = arith.constant 0 : index
    %c0_10 = arith.constant 0 : index
    %11 = vector.load %arg5[%c0_9, %c0_10] : memref<1x256xf32, #tpu.memory_space<vmem>>, vector<1x256xf32>
    %12 = vector.broadcast %11 : vector<1x256xf32> to vector<16x256xf32>
    %13 = arith.addf %10, %12 : vector<16x256xf32>
    %c0_11 = arith.constant 0 : index
    %c0_12 = arith.constant 0 : index
    %14 = vector.load %arg12[%c0_11, %c0_12] : memref<16x256xf32, #tpu.memory_space<vmem>>, vector<16x256xf32>
    tpu.vector_store %arg12[%c0_11, %c0_12], %13 {strides = array<i32>} : memref<16x256xf32, #tpu.memory_space<vmem>>, vector<16x256xf32>,
    %15 = vector.extract_strided_slice %13 {offsets = [0, 0], sizes = [16, 40], strides = [1, 1]} : vector<16x256xf32> to vector<16x40xf32>
    %16 = vector.extract_strided_slice %13 {offsets = [0, 128], sizes = [16, 40], strides = [1, 1]} : vector<16x256xf32> to vector<16x40xf32>
    %c0_13 = arith.constant 0 : index
    %c0_14 = arith.constant 0 : index
    %17 = vector.load %arg10[%c0_13, %c0_14] : memref<16x40xf32, #tpu.memory_space<vmem>>, vector<16x40xf32>
    %18 = arith.mulf %17, %16 : vector<16x40xf32>
    %19 = arith.addf %18, %15 : vector<16x40xf32>
    %20 = arith.truncf %19 : vector<16x40xf32> to vector<16x40xbf16>
    %c0_15 = arith.constant 0 : index
    %c0_16 = arith.constant 0 : index
    %21 = vector.load %arg6[%c0_15, %c0_16] : memref<40x400xbf16, #tpu.memory_space<vmem>>, vector<40x400xbf16>
    %cst_17 = arith.constant dense<0.000000e+00> : vector<16x400xf32>
    %22 = tpu.matmul %20, %21, %cst_17 {dimension_numbers = #tpu.dot_dimension_numbers<[1], [0], [0], [1], [0, 0, 1, 1], [], []>} : vector<16x40xbf16>, vector<40x400xbf16>, vector<16x400xf32> -> vector<16x400xf32>
    %c0_18 = arith.constant 0 : index
    %c0_19 = arith.constant 0 : index
    %23 = vector.load %arg7[%c0_18, %c0_19] : memref<1x400xf32, #tpu.memory_space<vmem>>, vector<1x400xf32>
    %24 = vector.broadcast %23 : vector<1x400xf32> to vector<16x400xf32>
    %25 = arith.addf %22, %24 : vector<16x400xf32>
    %cst_20 = arith.constant 0.000000e+00 : f32
    %26 = vector.broadcast %cst_20 : f32 to vector<16x400xf32>
    %27 = arith.maximumf %25, %26 : vector<16x400xf32>
    %28 = arith.truncf %27 : vector<16x400xf32> to vector<16x400xbf16>
    %c0_21 = arith.constant 0 : index
    %c0_22 = arith.constant 0 : index
    %29 = vector.load %arg8[%c0_21, %c0_22] : memref<400x784xbf16, #tpu.memory_space<vmem>>, vector<400x784xbf16>
    %cst_23 = arith.constant dense<0.000000e+00> : vector<16x784xf32>
    %30 = tpu.matmul %28, %29, %cst_23 {dimension_numbers = #tpu.dot_dimension_numbers<[1], [0], [0], [1], [0, 0, 1, 1], [], []>} : vector<16x400xbf16>, vector<400x784xbf16>, vector<16x784xf32> -> vector<16x784xf32>
    %c0_24 = arith.constant 0 : index
    %c0_25 = arith.constant 0 : index
    %31 = vector.load %arg9[%c0_24, %c0_25] : memref<1x784xf32, #tpu.memory_space<vmem>>, vector<1x784xf32>
    %32 = vector.broadcast %31 : vector<1x784xf32> to vector<16x784xf32>
    %33 = arith.addf %30, %32 : vector<16x784xf32>
    %cst_26 = arith.constant 0.000000e+00 : f32
    %34 = vector.broadcast %cst_26 : f32 to vector<16x784xf32>
    %35 = arith.subf %34, %33 : vector<16x784xf32>
    %36 = math.exp %35 : vector<16x784xf32>
    %cst_27 = arith.constant 1.000000e+00 : f32
    %37 = vector.broadcast %cst_27 : f32 to vector<16x784xf32>
    %38 = arith.addf %37, %36 : vector<16x784xf32>
    %cst_28 = arith.constant 1.000000e+00 : f32
    %39 = vector.broadcast %cst_28 : f32 to vector<16x784xf32>
    %40 = arith.divf %39, %38 : vector<16x784xf32>
    %41 = arith.truncf %40 : vector<16x784xf32> to vector<16x784xbf16>
    %c0_29 = arith.constant 0 : index
    %c0_30 = arith.constant 0 : index
    %42 = vector.load %arg11[%c0_29, %c0_30] : memref<16x784xbf16, #tpu.memory_space<vmem>>, vector<16x784xbf16>
    tpu.vector_store %arg11[%c0_29, %c0_30], %41 {strides = array<i32>} : memref<16x784xbf16, #tpu.memory_space<vmem>>, vector<16x784xbf16>,
    return
  }
  func.func @transform_0(%arg0: i32) -> (i32, i32) {
    %c0_i32 = arith.constant 0 : i32
    %c0_i32_0 = arith.constant 0 : i32
    return %arg0, %c0_i32 : i32, i32
  }
  func.func @transform_1(%arg0: i32) -> (i32, i32) {
    %c0_i32 = arith.constant 0 : i32
    %c0_i32_0 = arith.constant 0 : i32
    %c0_i32_1 = arith.constant 0 : i32
    return %c0_i32, %c0_i32_0 : i32, i32
  }
  func.func @transform_2(%arg0: i32) -> (i32, i32) {
    %c0_i32 = arith.constant 0 : i32
    %c0_i32_0 = arith.constant 0 : i32
    %c0_i32_1 = arith.constant 0 : i32
    return %c0_i32, %c0_i32_0 : i32, i32
  }
  func.func @transform_3(%arg0: i32) -> (i32, i32) {
    %c0_i32 = arith.constant 0 : i32
    %c0_i32_0 = arith.constant 0 : i32
    %c0_i32_1 = arith.constant 0 : i32
    return %c0_i32, %c0_i32_0 : i32, i32
  }
  func.func @transform_4(%arg0: i32) -> (i32, i32) {
    %c0_i32 = arith.constant 0 : i32
    %c0_i32_0 = arith.constant 0 : i32
    %c0_i32_1 = arith.constant 0 : i32
    return %c0_i32, %c0_i32_0 : i32, i32
  }
  func.func @transform_5(%arg0: i32) -> (i32, i32) {
    %c0_i32 = arith.constant 0 : i32
    %c0_i32_0 = arith.constant 0 : i32
    %c0_i32_1 = arith.constant 0 : i32
    return %c0_i32, %c0_i32_0 : i32, i32
  }
  func.func @transform_6(%arg0: i32) -> (i32, i32) {
    %c0_i32 = arith.constant 0 : i32
    %c0_i32_0 = arith.constant 0 : i32
    %c0_i32_1 = arith.constant 0 : i32
    return %c0_i32, %c0_i32_0 : i32, i32
  }
  func.func @transform_7(%arg0: i32) -> (i32, i32) {
    %c0_i32 = arith.constant 0 : i32
    %c0_i32_0 = arith.constant 0 : i32
    %c0_i32_1 = arith.constant 0 : i32
    return %c0_i32, %c0_i32_0 : i32, i32
  }
  func.func @transform_8(%arg0: i32) -> (i32, i32) {
    %c0_i32 = arith.constant 0 : i32
    %c0_i32_0 = arith.constant 0 : i32
    %c0_i32_1 = arith.constant 0 : i32
    return %c0_i32, %c0_i32_0 : i32, i32
  }
  func.func @transform_9(%arg0: i32) -> (i32, i32) {
    %c0_i32 = arith.constant 0 : i32
    %c0_i32_0 = arith.constant 0 : i32
    return %arg0, %c0_i32 : i32, i32
  }
  func.func @transform_10(%arg0: i32) -> (i32, i32) {
    %c0_i32 = arith.constant 0 : i32
    %c0_i32_0 = arith.constant 0 : i32
    return %arg0, %c0_i32 : i32, i32
  }
  func.func @transform_11(%arg0: i32) -> (i32, i32) {
    %c0_i32 = arith.constant 0 : i32
    %c0_i32_0 = arith.constant 0 : i32
    return %arg0, %c0_i32 : i32, i32
  }
}

</mosaic_0001>

<llo_original>
// kernel: vae_dnn_forward.1
$region0: #{vae_dnn_forward.1}
  #allocation0 [shape = 'u32[]', space=smem, size = 0x4, offset = 0x4, fixed_abs, tag = 'smem constant byte address 0x4 - core index']
  #allocation1 [shape = 'u32[144,128]{1,0:T(1,128)}', space=vmem, size = 0x12000, scoped, tag = 'internal scratch']
  %s0 = inlined_call_operand.vmem [shape: bf16[32,784], index: 0, kind: input, shape index: {}]
  %s1 = inlined_call_operand.vmem [shape: bf16[784,400], index: 1, kind: input, shape index: {}]
  %s2 = inlined_call_operand.vmem [shape: f32[1,400], index: 2, kind: input, shape index: {}]
  %s3 = inlined_call_operand.vmem [shape: bf16[400,256], index: 3, kind: input, shape index: {}]
  %s4 = inlined_call_operand.vmem [shape: f32[1,256], index: 4, kind: input, shape index: {}]
  %s5 = inlined_call_operand.vmem [shape: bf16[40,400], index: 5, kind: input, shape index: {}]
  %s6 = inlined_call_operand.vmem [shape: f32[1,400], index: 6, kind: input, shape index: {}]
  %s7 = inlined_call_operand.vmem [shape: bf16[400,784], index: 7, kind: input, shape index: {}]
  %s8 = inlined_call_operand.vmem [shape: f32[1,784], index: 8, kind: input, shape index: {}]
  %s9 = inlined_call_operand.vmem [shape: f32[32,40], index: 9, kind: input, shape index: {}]
  %s10 = inlined_call_operand.vmem [shape: bf16[32,784], index: 10, kind: output, shape index: {0}]
  %s11 = inlined_call_operand.vmem [shape: f32[32,256], index: 11, kind: output, shape index: {1}]
  %12 = xla_tuple %s10, %s11
  %s13 = sld [smem:[#allocation0]]
  $region81: #{vae_dnn_forward.1} parent=0
    _
  %s15 = ssub.s32 1, %s13
  %s16 = scalar_select 0, %s15, %s13
  loop: start=0, step=1, limit=4
  $region2: #{vae_dnn_forward.1} parent=0 // loop_pre_header
    _
  $region3: #{vae_dnn_forward.1} parent=0 // loop_header
    %s18 = sphi 0, %s22
    %p19 = scmp.ge.s32.totalorder %s18, 4
    %s28 = sphi 0, %s30
    %s31 = sphi 0, %s28
    %s32 = sphi 0, %s31
    %s48 = sphi 0, %s32
    %s52 = sphi 0, %s52
    %s54 = sphi 0, %s52
    %s55 = sphi 0, %s54
    %s69 = sphi 0, %s55
    %s73 = sphi 0, %s73
    %s75 = sphi 0, %s73
    %s76 = sphi 0, %s75
    %s90 = sphi 0, %s76
    %s94 = sphi 0, %s94
    %s96 = sphi 0, %s94
    %s97 = sphi 0, %s96
    %s111 = sphi 0, %s97
    %s115 = sphi 0, %s115
    %s117 = sphi 0, %s115
    %s118 = sphi 0, %s117
    %s132 = sphi 0, %s118
    %s136 = sphi 0, %s136
    %s138 = sphi 0, %s136
    %s139 = sphi 0, %s138
    %s153 = sphi 0, %s139
    %s157 = sphi 0, %s157
    %s159 = sphi 0, %s157
    %s160 = sphi 0, %s159
    %s174 = sphi 0, %s160
    %s178 = sphi 0, %s178
    %s180 = sphi 0, %s178
    %s181 = sphi 0, %s180
    %s195 = sphi 0, %s181
    %s199 = sphi 0, %s199
    %s201 = sphi 0, %s199
    %s202 = sphi 0, %s201
    %s216 = sphi 0, %s202
    %s222 = sphi 0, %s224
    %s225 = sphi 0, %s222
    %s226 = sphi 0, %s225
    %s242 = sphi 0, %s226
    %s248 = sphi 0, %s250
    %s251 = sphi 0, %s248
    %s252 = sphi 0, %s251
    %s268 = sphi 0, %s252
    %s274 = sphi 0, %s276
    %s277 = sphi 0, %s274
    %s278 = sphi 0, %s277
    %s294 = sphi 0, %s278
  $region4: #{vae_dnn_forward.1} parent=0 // loop_header_branch
    %21 = sbr.rel (%p19) target = $region8
  $region5: #{vae_dnn_forward.1} parent=0 // loop_body
    %s23 = ssub.s32 %s18, 1
    %s24 = ssub.s32 %s18, 2
    %s25 = sadd.s32 %s18, 1
    %s26 = ssub.s32 %s18, %s25
    %p27 = scmp.eq.s32.totalorder %s26, 0
    %s29 = sadd.s32 %s28, 1
    %s30 = scalar_select %p27, %s28, %s29
    %p33 = pneg %p27
    %p34 = scmp.eq.s32.totalorder %s18, 1
    %p35 = por %p33, %p34
    %p36 = scmp.ne.s32.totalorder %s28, %s31
    %p37 = scmp.eq.s32.totalorder %s18, 0
    %p38 = por %p36, %p37
    %p39 = scmp.ne.s32.totalorder %s28, %s31
    %p40 = scmp.eq.s32.totalorder %s23, 1
    %p41 = por %p39, %p40
    %p42 = scmp.ne.s32.totalorder %s31, %s32
    %p43 = scmp.eq.s32.totalorder %s23, 0
    %p44 = por %p42, %p43
    %p45 = scmp.ne.s32.totalorder %s31, %s32
    %p46 = scmp.eq.s32.totalorder %s24, 1
    %p47 = por %p45, %p46
    %p49 = scmp.ne.s32.totalorder %s32, %s48
    %p50 = scmp.eq.s32.totalorder %s24, 0
    %p51 = por %p49, %p50
    %s53 = sadd.s32 %s52, 1
    %p56 = scmp.eq.s32.totalorder %s18, 1
    %p57 = scmp.ne.s32.totalorder %s52, %s54
    %p58 = scmp.eq.s32.totalorder %s18, 0
    %p59 = por %p57, %p58
    %p60 = scmp.ne.s32.totalorder %s52, %s54
    %p61 = scmp.eq.s32.totalorder %s23, 1
    %p62 = por %p60, %p61
    %p63 = scmp.ne.s32.totalorder %s54, %s55
    %p64 = scmp.eq.s32.totalorder %s23, 0
    %p65 = por %p63, %p64
    %p66 = scmp.ne.s32.totalorder %s54, %s55
    %p67 = scmp.eq.s32.totalorder %s24, 1
    %p68 = por %p66, %p67
    %p70 = scmp.ne.s32.totalorder %s55, %s69
    %p71 = scmp.eq.s32.totalorder %s24, 0
    %p72 = por %p70, %p71
    %s74 = sadd.s32 %s73, 1
    %p77 = scmp.eq.s32.totalorder %s18, 1
    %p78 = scmp.ne.s32.totalorder %s73, %s75
    %p79 = scmp.eq.s32.totalorder %s18, 0
    %p80 = por %p78, %p79
    %p81 = scmp.ne.s32.totalorder %s73, %s75
    %p82 = scmp.eq.s32.totalorder %s23, 1
    %p83 = por %p81, %p82
    %p84 = scmp.ne.s32.totalorder %s75, %s76
    %p85 = scmp.eq.s32.totalorder %s23, 0
    %p86 = por %p84, %p85
    %p87 = scmp.ne.s32.totalorder %s75, %s76
    %p88 = scmp.eq.s32.totalorder %s24, 1
    %p89 = por %p87, %p88
    %p91 = scmp.ne.s32.totalorder %s76, %s90
    %p92 = scmp.eq.s32.totalorder %s24, 0
    %p93 = por %p91, %p92
    %s95 = sadd.s32 %s94, 1
    %p98 = scmp.eq.s32.totalorder %s18, 1
    %p99 = scmp.ne.s32.totalorder %s94, %s96
    %p100 = scmp.eq.s32.totalorder %s18, 0
    %p101 = por %p99, %p100
    %p102 = scmp.ne.s32.totalorder %s94, %s96
    %p103 = scmp.eq.s32.totalorder %s23, 1
    %p104 = por %p102, %p103
    %p105 = scmp.ne.s32.totalorder %s96, %s97
    %p106 = scmp.eq.s32.totalorder %s23, 0
    %p107 = por %p105, %p106
    %p108 = scmp.ne.s32.totalorder %s96, %s97
    %p109 = scmp.eq.s32.totalorder %s24, 1
    %p110 = por %p108, %p109
    %p112 = scmp.ne.s32.totalorder %s97, %s111
    %p113 = scmp.eq.s32.totalorder %s24, 0
    %p114 = por %p112, %p113
    %s116 = sadd.s32 %s115, 1
    %p119 = scmp.eq.s32.totalorder %s18, 1
    %p120 = scmp.ne.s32.totalorder %s115, %s117
    %p121 = scmp.eq.s32.totalorder %s18, 0
    %p122 = por %p120, %p121
    %p123 = scmp.ne.s32.totalorder %s115, %s117
    %p124 = scmp.eq.s32.totalorder %s23, 1
    %p125 = por %p123, %p124
    %p126 = scmp.ne.s32.totalorder %s117, %s118
    %p127 = scmp.eq.s32.totalorder %s23, 0
    %p128 = por %p126, %p127
    %p129 = scmp.ne.s32.totalorder %s117, %s118
    %p130 = scmp.eq.s32.totalorder %s24, 1
    %p131 = por %p129, %p130
    %p133 = scmp.ne.s32.totalorder %s118, %s132
    %p134 = scmp.eq.s32.totalorder %s24, 0
    %p135 = por %p133, %p134
    %s137 = sadd.s32 %s136, 1
    %p140 = scmp.eq.s32.totalorder %s18, 1
    %p141 = scmp.ne.s32.totalorder %s136, %s138
    %p142 = scmp.eq.s32.totalorder %s18, 0
    %p143 = por %p141, %p142
    %p144 = scmp.ne.s32.totalorder %s136, %s138
    %p145 = scmp.eq.s32.totalorder %s23, 1
    %p146 = por %p144, %p145
    %p147 = scmp.ne.s32.totalorder %s138, %s139
    %p148 = scmp.eq.s32.totalorder %s23, 0
    %p149 = por %p147, %p148
    %p150 = scmp.ne.s32.totalorder %s138, %s139
    %p151 = scmp.eq.s32.totalorder %s24, 1
    %p152 = por %p150, %p151
    %p154 = scmp.ne.s32.totalorder %s139, %s153
    %p155 = scmp.eq.s32.totalorder %s24, 0
    %p156 = por %p154, %p155
    %s158 = sadd.s32 %s157, 1
    %p161 = scmp.eq.s32.totalorder %s18, 1
    %p162 = scmp.ne.s32.totalorder %s157, %s159
    %p163 = scmp.eq.s32.totalorder %s18, 0
    %p164 = por %p162, %p163
    %p165 = scmp.ne.s32.totalorder %s157, %s159
    %p166 = scmp.eq.s32.totalorder %s23, 1
    %p167 = por %p165, %p166
    %p168 = scmp.ne.s32.totalorder %s159, %s160
    %p169 = scmp.eq.s32.totalorder %s23, 0
    %p170 = por %p168, %p169
    %p171 = scmp.ne.s32.totalorder %s159, %s160
    %p172 = scmp.eq.s32.totalorder %s24, 1
    %p173 = por %p171, %p172
    %p175 = scmp.ne.s32.totalorder %s160, %s174
    %p176 = scmp.eq.s32.totalorder %s24, 0
    %p177 = por %p175, %p176
    %s179 = sadd.s32 %s178, 1
    %p182 = scmp.eq.s32.totalorder %s18, 1
    %p183 = scmp.ne.s32.totalorder %s178, %s180
    %p184 = scmp.eq.s32.totalorder %s18, 0
    %p185 = por %p183, %p184
    %p186 = scmp.ne.s32.totalorder %s178, %s180
    %p187 = scmp.eq.s32.totalorder %s23, 1
    %p188 = por %p186, %p187
    %p189 = scmp.ne.s32.totalorder %s180, %s181
    %p190 = scmp.eq.s32.totalorder %s23, 0
    %p191 = por %p189, %p190
    %p192 = scmp.ne.s32.totalorder %s180, %s181
    %p193 = scmp.eq.s32.totalorder %s24, 1
    %p194 = por %p192, %p193
    %p196 = scmp.ne.s32.totalorder %s181, %s195
    %p197 = scmp.eq.s32.totalorder %s24, 0
    %p198 = por %p196, %p197
    %s200 = sadd.s32 %s199, 1
    %p203 = scmp.eq.s32.totalorder %s18, 1
    %p204 = scmp.ne.s32.totalorder %s199, %s201
    %p205 = scmp.eq.s32.totalorder %s18, 0
    %p206 = por %p204, %p205
    %p207 = scmp.ne.s32.totalorder %s199, %s201
    %p208 = scmp.eq.s32.totalorder %s23, 1
    %p209 = por %p207, %p208
    %p210 = scmp.ne.s32.totalorder %s201, %s202
    %p211 = scmp.eq.s32.totalorder %s23, 0
    %p212 = por %p210, %p211
    %p213 = scmp.ne.s32.totalorder %s201, %s202
    %p214 = scmp.eq.s32.totalorder %s24, 1
    %p215 = por %p213, %p214
    %p217 = scmp.ne.s32.totalorder %s202, %s216
    %p218 = scmp.eq.s32.totalorder %s24, 0
    %p219 = por %p217, %p218
    %s220 = ssub.s32 %s18, %s25
    %p221 = scmp.eq.s32.totalorder %s220, 0
    %s223 = sadd.s32 %s222, 1
    %s224 = scalar_select %p221, %s222, %s223
    %p227 = pneg %p221
    %p228 = scmp.eq.s32.totalorder %s18, 1
    %p229 = por %p227, %p228
    %p230 = scmp.ne.s32.totalorder %s222, %s225
    %p231 = scmp.eq.s32.totalorder %s18, 0
    %p232 = por %p230, %p231
    %p233 = scmp.ne.s32.totalorder %s222, %s225
    %p234 = scmp.eq.s32.totalorder %s23, 1
    %p235 = por %p233, %p234
    %p236 = scmp.ne.s32.totalorder %s225, %s226
    %p237 = scmp.eq.s32.totalorder %s23, 0
    %p238 = por %p236, %p237
    %p239 = scmp.ne.s32.totalorder %s225, %s226
    %p240 = scmp.eq.s32.totalorder %s24, 1
    %p241 = por %p239, %p240
    %p243 = scmp.ne.s32.totalorder %s226, %s242
    %p244 = scmp.eq.s32.totalorder %s24, 0
    %p245 = por %p243, %p244
    %s246 = ssub.s32 %s18, %s25
    %p247 = scmp.eq.s32.totalorder %s246, 0
    %s249 = sadd.s32 %s248, 1
    %s250 = scalar_select %p247, %s248, %s249
    %p253 = pneg %p247
    %p254 = scmp.eq.s32.totalorder %s18, 1
    %p255 = por %p253, %p254
    %p256 = scmp.ne.s32.totalorder %s248, %s251
    %p257 = scmp.eq.s32.totalorder %s18, 0
    %p258 = por %p256, %p257
    %p259 = scmp.ne.s32.totalorder %s248, %s251
    %p260 = scmp.eq.s32.totalorder %s23, 1
    %p261 = por %p259, %p260
    %p262 = scmp.ne.s32.totalorder %s251, %s252
    %p263 = scmp.eq.s32.totalorder %s23, 0
    %p264 = por %p262, %p263
    %p265 = scmp.ne.s32.totalorder %s251, %s252
    %p266 = scmp.eq.s32.totalorder %s24, 1
    %p267 = por %p265, %p266
    %p269 = scmp.ne.s32.totalorder %s252, %s268
    %p270 = scmp.eq.s32.totalorder %s24, 0
    %p271 = por %p269, %p270
    %s272 = ssub.s32 %s18, %s25
    %p273 = scmp.eq.s32.totalorder %s272, 0
    %s275 = sadd.s32 %s274, 1
    %s276 = scalar_select %p273, %s274, %s275
    %p279 = pneg %p273
    %p280 = scmp.eq.s32.totalorder %s18, 1
    %p281 = por %p279, %p280
    %p282 = scmp.ne.s32.totalorder %s274, %s277
    %p283 = scmp.eq.s32.totalorder %s18, 0
    %p284 = por %p282, %p283
    %p285 = scmp.ne.s32.totalorder %s274, %s277
    %p286 = scmp.eq.s32.totalorder %s23, 1
    %p287 = por %p285, %p286
    %p288 = scmp.ne.s32.totalorder %s277, %s278
    %p289 = scmp.eq.s32.totalorder %s23, 0
    %p290 = por %p288, %p289
    %p291 = scmp.ne.s32.totalorder %s277, %s278
    %p292 = scmp.eq.s32.totalorder %s24, 1
    %p293 = por %p291, %p292
    %p295 = scmp.ne.s32.totalorder %s278, %s294
    %p296 = scmp.eq.s32.totalorder %s24, 0
    %p297 = por %p295, %p296
    %p298 = scmp.le.s32.totalorder 1, %s18
    %p299 = scmp.lt.s32.totalorder %s18, 3
    %p300 = pnand %p298, %p299
    %p301 = pneg %p300
    // Predicated region
    $region9: #{vae_dnn_forward.1} parent=5 // pred_check
      _
    $region10: #{vae_dnn_forward.1} parent=5 // pred_check_branch
      %303 = sbr.rel (%p300) target = $region12
    $region11: #{vae_dnn_forward.1} parent=5 // pred_region
      %s304 = ssub.s32 %s18, 1
      // Predicated region
      $region13: #{vae_dnn_forward.1} parent=11 // pred_check
        %p305 = pneg %p65
      $region14: #{vae_dnn_forward.1} parent=11 // pred_check_branch
        %307 = sbr.rel (%p305) target = $region16
      $region15: #{vae_dnn_forward.1} parent=11 // pred_region
        _
      $region16: #{vae_dnn_forward.1} parent=11 // pred_fallthru
        _
      // Predicated region
      $region17: #{vae_dnn_forward.1} parent=11 // pred_check
        %p308 = pneg %p86
      $region18: #{vae_dnn_forward.1} parent=11 // pred_check_branch
        %310 = sbr.rel (%p308) target = $region20
      $region19: #{vae_dnn_forward.1} parent=11 // pred_region
        _
      $region20: #{vae_dnn_forward.1} parent=11 // pred_fallthru
        _
      // Predicated region
      $region21: #{vae_dnn_forward.1} parent=11 // pred_check
        %p311 = pneg %p107
      $region22: #{vae_dnn_forward.1} parent=11 // pred_check_branch
        %313 = sbr.rel (%p311) target = $region24
      $region23: #{vae_dnn_forward.1} parent=11 // pred_region
        _
      $region24: #{vae_dnn_forward.1} parent=11 // pred_fallthru
        _
      // Predicated region
      $region25: #{vae_dnn_forward.1} parent=11 // pred_check
        %p314 = pneg %p128
      $region26: #{vae_dnn_forward.1} parent=11 // pred_check_branch
        %316 = sbr.rel (%p314) target = $region28
      $region27: #{vae_dnn_forward.1} parent=11 // pred_region
        _
      $region28: #{vae_dnn_forward.1} parent=11 // pred_fallthru
        _
      // Predicated region
      $region29: #{vae_dnn_forward.1} parent=11 // pred_check
        %p317 = pneg %p149
      $region30: #{vae_dnn_forward.1} parent=11 // pred_check_branch
        %319 = sbr.rel (%p317) target = $region32
      $region31: #{vae_dnn_forward.1} parent=11 // pred_region
        _
      $region32: #{vae_dnn_forward.1} parent=11 // pred_fallthru
        _
      // Predicated region
      $region33: #{vae_dnn_forward.1} parent=11 // pred_check
        %p320 = pneg %p170
      $region34: #{vae_dnn_forward.1} parent=11 // pred_check_branch
        %322 = sbr.rel (%p320) target = $region36
      $region35: #{vae_dnn_forward.1} parent=11 // pred_region
        _
      $region36: #{vae_dnn_forward.1} parent=11 // pred_fallthru
        _
      // Predicated region
      $region37: #{vae_dnn_forward.1} parent=11 // pred_check
        %p323 = pneg %p191
      $region38: #{vae_dnn_forward.1} parent=11 // pred_check_branch
        %325 = sbr.rel (%p323) target = $region40
      $region39: #{vae_dnn_forward.1} parent=11 // pred_region
        _
      $region40: #{vae_dnn_forward.1} parent=11 // pred_fallthru
        _
      // Predicated region
      $region41: #{vae_dnn_forward.1} parent=11 // pred_check
        %p326 = pneg %p212
      $region42: #{vae_dnn_forward.1} parent=11 // pred_check_branch
        %328 = sbr.rel (%p326) target = $region44
      $region43: #{vae_dnn_forward.1} parent=11 // pred_region
        _
      $region44: #{vae_dnn_forward.1} parent=11 // pred_fallthru
        _
    $region12: #{vae_dnn_forward.1} parent=5 // pred_fallthru
      _
    %p329 = scmp.lt.s32.totalorder %s18, 2
    // Predicated region
    $region45: #{vae_dnn_forward.1} parent=5 // pred_check
      %p330 = pneg %p329
    $region46: #{vae_dnn_forward.1} parent=5 // pred_check_branch
      %332 = sbr.rel (%p330) target = $region48
    $region47: #{vae_dnn_forward.1} parent=5 // pred_region
      // Predicated region
      $region49: #{vae_dnn_forward.1} parent=47 // pred_check
        %p333 = pneg %p38
      $region50: #{vae_dnn_forward.1} parent=47 // pred_check_branch
        %335 = sbr.rel (%p333) target = $region52
      $region51: #{vae_dnn_forward.1} parent=47 // pred_region
        %s336 = smul.u32 2, %s18
        %p337 = scmp.lt.s32.totalorder %s336, 3
        %s338 = scalar_select %p337, %s336, 3
        %s339 = smul.addr %s338, 7
        %s340 = smul.addr %s339, 4
        %s341 = scalar_lea.vmem %s0, %s340
        %s342 = smul.u32 2, %s18
      $region52: #{vae_dnn_forward.1} parent=47 // pred_fallthru
        _
      // Predicated region
      $region53: #{vae_dnn_forward.1} parent=47 // pred_check
        %p343 = pneg %p232
      $region54: #{vae_dnn_forward.1} parent=47 // pred_check_branch
        %345 = sbr.rel (%p343) target = $region56
      $region55: #{vae_dnn_forward.1} parent=47 // pred_region
        %s346 = smul.u32 2, %s18
        %p347 = scmp.lt.s32.totalorder %s346, 3
        %s348 = scalar_select %p347, %s346, 3
        %s349 = smul.addr %s348, 8
        %s350 = scalar_lea.vmem %s9, %s349
        %s351 = smul.u32 2, %s18
      $region56: #{vae_dnn_forward.1} parent=47 // pred_fallthru
        _
    $region48: #{vae_dnn_forward.1} parent=5 // pred_fallthru
      _
    %p352 = scmp.le.s32.totalorder 1, %s18
    %p353 = scmp.lt.s32.totalorder %s18, 3
    %p354 = pnand %p352, %p353
    %p355 = pneg %p354
    // Predicated region
    $region57: #{vae_dnn_forward.1} parent=5 // pred_check
      _
    $region58: #{vae_dnn_forward.1} parent=5 // pred_check_branch
      %357 = sbr.rel (%p354) target = $region60
    $region59: #{vae_dnn_forward.1} parent=5 // pred_region
      %s358 = ssub.s32 %s18, 1
      %s359 = smul.u32 2, %s23
      %p360 = scmp.lt.s32.totalorder %s359, 3
      %s361 = scalar_select %p360, %s359, 3
      %s362 = smul.addr %s361, 7
      %s363 = smul.addr %s362, 4
      %s364 = scalar_lea.vmem %s0, %s363
      %p365 = pneg %p44
      %p366 = pneg %p41
      %p367 = pneg %p65
      %p368 = pneg %p62
      %p369 = pneg %p86
      %p370 = pneg %p83
      %p371 = pneg %p107
      %p372 = pneg %p104
      %p373 = pneg %p128
      %p374 = pneg %p125
      %p375 = pneg %p149
      %p376 = pneg %p146
      %p377 = pneg %p170
      %p378 = pneg %p167
      %p379 = pneg %p191
      %p380 = pneg %p188
      %p381 = pneg %p212
      %p382 = pneg %p209
      %s383 = smul.u32 2, %s23
      %p384 = scmp.lt.s32.totalorder %s383, 3
      %s385 = scalar_select %p384, %s383, 3
      %s386 = smul.addr %s385, 8
      %s387 = scalar_lea.vmem %s9, %s386
      %p388 = pneg %p238
      %p389 = pneg %p235
      %p390 = pneg %p264
      %p391 = pneg %p261
      %s392 = smul.u32 2, %s23
      %p393 = scmp.lt.s32.totalorder %s392, 3
      %s394 = scalar_select %p393, %s392, 3
      %s395 = smul.addr %s394, 7
      %s396 = smul.addr %s395, 4
      %s397 = scalar_lea.vmem %s10, %s396
      %p398 = pneg %p290
      %p399 = pneg %p287
      %s400 = smul.u32 2, %s23
      %p401 = scmp.lt.s32.totalorder %s400, 3
      %s402 = scalar_select %p401, %s400, 3
      %s403 = smul.addr %s402, 2
      %s404 = smul.addr %s403, 8
      %s405 = scalar_lea.vmem %s11, %s404
      %s406 = smul.u32 2, %s23
      %p407 = scmp.lt.s32.totalorder %s406, 3
      %s408 = scalar_select %p407, %s406, 3
      %s409 = smul.addr %s408, 7
      %s410 = smul.addr %s409, 4
      %s411 = scalar_lea.vmem %s0, %s410
      %s412 = smul.u32 2, %s23
      %s413 = smul.u32 2, %s23
      %p414 = scmp.lt.s32.totalorder %s413, 3
      %s415 = scalar_select %p414, %s413, 3
      %s416 = smul.addr %s415, 8
      %s417 = scalar_lea.vmem %s9, %s416
      %s418 = smul.u32 2, %s23
      %s419 = smul.u32 2, %s23
      %p420 = scmp.lt.s32.totalorder %s419, 3
      %s421 = scalar_select %p420, %s419, 3
      %s422 = smul.addr %s421, 7
      %s423 = smul.addr %s422, 4
      %s424 = scalar_lea.vmem %s10, %s423
      %s425 = smul.u32 2, %s23
      %s426 = smul.u32 2, %s23
      %p427 = scmp.lt.s32.totalorder %s426, 3
      %s428 = scalar_select %p427, %s426, 3
      %s429 = smul.addr %s428, 2
      %s430 = smul.addr %s429, 8
      %s431 = scalar_lea.vmem %s11, %s430
      %s432 = smul.u32 2, %s23
      %v434 = vld [vmem:[%s411] sm:$0xff]
      %v435 = vld [vmem:[%s411 + $0x8] sm:$0xff]
      %v436 = vld [vmem:[%s411 + $0x10] sm:$0xff]
      %v437 = vld [vmem:[%s411 + $0x18] sm:$0xf]
      %v438 = vld [vmem:[%s411 + $0x1c] sm:$0xff]
      %v439 = vld [vmem:[%s411 + $0x24] sm:$0xff]
      %v440 = vld [vmem:[%s411 + $0x2c] sm:$0xff]
      %v441 = vld [vmem:[%s411 + $0x34] sm:$0xf]
      %v442 = vld [vmem:[%s1] sm:$0xff]
      %v443 = vld [vmem:[%s1 + $0x8] sm:$0xff]
      %v444 = vld [vmem:[%s1 + $0x10] sm:$0xff]
      %v445 = vld [vmem:[%s1 + $0x18] sm:$0xff]
      %v446 = vld [vmem:[%s1 + $0x20] sm:$0xff]
      %v447 = vld [vmem:[%s1 + $0x28] sm:$0xff]
      %v448 = vld [vmem:[%s1 + $0x30] sm:$0xff]
      %v449 = vld [vmem:[%s1 + $0x38] sm:$0xff]
      %v450 = vld [vmem:[%s1 + $0x40] sm:$0xff]
      %v451 = vld [vmem:[%s1 + $0x48] sm:$0xff]
      %v452 = vld [vmem:[%s1 + $0x50] sm:$0xff]
      %v453 = vld [vmem:[%s1 + $0x58] sm:$0xff]
      %v454 = vld [vmem:[%s1 + $0x60] sm:$0xff]
      %v455 = vld [vmem:[%s1 + $0x68] sm:$0xff]
      %v456 = vld [vmem:[%s1 + $0x70] sm:$0xff]
      %v457 = vld [vmem:[%s1 + $0x78] sm:$0xff]
      %v458 = vld [vmem:[%s1 + $0x80] sm:$0xff]
      %v459 = vld [vmem:[%s1 + $0x88] sm:$0xff]
      %v460 = vld [vmem:[%s1 + $0x90] sm:$0xff]
      %v461 = vld [vmem:[%s1 + $0x98] sm:$0xff]
      %v462 = vld [vmem:[%s1 + $0xa0] sm:$0xff]
      %v463 = vld [vmem:[%s1 + $0xa8] sm:$0xff]
      %v464 = vld [vmem:[%s1 + $0xb0] sm:$0xff]
      %v465 = vld [vmem:[%s1 + $0xb8] sm:$0xff]
      %v466 = vld [vmem:[%s1 + $0xc0] sm:$0xff]
      %v467 = vld [vmem:[%s1 + $0xc8] sm:$0xff]
      %v468 = vld [vmem:[%s1 + $0xd0] sm:$0xff]
      %v469 = vld [vmem:[%s1 + $0xd8] sm:$0xff]
      %v470 = vld [vmem:[%s1 + $0xe0] sm:$0xff]
      %v471 = vld [vmem:[%s1 + $0xe8] sm:$0xff]
      %v472 = vld [vmem:[%s1 + $0xf0] sm:$0xff]
      %v473 = vld [vmem:[%s1 + $0xf8] sm:$0xff]
      %v474 = vld [vmem:[%s1 + $0x100] sm:$0xff]
      %v475 = vld [vmem:[%s1 + $0x108] sm:$0xff]
      %v476 = vld [vmem:[%s1 + $0x110] sm:$0xff]
      %v477 = vld [vmem:[%s1 + $0x118] sm:$0xff]
      %v478 = vld [vmem:[%s1 + $0x120] sm:$0xff]
      %v479 = vld [vmem:[%s1 + $0x128] sm:$0xff]
      %v480 = vld [vmem:[%s1 + $0x130] sm:$0xff]
      %v481 = vld [vmem:[%s1 + $0x138] sm:$0xff]
      %v482 = vld [vmem:[%s1 + $0x140] sm:$0xff]
      %v483 = vld [vmem:[%s1 + $0x148] sm:$0xff]
      %v484 = vld [vmem:[%s1 + $0x150] sm:$0xff]
      %v485 = vld [vmem:[%s1 + $0x158] sm:$0xff]
      %v486 = vld [vmem:[%s1 + $0x160] sm:$0xff]
      %v487 = vld [vmem:[%s1 + $0x168] sm:$0xff]
      %v488 = vld [vmem:[%s1 + $0x170] sm:$0xff]
      %v489 = vld [vmem:[%s1 + $0x178] sm:$0xff]
      %v490 = vld [vmem:[%s1 + $0x180] sm:$0xff]
      %v491 = vld [vmem:[%s1 + $0x188] sm:$0xff]
      %v492 = vld [vmem:[%s1 + $0x190] sm:$0xff]
      %v493 = vld [vmem:[%s1 + $0x198] sm:$0xff]
      %v494 = vld [vmem:[%s1 + $0x1a0] sm:$0xff]
      %v495 = vld [vmem:[%s1 + $0x1a8] sm:$0xff]
      %v496 = vld [vmem:[%s1 + $0x1b0] sm:$0xff]
      %v497 = vld [vmem:[%s1 + $0x1b8] sm:$0xff]
      %v498 = vld [vmem:[%s1 + $0x1c0] sm:$0xff]
      %v499 = vld [vmem:[%s1 + $0x1c8] sm:$0xff]
      %v500 = vld [vmem:[%s1 + $0x1d0] sm:$0xff]
      %v501 = vld [vmem:[%s1 + $0x1d8] sm:$0xff]
      %v502 = vld [vmem:[%s1 + $0x1e0] sm:$0xff]
      %v503 = vld [vmem:[%s1 + $0x1e8] sm:$0xff]
      %v504 = vld [vmem:[%s1 + $0x1f0] sm:$0xff]
      %v505 = vld [vmem:[%s1 + $0x1f8] sm:$0xff]
      %v506 = vld [vmem:[%s1 + $0x200] sm:$0xff]
      %v507 = vld [vmem:[%s1 + $0x208] sm:$0xff]
      %v508 = vld [vmem:[%s1 + $0x210] sm:$0xff]
      %v509 = vld [vmem:[%s1 + $0x218] sm:$0xff]
      %v510 = vld [vmem:[%s1 + $0x220] sm:$0xff]
      %v511 = vld [vmem:[%s1 + $0x228] sm:$0xff]
      %v512 = vld [vmem:[%s1 + $0x230] sm:$0xff]
      %v513 = vld [vmem:[%s1 + $0x238] sm:$0xff]
      %v514 = vld [vmem:[%s1 + $0x240] sm:$0xff]
      %v515 = vld [vmem:[%s1 + $0x248] sm:$0xff]
      %v516 = vld [vmem:[%s1 + $0x250] sm:$0xff]
      %v517 = vld [vmem:[%s1 + $0x258] sm:$0xff]
      %v518 = vld [vmem:[%s1 + $0x260] sm:$0xff]
      %v519 = vld [vmem:[%s1 + $0x268] sm:$0xff]
      %v520 = vld [vmem:[%s1 + $0x270] sm:$0xff]
      %v521 = vld [vmem:[%s1 + $0x278] sm:$0xff]
      %v522 = vld [vmem:[%s1 + $0x280] sm:$0xff]
      %v523 = vld [vmem:[%s1 + $0x288] sm:$0xff]
      %v524 = vld [vmem:[%s1 + $0x290] sm:$0xff]
      %v525 = vld [vmem:[%s1 + $0x298] sm:$0xff]
      %v526 = vld [vmem:[%s1 + $0x2a0] sm:$0xff]
      %v527 = vld [vmem:[%s1 + $0x2a8] sm:$0xff]
      %v528 = vld [vmem:[%s1 + $0x2b0] sm:$0xff]
      %v529 = vld [vmem:[%s1 + $0x2b8] sm:$0xff]
      %v530 = vld [vmem:[%s1 + $0x2c0] sm:$0xff]
      %v531 = vld [vmem:[%s1 + $0x2c8] sm:$0xff]
      %v532 = vld [vmem:[%s1 + $0x2d0] sm:$0xff]
      %v533 = vld [vmem:[%s1 + $0x2d8] sm:$0xff]
      %v534 = vld [vmem:[%s1 + $0x2e0] sm:$0xff]
      %v535 = vld [vmem:[%s1 + $0x2e8] sm:$0xff]
      %v536 = vld [vmem:[%s1 + $0x2f0] sm:$0xff]
      %v537 = vld [vmem:[%s1 + $0x2f8] sm:$0xff]
      %v538 = vld [vmem:[%s1 + $0x300] sm:$0xff]
      %v539 = vld [vmem:[%s1 + $0x308] sm:$0xff]
      %v540 = vld [vmem:[%s1 + $0x310] sm:$0xff]
      %v541 = vld [vmem:[%s1 + $0x318] sm:$0xff]
      %v542 = vld [vmem:[%s1 + $0x320] sm:$0xff]
      %v543 = vld [vmem:[%s1 + $0x328] sm:$0xff]
      %v544 = vld [vmem:[%s1 + $0x330] sm:$0xff]
      %v545 = vld [vmem:[%s1 + $0x338] sm:$0xff]
      %v546 = vld [vmem:[%s1 + $0x340] sm:$0xff]
      %v547 = vld [vmem:[%s1 + $0x348] sm:$0xff]
      %v548 = vld [vmem:[%s1 + $0x350] sm:$0xff]
      %v549 = vld [vmem:[%s1 + $0x358] sm:$0xff]
      %v550 = vld [vmem:[%s1 + $0x360] sm:$0xff]
      %v551 = vld [vmem:[%s1 + $0x368] sm:$0xff]
      %v552 = vld [vmem:[%s1 + $0x370] sm:$0xff]
      %v553 = vld [vmem:[%s1 + $0x378] sm:$0xff]
      %v554 = vld [vmem:[%s1 + $0x380] sm:$0xff]
      %v555 = vld [vmem:[%s1 + $0x388] sm:$0xff]
      %v556 = vld [vmem:[%s1 + $0x390] sm:$0xff]
      %v557 = vld [vmem:[%s1 + $0x398] sm:$0xff]
      %v558 = vld [vmem:[%s1 + $0x3a0] sm:$0xff]
      %v559 = vld [vmem:[%s1 + $0x3a8] sm:$0xff]
      %v560 = vld [vmem:[%s1 + $0x3b0] sm:$0xff]
      %v561 = vld [vmem:[%s1 + $0x3b8] sm:$0xff]
      %v562 = vld [vmem:[%s1 + $0x3c0] sm:$0xff]
      %v563 = vld [vmem:[%s1 + $0x3c8] sm:$0xff]
      %v564 = vld [vmem:[%s1 + $0x3d0] sm:$0xff]
      %v565 = vld [vmem:[%s1 + $0x3d8] sm:$0xff]
      %v566 = vld [vmem:[%s1 + $0x3e0] sm:$0xff]
      %v567 = vld [vmem:[%s1 + $0x3e8] sm:$0xff]
      %v568 = vld [vmem:[%s1 + $0x3f0] sm:$0xff]
      %v569 = vld [vmem:[%s1 + $0x3f8] sm:$0xff]
      %v570 = vld [vmem:[%s1 + $0x400] sm:$0xff]
      %v571 = vld [vmem:[%s1 + $0x408] sm:$0xff]
      %v572 = vld [vmem:[%s1 + $0x410] sm:$0xff]
      %v573 = vld [vmem:[%s1 + $0x418] sm:$0xff]
      %v574 = vld [vmem:[%s1 + $0x420] sm:$0xff]
      %v575 = vld [vmem:[%s1 + $0x428] sm:$0xff]
      %v576 = vld [vmem:[%s1 + $0x430] sm:$0xff]
      %v577 = vld [vmem:[%s1 + $0x438] sm:$0xff]
      %v578 = vld [vmem:[%s1 + $0x440] sm:$0xff]
      %v579 = vld [vmem:[%s1 + $0x448] sm:$0xff]
      %v580 = vld [vmem:[%s1 + $0x450] sm:$0xff]
      %v581 = vld [vmem:[%s1 + $0x458] sm:$0xff]
      %v582 = vld [vmem:[%s1 + $0x460] sm:$0xff]
      %v583 = vld [vmem:[%s1 + $0x468] sm:$0xff]
      %v584 = vld [vmem:[%s1 + $0x470] sm:$0xff]
      %v585 = vld [vmem:[%s1 + $0x478] sm:$0xff]
      %v586 = vld [vmem:[%s1 + $0x480] sm:$0xff]
      %v587 = vld [vmem:[%s1 + $0x488] sm:$0xff]
      %v588 = vld [vmem:[%s1 + $0x490] sm:$0xff]
      %v589 = vld [vmem:[%s1 + $0x498] sm:$0xff]
      %v590 = vld [vmem:[%s1 + $0x4a0] sm:$0xff]
      %v591 = vld [vmem:[%s1 + $0x4a8] sm:$0xff]
      %v592 = vld [vmem:[%s1 + $0x4b0] sm:$0xff]
      %v593 = vld [vmem:[%s1 + $0x4b8] sm:$0xff]
      %v594 = vld [vmem:[%s1 + $0x4c0] sm:$0xff]
      %v595 = vld [vmem:[%s1 + $0x4c8] sm:$0xff]
      %v596 = vld [vmem:[%s1 + $0x4d0] sm:$0xff]
      %v597 = vld [vmem:[%s1 + $0x4d8] sm:$0xff]
      %v598 = vld [vmem:[%s1 + $0x4e0] sm:$0xff]
      %v599 = vld [vmem:[%s1 + $0x4e8] sm:$0xff]
      %v600 = vld [vmem:[%s1 + $0x4f0] sm:$0xff]
      %v601 = vld [vmem:[%s1 + $0x4f8] sm:$0xff]
      %v602 = vld [vmem:[%s1 + $0x500] sm:$0xff]
      %v603 = vld [vmem:[%s1 + $0x508] sm:$0xff]
      %v604 = vld [vmem:[%s1 + $0x510] sm:$0xff]
      %v605 = vld [vmem:[%s1 + $0x518] sm:$0xff]
      %v606 = vld [vmem:[%s1 + $0x520] sm:$0xff]
      %v607 = vld [vmem:[%s1 + $0x528] sm:$0xff]
      %v608 = vld [vmem:[%s1 + $0x530] sm:$0xff]
      %v609 = vld [vmem:[%s1 + $0x538] sm:$0xff]
      %v610 = vld [vmem:[%s1 + $0x540] sm:$0xff]
      %v611 = vld [vmem:[%s1 + $0x548] sm:$0xff]
      %v612 = vld [vmem:[%s1 + $0x550] sm:$0xff]
      %v613 = vld [vmem:[%s1 + $0x558] sm:$0xff]
      %v614 = vld [vmem:[%s1 + $0x560] sm:$0xff]
      %v615 = vld [vmem:[%s1 + $0x568] sm:$0xff]
      %v616 = vld [vmem:[%s1 + $0x570] sm:$0xff]
      %v617 = vld [vmem:[%s1 + $0x578] sm:$0xff]
      %v618 = vld [vmem:[%s1 + $0x580] sm:$0xff]
      %v619 = vld [vmem:[%s1 + $0x588] sm:$0xff]
      %v620 = vld [vmem:[%s1 + $0x590] sm:$0xff]
      %v621 = vld [vmem:[%s1 + $0x598] sm:$0xff]
      %v622 = vld [vmem:[%s1 + $0x5a0] sm:$0xff]
      %v623 = vld [vmem:[%s1 + $0x5a8] sm:$0xff]
      %v624 = vld [vmem:[%s1 + $0x5b0] sm:$0xff]
      %v625 = vld [vmem:[%s1 + $0x5b8] sm:$0xff]
      %v626 = vld [vmem:[%s1 + $0x5c0] sm:$0xff]
      %v627 = vld [vmem:[%s1 + $0x5c8] sm:$0xff]
      %v628 = vld [vmem:[%s1 + $0x5d0] sm:$0xff]
      %v629 = vld [vmem:[%s1 + $0x5d8] sm:$0xff]
      %v630 = vld [vmem:[%s1 + $0x5e0] sm:$0xff]
      %v631 = vld [vmem:[%s1 + $0x5e8] sm:$0xff]
      %v632 = vld [vmem:[%s1 + $0x5f0] sm:$0xff]
      %v633 = vld [vmem:[%s1 + $0x5f8] sm:$0xff]
      %v634 = vld [vmem:[%s1 + $0x600] sm:$0xff]
      %v635 = vld [vmem:[%s1 + $0x608] sm:$0xff]
      %v636 = vld [vmem:[%s1 + $0x610] sm:$0xff]
      %v637 = vld [vmem:[%s1 + $0x618] sm:$0xff]
      %v638 = vld [vmem:[%s2] sm:$0xf]
      %v640 = vlaneseq
      %v641 = vshrl.u32 %v640, 7
      %v642 = vsub.s32 0, %v641
      %v643 = vrot.slane %v638, %v642
      %v644 = vlaneseq
      %v645 = vshrl.u32 %v644, 7
      %v646 = vsub.s32 1, %v645
      %v647 = vrot.slane %v638, %v646
      %v648 = vlaneseq
      %v649 = vshrl.u32 %v648, 7
      %v650 = vsub.s32 2, %v649
      %v651 = vrot.slane %v638, %v650
      %v652 = vlaneseq
      %v653 = vshrl.u32 %v652, 7
      %v654 = vsub.s32 3, %v653
      %v655 = vrot.slane %v638, %v654
      %v668 = vunpack.c.l.b16 %v434
      %v669 = vunpack.c.h.b16 %v434
      %v670 = vunpack.c.l.b16 %v435
      %v671 = vunpack.c.h.b16 %v435
      %v672 = vunpack.c.l.b16 %v436
      %v673 = vunpack.c.h.b16 %v436
      %v674 = vunpack.c.l.b16 %v437
      %v675 = vunpack.c.l.b16 %v438
      %v676 = vunpack.c.h.b16 %v438
      %v677 = vunpack.c.l.b16 %v439
      %v678 = vunpack.c.h.b16 %v439
      %v679 = vunpack.c.l.b16 %v440
      %v680 = vunpack.c.h.b16 %v440
      %v681 = vunpack.c.l.b16 %v441
      %v682 = vpack.c.b16 %v675, %v668
      %v683 = vpack.c.b16 %v676, %v669
      %v684 = vpack.c.b16 %v677, %v670
      %v685 = vpack.c.b16 %v678, %v671
      %v686 = vpack.c.b16 %v679, %v672
      %v687 = vpack.c.b16 %v680, %v673
      %v688 = vpack.c.b16 %v681, %v674
      %v891 = vunpack.c.l.b16 %v442
      %v892 = vunpack.c.h.b16 %v442
      %v893 = vunpack.c.l.b16 %v443
      %v894 = vunpack.c.h.b16 %v443
      %v895 = vunpack.c.l.b16 %v444
      %v896 = vunpack.c.h.b16 %v444
      %v897 = vunpack.c.l.b16 %v445
      %v898 = vunpack.c.h.b16 %v445
      %v899 = vunpack.c.l.b16 %v446
      %v900 = vunpack.c.h.b16 %v446
      %v901 = vunpack.c.l.b16 %v447
      %v902 = vunpack.c.h.b16 %v447
      %v903 = vunpack.c.l.b16 %v448
      %v904 = vunpack.c.h.b16 %v448
      %v905 = vunpack.c.l.b16 %v449
      %v906 = vunpack.c.h.b16 %v449
      %v907 = vunpack.c.l.b16 %v450
      %v908 = vunpack.c.h.b16 %v450
      %v909 = vunpack.c.l.b16 %v451
      %v910 = vunpack.c.h.b16 %v451
      %v911 = vunpack.c.l.b16 %v452
      %v912 = vunpack.c.h.b16 %v452
      %v913 = vunpack.c.l.b16 %v453
      %v914 = vunpack.c.h.b16 %v453
      %v915 = vunpack.c.l.b16 %v454
      %v916 = vunpack.c.h.b16 %v454
      %v917 = vunpack.c.l.b16 %v455
      %v918 = vunpack.c.h.b16 %v455
      %v919 = vunpack.c.l.b16 %v456
      %v920 = vunpack.c.h.b16 %v456
      %v921 = vunpack.c.l.b16 %v457
      %v922 = vunpack.c.h.b16 %v457
      %v923 = vunpack.c.l.b16 %v458
      %v924 = vunpack.c.h.b16 %v458
      %v925 = vunpack.c.l.b16 %v459
      %v926 = vunpack.c.h.b16 %v459
      %v927 = vunpack.c.l.b16 %v460
      %v928 = vunpack.c.h.b16 %v460
      %v929 = vunpack.c.l.b16 %v461
      %v930 = vunpack.c.h.b16 %v461
      %v931 = vunpack.c.l.b16 %v462
      %v932 = vunpack.c.h.b16 %v462
      %v933 = vunpack.c.l.b16 %v463
      %v934 = vunpack.c.h.b16 %v463
      %v935 = vunpack.c.l.b16 %v464
      %v936 = vunpack.c.h.b16 %v464
      %v937 = vunpack.c.l.b16 %v465
      %v938 = vunpack.c.h.b16 %v465
      %v939 = vunpack.c.l.b16 %v466
      %v940 = vunpack.c.h.b16 %v466
      %v941 = vunpack.c.l.b16 %v467
      %v942 = vunpack.c.h.b16 %v467
      %v943 = vunpack.c.l.b16 %v468
      %v944 = vunpack.c.h.b16 %v468
      %v945 = vunpack.c.l.b16 %v469
      %v946 = vunpack.c.h.b16 %v469
      %v947 = vunpack.c.l.b16 %v470
      %v948 = vunpack.c.h.b16 %v470
      %v949 = vunpack.c.l.b16 %v471
      %v950 = vunpack.c.h.b16 %v471
      %v951 = vunpack.c.l.b16 %v472
      %v952 = vunpack.c.h.b16 %v472
      %v953 = vunpack.c.l.b16 %v473
      %v954 = vunpack.c.h.b16 %v473
      %v955 = vunpack.c.l.b16 %v474
      %v956 = vunpack.c.h.b16 %v474
      %v957 = vunpack.c.l.b16 %v475
      %v958 = vunpack.c.h.b16 %v475
      %v959 = vunpack.c.l.b16 %v476
      %v960 = vunpack.c.h.b16 %v476
      %v961 = vunpack.c.l.b16 %v477
      %v962 = vunpack.c.h.b16 %v477
      %v963 = vunpack.c.l.b16 %v478
      %v964 = vunpack.c.h.b16 %v478
      %v965 = vunpack.c.l.b16 %v479
      %v966 = vunpack.c.h.b16 %v479
      %v967 = vunpack.c.l.b16 %v480
      %v968 = vunpack.c.h.b16 %v480
      %v969 = vunpack.c.l.b16 %v481
      %v970 = vunpack.c.h.b16 %v481
      %v971 = vunpack.c.l.b16 %v482
      %v972 = vunpack.c.h.b16 %v482
      %v973 = vunpack.c.l.b16 %v483
      %v974 = vunpack.c.h.b16 %v483
      %v975 = vunpack.c.l.b16 %v484
      %v976 = vunpack.c.h.b16 %v484
      %v977 = vunpack.c.l.b16 %v485
      %v978 = vunpack.c.h.b16 %v485
      %v979 = vunpack.c.l.b16 %v486
      %v980 = vunpack.c.h.b16 %v486
      %v981 = vunpack.c.l.b16 %v487
      %v982 = vunpack.c.h.b16 %v487
      %v983 = vunpack.c.l.b16 %v488
      %v984 = vunpack.c.h.b16 %v488
      %v985 = vunpack.c.l.b16 %v489
      %v986 = vunpack.c.h.b16 %v489
      %v987 = vunpack.c.l.b16 %v490
      %v988 = vunpack.c.h.b16 %v490
      %v989 = vunpack.c.l.b16 %v491
      %v990 = vunpack.c.h.b16 %v491
      %v991 = vunpack.c.l.b16 %v492
      %v992 = vunpack.c.h.b16 %v492
      %v993 = vunpack.c.l.b16 %v493
      %v994 = vunpack.c.h.b16 %v493
      %v995 = vunpack.c.l.b16 %v494
      %v996 = vunpack.c.h.b16 %v494
      %v997 = vunpack.c.l.b16 %v495
      %v998 = vunpack.c.h.b16 %v495
      %v999 = vunpack.c.l.b16 %v496
      %v1000 = vunpack.c.h.b16 %v496
      %v1001 = vunpack.c.l.b16 %v497
      %v1002 = vunpack.c.h.b16 %v497
      %v1003 = vunpack.c.l.b16 %v498
      %v1004 = vunpack.c.h.b16 %v498
      %v1005 = vunpack.c.l.b16 %v499
      %v1006 = vunpack.c.h.b16 %v499
      %v1007 = vunpack.c.l.b16 %v500
      %v1008 = vunpack.c.h.b16 %v500
      %v1009 = vunpack.c.l.b16 %v501
      %v1010 = vunpack.c.h.b16 %v501
      %v1011 = vunpack.c.l.b16 %v502
      %v1012 = vunpack.c.h.b16 %v502
      %v1013 = vunpack.c.l.b16 %v503
      %v1014 = vunpack.c.h.b16 %v503
      %v1015 = vunpack.c.l.b16 %v504
      %v1016 = vunpack.c.h.b16 %v504
      %v1017 = vunpack.c.l.b16 %v505
      %v1018 = vunpack.c.h.b16 %v505
      %v1019 = vunpack.c.l.b16 %v506
      %v1020 = vunpack.c.h.b16 %v506
      %v1021 = vunpack.c.l.b16 %v507
      %v1022 = vunpack.c.h.b16 %v507
      %v1023 = vunpack.c.l.b16 %v508
      %v1024 = vunpack.c.h.b16 %v508
      %v1025 = vunpack.c.l.b16 %v509
      %v1026 = vunpack.c.h.b16 %v509
      %v1027 = vunpack.c.l.b16 %v510
      %v1028 = vunpack.c.h.b16 %v510
      %v1029 = vunpack.c.l.b16 %v511
      %v1030 = vunpack.c.h.b16 %v511
      %v1031 = vunpack.c.l.b16 %v512
      %v1032 = vunpack.c.h.b16 %v512
      %v1033 = vunpack.c.l.b16 %v513
      %v1034 = vunpack.c.h.b16 %v513
      %v1035 = vunpack.c.l.b16 %v514
      %v1036 = vunpack.c.h.b16 %v514
      %v1037 = vunpack.c.l.b16 %v515
      %v1038 = vunpack.c.h.b16 %v515
      %v1039 = vunpack.c.l.b16 %v516
      %v1040 = vunpack.c.h.b16 %v516
      %v1041 = vunpack.c.l.b16 %v517
      %v1042 = vunpack.c.h.b16 %v517
      %v1043 = vunpack.c.l.b16 %v518
      %v1044 = vunpack.c.h.b16 %v518
      %v1045 = vunpack.c.l.b16 %v519
      %v1046 = vunpack.c.h.b16 %v519
      %v1047 = vunpack.c.l.b16 %v520
      %v1048 = vunpack.c.h.b16 %v520
      %v1049 = vunpack.c.l.b16 %v521
      %v1050 = vunpack.c.h.b16 %v521
      %v1051 = vunpack.c.l.b16 %v522
      %v1052 = vunpack.c.h.b16 %v522
      %v1053 = vunpack.c.l.b16 %v523
      %v1054 = vunpack.c.h.b16 %v523
      %v1055 = vunpack.c.l.b16 %v524
      %v1056 = vunpack.c.h.b16 %v524
      %v1057 = vunpack.c.l.b16 %v525
      %v1058 = vunpack.c.h.b16 %v525
      %v1059 = vunpack.c.l.b16 %v526
      %v1060 = vunpack.c.h.b16 %v526
      %v1061 = vunpack.c.l.b16 %v527
      %v1062 = vunpack.c.h.b16 %v527
      %v1063 = vunpack.c.l.b16 %v528
      %v1064 = vunpack.c.h.b16 %v528
      %v1065 = vunpack.c.l.b16 %v529
      %v1066 = vunpack.c.h.b16 %v529
      %v1067 = vunpack.c.l.b16 %v530
      %v1068 = vunpack.c.h.b16 %v530
      %v1069 = vunpack.c.l.b16 %v531
      %v1070 = vunpack.c.h.b16 %v531
      %v1071 = vunpack.c.l.b16 %v532
      %v1072 = vunpack.c.h.b16 %v532
      %v1073 = vunpack.c.l.b16 %v533
      %v1074 = vunpack.c.h.b16 %v533
      %v1075 = vunpack.c.l.b16 %v534
      %v1076 = vunpack.c.h.b16 %v534
      %v1077 = vunpack.c.l.b16 %v535
      %v1078 = vunpack.c.h.b16 %v535
      %v1079 = vunpack.c.l.b16 %v536
      %v1080 = vunpack.c.h.b16 %v536
      %v1081 = vunpack.c.l.b16 %v537
      %v1082 = vunpack.c.h.b16 %v537
      %v1083 = vunpack.c.l.b16 %v538
      %v1084 = vunpack.c.h.b16 %v538
      %v1085 = vunpack.c.l.b16 %v539
      %v1086 = vunpack.c.h.b16 %v539
      %v1087 = vunpack.c.l.b16 %v540
      %v1088 = vunpack.c.h.b16 %v540
      %v1089 = vunpack.c.l.b16 %v541
      %v1090 = vunpack.c.h.b16 %v541
      %v1091 = vunpack.c.l.b16 %v542
      %v1092 = vunpack.c.h.b16 %v542
      %v1093 = vunpack.c.l.b16 %v543
      %v1094 = vunpack.c.h.b16 %v543
      %v1095 = vunpack.c.l.b16 %v544
      %v1096 = vunpack.c.h.b16 %v544
      %v1097 = vunpack.c.l.b16 %v545
      %v1098 = vunpack.c.h.b16 %v545
      %v1099 = vunpack.c.l.b16 %v546
      %v1100 = vunpack.c.h.b16 %v546
      %v1101 = vunpack.c.l.b16 %v547
      %v1102 = vunpack.c.h.b16 %v547
      %v1103 = vunpack.c.l.b16 %v548
      %v1104 = vunpack.c.h.b16 %v548
      %v1105 = vunpack.c.l.b16 %v549
      %v1106 = vunpack.c.h.b16 %v549
      %v1107 = vunpack.c.l.b16 %v550
      %v1108 = vunpack.c.h.b16 %v550
      %v1109 = vunpack.c.l.b16 %v551
      %v1110 = vunpack.c.h.b16 %v551
      %v1111 = vunpack.c.l.b16 %v552
      %v1112 = vunpack.c.h.b16 %v552
      %v1113 = vunpack.c.l.b16 %v553
      %v1114 = vunpack.c.h.b16 %v553
      %v1115 = vunpack.c.l.b16 %v554
      %v1116 = vunpack.c.h.b16 %v554
      %v1117 = vunpack.c.l.b16 %v555
      %v1118 = vunpack.c.h.b16 %v555
      %v1119 = vunpack.c.l.b16 %v556
      %v1120 = vunpack.c.h.b16 %v556
      %v1121 = vunpack.c.l.b16 %v557
      %v1122 = vunpack.c.h.b16 %v557
      %v1123 = vunpack.c.l.b16 %v558
      %v1124 = vunpack.c.h.b16 %v558
      %v1125 = vunpack.c.l.b16 %v559
      %v1126 = vunpack.c.h.b16 %v559
      %v1127 = vunpack.c.l.b16 %v560
      %v1128 = vunpack.c.h.b16 %v560
      %v1129 = vunpack.c.l.b16 %v561
      %v1130 = vunpack.c.h.b16 %v561
      %v1131 = vunpack.c.l.b16 %v562
      %v1132 = vunpack.c.h.b16 %v562
      %v1133 = vunpack.c.l.b16 %v563
      %v1134 = vunpack.c.h.b16 %v563
      %v1135 = vunpack.c.l.b16 %v564
      %v1136 = vunpack.c.h.b16 %v564
      %v1137 = vunpack.c.l.b16 %v565
      %v1138 = vunpack.c.h.b16 %v565
      %v1139 = vunpack.c.l.b16 %v566
      %v1140 = vunpack.c.h.b16 %v566
      %v1141 = vunpack.c.l.b16 %v567
      %v1142 = vunpack.c.h.b16 %v567
      %v1143 = vunpack.c.l.b16 %v568
      %v1144 = vunpack.c.h.b16 %v568
      %v1145 = vunpack.c.l.b16 %v569
      %v1146 = vunpack.c.h.b16 %v569
      %v1147 = vunpack.c.l.b16 %v570
      %v1148 = vunpack.c.h.b16 %v570
      %v1149 = vunpack.c.l.b16 %v571
      %v1150 = vunpack.c.h.b16 %v571
      %v1151 = vunpack.c.l.b16 %v572
      %v1152 = vunpack.c.h.b16 %v572
      %v1153 = vunpack.c.l.b16 %v573
      %v1154 = vunpack.c.h.b16 %v573
      %v1155 = vunpack.c.l.b16 %v574
      %v1156 = vunpack.c.h.b16 %v574
      %v1157 = vunpack.c.l.b16 %v575
      %v1158 = vunpack.c.h.b16 %v575
      %v1159 = vunpack.c.l.b16 %v576
      %v1160 = vunpack.c.h.b16 %v576
      %v1161 = vunpack.c.l.b16 %v577
      %v1162 = vunpack.c.h.b16 %v577
      %v1163 = vunpack.c.l.b16 %v578
      %v1164 = vunpack.c.h.b16 %v578
      %v1165 = vunpack.c.l.b16 %v579
      %v1166 = vunpack.c.h.b16 %v579
      %v1167 = vunpack.c.l.b16 %v580
      %v1168 = vunpack.c.h.b16 %v580
      %v1169 = vunpack.c.l.b16 %v581
      %v1170 = vunpack.c.h.b16 %v581
      %v1171 = vunpack.c.l.b16 %v582
      %v1172 = vunpack.c.h.b16 %v582
      %v1173 = vunpack.c.l.b16 %v583
      %v1174 = vunpack.c.h.b16 %v583
      %v1175 = vunpack.c.l.b16 %v584
      %v1176 = vunpack.c.h.b16 %v584
      %v1177 = vunpack.c.l.b16 %v585
      %v1178 = vunpack.c.h.b16 %v585
      %v1179 = vunpack.c.l.b16 %v586
      %v1180 = vunpack.c.h.b16 %v586
      %v1181 = vunpack.c.l.b16 %v587
      %v1182 = vunpack.c.h.b16 %v587
      %v1183 = vunpack.c.l.b16 %v588
      %v1184 = vunpack.c.h.b16 %v588
      %v1185 = vunpack.c.l.b16 %v589
      %v1186 = vunpack.c.h.b16 %v589
      %v1187 = vunpack.c.l.b16 %v590
      %v1188 = vunpack.c.h.b16 %v590
      %v1189 = vunpack.c.l.b16 %v591
      %v1190 = vunpack.c.h.b16 %v591
      %v1191 = vunpack.c.l.b16 %v592
      %v1192 = vunpack.c.h.b16 %v592
      %v1193 = vunpack.c.l.b16 %v593
      %v1194 = vunpack.c.h.b16 %v593
      %v1195 = vunpack.c.l.b16 %v594
      %v1196 = vunpack.c.h.b16 %v594
      %v1197 = vunpack.c.l.b16 %v595
      %v1198 = vunpack.c.h.b16 %v595
      %v1199 = vunpack.c.l.b16 %v596
      %v1200 = vunpack.c.h.b16 %v596
      %v1201 = vunpack.c.l.b16 %v597
      %v1202 = vunpack.c.h.b16 %v597
      %v1203 = vunpack.c.l.b16 %v598
      %v1204 = vunpack.c.h.b16 %v598
      %v1205 = vunpack.c.l.b16 %v599
      %v1206 = vunpack.c.h.b16 %v599
      %v1207 = vunpack.c.l.b16 %v600
      %v1208 = vunpack.c.h.b16 %v600
      %v1209 = vunpack.c.l.b16 %v601
      %v1210 = vunpack.c.h.b16 %v601
      %v1211 = vunpack.c.l.b16 %v602
      %v1212 = vunpack.c.h.b16 %v602
      %v1213 = vunpack.c.l.b16 %v603
      %v1214 = vunpack.c.h.b16 %v603
      %v1215 = vunpack.c.l.b16 %v604
      %v1216 = vunpack.c.h.b16 %v604
      %v1217 = vunpack.c.l.b16 %v605
      %v1218 = vunpack.c.h.b16 %v605
      %v1219 = vunpack.c.l.b16 %v606
      %v1220 = vunpack.c.h.b16 %v606
      %v1221 = vunpack.c.l.b16 %v607
      %v1222 = vunpack.c.h.b16 %v607
      %v1223 = vunpack.c.l.b16 %v608
      %v1224 = vunpack.c.h.b16 %v608
      %v1225 = vunpack.c.l.b16 %v609
      %v1226 = vunpack.c.h.b16 %v609
      %v1227 = vunpack.c.l.b16 %v610
      %v1228 = vunpack.c.h.b16 %v610
      %v1229 = vunpack.c.l.b16 %v611
      %v1230 = vunpack.c.h.b16 %v611
      %v1231 = vunpack.c.l.b16 %v612
      %v1232 = vunpack.c.h.b16 %v612
      %v1233 = vunpack.c.l.b16 %v613
      %v1234 = vunpack.c.h.b16 %v613
      %v1235 = vunpack.c.l.b16 %v614
      %v1236 = vunpack.c.h.b16 %v614
      %v1237 = vunpack.c.l.b16 %v615
      %v1238 = vunpack.c.h.b16 %v615
      %v1239 = vunpack.c.l.b16 %v616
      %v1240 = vunpack.c.h.b16 %v616
      %v1241 = vunpack.c.l.b16 %v617
      %v1242 = vunpack.c.h.b16 %v617
      %v1243 = vunpack.c.l.b16 %v618
      %v1244 = vunpack.c.h.b16 %v618
      %v1245 = vunpack.c.l.b16 %v619
      %v1246 = vunpack.c.h.b16 %v619
      %v1247 = vunpack.c.l.b16 %v620
      %v1248 = vunpack.c.h.b16 %v620
      %v1249 = vunpack.c.l.b16 %v621
      %v1250 = vunpack.c.h.b16 %v621
      %v1251 = vunpack.c.l.b16 %v622
      %v1252 = vunpack.c.h.b16 %v622
      %v1253 = vunpack.c.l.b16 %v623
      %v1254 = vunpack.c.h.b16 %v623
      %v1255 = vunpack.c.l.b16 %v624
      %v1256 = vunpack.c.h.b16 %v624
      %v1257 = vunpack.c.l.b16 %v625
      %v1258 = vunpack.c.h.b16 %v625
      %v1259 = vunpack.c.l.b16 %v626
      %v1260 = vunpack.c.h.b16 %v626
      %v1261 = vunpack.c.l.b16 %v627
      %v1262 = vunpack.c.h.b16 %v627
      %v1263 = vunpack.c.l.b16 %v628
      %v1264 = vunpack.c.h.b16 %v628
      %v1265 = vunpack.c.l.b16 %v629
      %v1266 = vunpack.c.h.b16 %v629
      %v1267 = vunpack.c.l.b16 %v630
      %v1268 = vunpack.c.h.b16 %v630
      %v1269 = vunpack.c.l.b16 %v631
      %v1270 = vunpack.c.h.b16 %v631
      %v1271 = vunpack.c.l.b16 %v632
      %v1272 = vunpack.c.h.b16 %v632
      %v1273 = vunpack.c.l.b16 %v633
      %v1274 = vunpack.c.h.b16 %v633
      %v1275 = vunpack.c.l.b16 %v634
      %v1276 = vunpack.c.h.b16 %v634
      %v1277 = vunpack.c.l.b16 %v635
      %v1278 = vunpack.c.h.b16 %v635
      %v1279 = vunpack.c.l.b16 %v636
      %v1280 = vunpack.c.h.b16 %v636
      %v1281 = vunpack.c.l.b16 %v637
      %v1282 = vunpack.c.h.b16 %v637
      %v1283 = vpack.c.b16 %v895, %v891
      %v1284 = vpack.c.b16 %v896, %v892
      %v1285 = vpack.c.b16 %v897, %v893
      %v1286 = vpack.c.b16 %v898, %v894
      %v1287 = vpack.c.b16 %v903, %v899
      %v1288 = vpack.c.b16 %v904, %v900
      %v1289 = vpack.c.b16 %v905, %v901
      %v1290 = vpack.c.b16 %v906, %v902
      %v1291 = vpack.c.b16 %v911, %v907
      %v1292 = vpack.c.b16 %v912, %v908
      %v1293 = vpack.c.b16 %v913, %v909
      %v1294 = vpack.c.b16 %v914, %v910
      %v1295 = vpack.c.b16 %v919, %v915
      %v1296 = vpack.c.b16 %v920, %v916
      %v1297 = vpack.c.b16 %v921, %v917
      %v1298 = vpack.c.b16 %v922, %v918
      %v1299 = vpack.c.b16 %v927, %v923
      %v1300 = vpack.c.b16 %v928, %v924
      %v1301 = vpack.c.b16 %v929, %v925
      %v1302 = vpack.c.b16 %v930, %v926
      %v1303 = vpack.c.b16 %v935, %v931
      %v1304 = vpack.c.b16 %v936, %v932
      %v1305 = vpack.c.b16 %v937, %v933
      %v1306 = vpack.c.b16 %v938, %v934
      %v1307 = vpack.c.b16 %v943, %v939
      %v1308 = vpack.c.b16 %v944, %v940
      %v1309 = vpack.c.b16 %v945, %v941
      %v1310 = vpack.c.b16 %v946, %v942
      %v1311 = vpack.c.b16 %v951, %v947
      %v1312 = vpack.c.b16 %v952, %v948
      %v1313 = vpack.c.b16 %v953, %v949
      %v1314 = vpack.c.b16 %v954, %v950
      %v1315 = vpack.c.b16 %v959, %v955
      %v1316 = vpack.c.b16 %v960, %v956
      %v1317 = vpack.c.b16 %v961, %v957
      %v1318 = vpack.c.b16 %v962, %v958
      %v1319 = vpack.c.b16 %v967, %v963
      %v1320 = vpack.c.b16 %v968, %v964
      %v1321 = vpack.c.b16 %v969, %v965
      %v1322 = vpack.c.b16 %v970, %v966
      %v1323 = vpack.c.b16 %v975, %v971
      %v1324 = vpack.c.b16 %v976, %v972
      %v1325 = vpack.c.b16 %v977, %v973
      %v1326 = vpack.c.b16 %v978, %v974
      %v1327 = vpack.c.b16 %v983, %v979
      %v1328 = vpack.c.b16 %v984, %v980
      %v1329 = vpack.c.b16 %v985, %v981
      %v1330 = vpack.c.b16 %v986, %v982
      %v1331 = vpack.c.b16 %v991, %v987
      %v1332 = vpack.c.b16 %v992, %v988
      %v1333 = vpack.c.b16 %v993, %v989
      %v1334 = vpack.c.b16 %v994, %v990
      %v1335 = vpack.c.b16 %v999, %v995
      %v1336 = vpack.c.b16 %v1000, %v996
      %v1337 = vpack.c.b16 %v1001, %v997
      %v1338 = vpack.c.b16 %v1002, %v998
      %v1339 = vpack.c.b16 %v1007, %v1003
      %v1340 = vpack.c.b16 %v1008, %v1004
      %v1341 = vpack.c.b16 %v1009, %v1005
      %v1342 = vpack.c.b16 %v1010, %v1006
      %v1343 = vpack.c.b16 %v1015, %v1011
      %v1344 = vpack.c.b16 %v1016, %v1012
      %v1345 = vpack.c.b16 %v1017, %v1013
      %v1346 = vpack.c.b16 %v1018, %v1014
      %v1347 = vpack.c.b16 %v1023, %v1019
      %v1348 = vpack.c.b16 %v1024, %v1020
      %v1349 = vpack.c.b16 %v1025, %v1021
      %v1350 = vpack.c.b16 %v1026, %v1022
      %v1351 = vpack.c.b16 %v1031, %v1027
      %v1352 = vpack.c.b16 %v1032, %v1028
      %v1353 = vpack.c.b16 %v1033, %v1029
      %v1354 = vpack.c.b16 %v1034, %v1030
      %v1355 = vpack.c.b16 %v1039, %v1035
      %v1356 = vpack.c.b16 %v1040, %v1036
      %v1357 = vpack.c.b16 %v1041, %v1037
      %v1358 = vpack.c.b16 %v1042, %v1038
      %v1359 = vpack.c.b16 %v1047, %v1043
      %v1360 = vpack.c.b16 %v1048, %v1044
      %v1361 = vpack.c.b16 %v1049, %v1045
      %v1362 = vpack.c.b16 %v1050, %v1046
      %v1363 = vpack.c.b16 %v1055, %v1051
      %v1364 = vpack.c.b16 %v1056, %v1052
      %v1365 = vpack.c.b16 %v1057, %v1053
      %v1366 = vpack.c.b16 %v1058, %v1054
      %v1367 = vpack.c.b16 %v1063, %v1059
      %v1368 = vpack.c.b16 %v1064, %v1060
      %v1369 = vpack.c.b16 %v1065, %v1061
      %v1370 = vpack.c.b16 %v1066, %v1062
      %v1371 = vpack.c.b16 %v1071, %v1067
      %v1372 = vpack.c.b16 %v1072, %v1068
      %v1373 = vpack.c.b16 %v1073, %v1069
      %v1374 = vpack.c.b16 %v1074, %v1070
      %v1375 = vpack.c.b16 %v1079, %v1075
      %v1376 = vpack.c.b16 %v1080, %v1076
      %v1377 = vpack.c.b16 %v1081, %v1077
      %v1378 = vpack.c.b16 %v1082, %v1078
      %v1379 = vpack.c.b16 %v1087, %v1083
      %v1380 = vpack.c.b16 %v1088, %v1084
      %v1381 = vpack.c.b16 %v1089, %v1085
      %v1382 = vpack.c.b16 %v1090, %v1086
      %v1383 = vpack.c.b16 %v1095, %v1091
      %v1384 = vpack.c.b16 %v1096, %v1092
      %v1385 = vpack.c.b16 %v1097, %v1093
      %v1386 = vpack.c.b16 %v1098, %v1094
      %v1387 = vpack.c.b16 %v1103, %v1099
      %v1388 = vpack.c.b16 %v1104, %v1100
      %v1389 = vpack.c.b16 %v1105, %v1101
      %v1390 = vpack.c.b16 %v1106, %v1102
      %v1391 = vpack.c.b16 %v1111, %v1107
      %v1392 = vpack.c.b16 %v1112, %v1108
      %v1393 = vpack.c.b16 %v1113, %v1109
      %v1394 = vpack.c.b16 %v1114, %v1110
      %v1395 = vpack.c.b16 %v1119, %v1115
      %v1396 = vpack.c.b16 %v1120, %v1116
      %v1397 = vpack.c.b16 %v1121, %v1117
      %v1398 = vpack.c.b16 %v1122, %v1118
      %v1399 = vpack.c.b16 %v1127, %v1123
      %v1400 = vpack.c.b16 %v1128, %v1124
      %v1401 = vpack.c.b16 %v1129, %v1125
      %v1402 = vpack.c.b16 %v1130, %v1126
      %v1403 = vpack.c.b16 %v1135, %v1131
      %v1404 = vpack.c.b16 %v1136, %v1132
      %v1405 = vpack.c.b16 %v1137, %v1133
      %v1406 = vpack.c.b16 %v1138, %v1134
      %v1407 = vpack.c.b16 %v1143, %v1139
      %v1408 = vpack.c.b16 %v1144, %v1140
      %v1409 = vpack.c.b16 %v1145, %v1141
      %v1410 = vpack.c.b16 %v1146, %v1142
      %v1411 = vpack.c.b16 %v1151, %v1147
      %v1412 = vpack.c.b16 %v1152, %v1148
      %v1413 = vpack.c.b16 %v1153, %v1149
      %v1414 = vpack.c.b16 %v1154, %v1150
      %v1415 = vpack.c.b16 %v1159, %v1155
      %v1416 = vpack.c.b16 %v1160, %v1156
      %v1417 = vpack.c.b16 %v1161, %v1157
      %v1418 = vpack.c.b16 %v1162, %v1158
      %v1419 = vpack.c.b16 %v1167, %v1163
      %v1420 = vpack.c.b16 %v1168, %v1164
      %v1421 = vpack.c.b16 %v1169, %v1165
      %v1422 = vpack.c.b16 %v1170, %v1166
      %v1423 = vpack.c.b16 %v1175, %v1171
      %v1424 = vpack.c.b16 %v1176, %v1172
      %v1425 = vpack.c.b16 %v1177, %v1173
      %v1426 = vpack.c.b16 %v1178, %v1174
      %v1427 = vpack.c.b16 %v1183, %v1179
      %v1428 = vpack.c.b16 %v1184, %v1180
      %v1429 = vpack.c.b16 %v1185, %v1181
      %v1430 = vpack.c.b16 %v1186, %v1182
      %v1431 = vpack.c.b16 %v1191, %v1187
      %v1432 = vpack.c.b16 %v1192, %v1188
      %v1433 = vpack.c.b16 %v1193, %v1189
      %v1434 = vpack.c.b16 %v1194, %v1190
      %v1435 = vpack.c.b16 %v1199, %v1195
      %v1436 = vpack.c.b16 %v1200, %v1196
      %v1437 = vpack.c.b16 %v1201, %v1197
      %v1438 = vpack.c.b16 %v1202, %v1198
      %v1439 = vpack.c.b16 %v1207, %v1203
      %v1440 = vpack.c.b16 %v1208, %v1204
      %v1441 = vpack.c.b16 %v1209, %v1205
      %v1442 = vpack.c.b16 %v1210, %v1206
      %v1443 = vpack.c.b16 %v1215, %v1211
      %v1444 = vpack.c.b16 %v1216, %v1212
      %v1445 = vpack.c.b16 %v1217, %v1213
      %v1446 = vpack.c.b16 %v1218, %v1214
      %v1447 = vpack.c.b16 %v1223, %v1219
      %v1448 = vpack.c.b16 %v1224, %v1220
      %v1449 = vpack.c.b16 %v1225, %v1221
      %v1450 = vpack.c.b16 %v1226, %v1222
      %v1451 = vpack.c.b16 %v1231, %v1227
      %v1452 = vpack.c.b16 %v1232, %v1228
      %v1453 = vpack.c.b16 %v1233, %v1229
      %v1454 = vpack.c.b16 %v1234, %v1230
      %v1455 = vpack.c.b16 %v1239, %v1235
      %v1456 = vpack.c.b16 %v1240, %v1236
      %v1457 = vpack.c.b16 %v1241, %v1237
      %v1458 = vpack.c.b16 %v1242, %v1238
      %v1459 = vpack.c.b16 %v1247, %v1243
      %v1460 = vpack.c.b16 %v1248, %v1244
      %v1461 = vpack.c.b16 %v1249, %v1245
      %v1462 = vpack.c.b16 %v1250, %v1246
      %v1463 = vpack.c.b16 %v1255, %v1251
      %v1464 = vpack.c.b16 %v1256, %v1252
      %v1465 = vpack.c.b16 %v1257, %v1253
      %v1466 = vpack.c.b16 %v1258, %v1254
      %v1467 = vpack.c.b16 %v1263, %v1259
      %v1468 = vpack.c.b16 %v1264, %v1260
      %v1469 = vpack.c.b16 %v1265, %v1261
      %v1470 = vpack.c.b16 %v1266, %v1262
      %v1471 = vpack.c.b16 %v1271, %v1267
      %v1472 = vpack.c.b16 %v1272, %v1268
      %v1473 = vpack.c.b16 %v1273, %v1269
      %v1474 = vpack.c.b16 %v1274, %v1270
      %v1475 = vpack.c.b16 %v1279, %v1275
      %v1476 = vpack.c.b16 %v1280, %v1276
      %v1477 = vpack.c.b16 %v1281, %v1277
      %v1478 = vpack.c.b16 %v1282, %v1278
      %vm1675 = vcmask 130048
      %v1677 = vsel %vm1675, %v688, 0
      %1679 = vmatprep.subr.bf16.mxu0 %v1284
      %1680 = vmatpush1.bf16.msra.mxu0 %v1283
      %1681 = vmatprep.subr.bf16.mxu0 %v1288
      %1682 = vmatpush1.bf16.msra.mxu0 %v1287
      %1683 = vmatprep.subr.bf16.mxu0 %v1292
      %1684 = vmatpush1.bf16.msra.mxu0 %v1291
      %1685 = vmatprep.subr.bf16.mxu0 %v1296
      %1686 = vmatpush1.bf16.msra.mxu0 %v1295
      %1687 = vmatprep.subr.bf16.mxu0 %v1300
      %1688 = vmatpush1.bf16.msra.mxu0 %v1299
      %1689 = vmatprep.subr.bf16.mxu0 %v1304
      %1690 = vmatpush1.bf16.msra.mxu0 %v1303
      %1691 = vmatprep.subr.bf16.mxu0 %v1308
      %1692 = vmatpush1.bf16.msra.mxu0 %v1307
      %1693 = vmatprep.subr.bf16.mxu0 %v1312
      %1694 = vmatpush1.bf16.msra.mxu0 %v1311
      %1695 = vmatprep.subr.bf16.mxu0 %v1316
      %1696 = vmatpush1.bf16.msra.mxu0 %v1315
      %1697 = vmatprep.subr.bf16.mxu0 %v1320
      %1698 = vmatpush1.bf16.msra.mxu0 %v1319
      %1699 = vmatprep.subr.bf16.mxu0 %v1324
      %1700 = vmatpush1.bf16.msra.mxu0 %v1323
      %1701 = vmatprep.subr.bf16.mxu0 %v1328
      %1702 = vmatpush1.bf16.msra.mxu0 %v1327
      %1703 = vmatprep.subr.bf16.mxu0 %v1332
      %1704 = vmatpush1.bf16.msra.mxu0 %v1331
      %1705 = vmatprep.subr.bf16.mxu0 %v1336
      %1706 = vmatpush1.bf16.msra.mxu0 %v1335
      %1707 = vmatprep.subr.bf16.mxu0 %v1340
      %1708 = vmatpush1.bf16.msra.mxu0 %v1339
      %1709 = vmatprep.subr.bf16.mxu0 %v1344
      %1710 = vmatpush1.bf16.msra.mxu0 %v1343
      %1711 = vmatprep.mubr.bf16.mxu0 %v683
      %1712 = vmatmul.mubr.bf16.gmra.mrb[0].mxu0 %v682
      %v1713 = vpop.f32.mrb[0].mxu0
      %v1714 = vadd.f32 %v643, %v1713
      %v1715 = vpop.f32.mrb[0].mxu0
      %v1716 = vadd.f32 %v647, %v1715
      %v1717 = vpop.f32.mrb[0].mxu0
      %v1718 = vadd.f32 %v643, %v1717
      %v1719 = vpop.f32.mrb[0].mxu0
      %v1720 = vadd.f32 %v647, %v1719
      %1721 = vdwg.mxu0
      %1722 = vmatprep.subr.bf16.mxu0 %v1348
      %1723 = vmatpush1.bf16.msra.mxu0 %v1347
      %1724 = vmatprep.subr.bf16.mxu0 %v1352
      %1725 = vmatpush1.bf16.msra.mxu0 %v1351
      %1726 = vmatprep.subr.bf16.mxu0 %v1356
      %1727 = vmatpush1.bf16.msra.mxu0 %v1355
      %1728 = vmatprep.subr.bf16.mxu0 %v1360
      %1729 = vmatpush1.bf16.msra.mxu0 %v1359
      %1730 = vmatprep.subr.bf16.mxu0 %v1364
      %1731 = vmatpush1.bf16.msra.mxu0 %v1363
      %1732 = vmatprep.subr.bf16.mxu0 %v1368
      %1733 = vmatpush1.bf16.msra.mxu0 %v1367
      %1734 = vmatprep.subr.bf16.mxu0 %v1372
      %1735 = vmatpush1.bf16.msra.mxu0 %v1371
      %1736 = vmatprep.subr.bf16.mxu0 %v1376
      %1737 = vmatpush1.bf16.msra.mxu0 %v1375
      %1738 = vmatprep.subr.bf16.mxu0 %v1380
      %1739 = vmatpush1.bf16.msra.mxu0 %v1379
      %1740 = vmatprep.subr.bf16.mxu0 %v1384
      %1741 = vmatpush1.bf16.msra.mxu0 %v1383
      %1742 = vmatprep.subr.bf16.mxu0 %v1388
      %1743 = vmatpush1.bf16.msra.mxu0 %v1387
      %1744 = vmatprep.subr.bf16.mxu0 %v1392
      %1745 = vmatpush1.bf16.msra.mxu0 %v1391
      %1746 = vmatprep.subr.bf16.mxu0 %v1396
      %1747 = vmatpush1.bf16.msra.mxu0 %v1395
      %1748 = vmatprep.subr.bf16.mxu0 %v1400
      %1749 = vmatpush1.bf16.msra.mxu0 %v1399
      %1750 = vmatprep.subr.bf16.mxu0 %v1404
      %1751 = vmatpush1.bf16.msra.mxu0 %v1403
      %1752 = vmatprep.subr.bf16.mxu0 %v1408
      %1753 = vmatpush1.bf16.msra.mxu0 %v1407
      %1754 = vmatprep.mubr.bf16.mxu0 %v685
      %1755 = vmatmul.mubr.bf16.gmra.mrb[0].mxu0 %v684
      %v1756 = vpop.f32.mrb[0].mxu0
      %v1757 = vadd.f32 %v1714, %v1756
      %v1758 = vpop.f32.mrb[0].mxu0
      %v1759 = vadd.f32 %v1716, %v1758
      %v1760 = vpop.f32.mrb[0].mxu0
      %v1761 = vadd.f32 %v1718, %v1760
      %v1762 = vpop.f32.mrb[0].mxu0
      %v1763 = vadd.f32 %v1720, %v1762
      %1764 = vdwg.mxu0
      %1765 = vmatprep.subr.bf16.mxu0 %v1412
      %1766 = vmatpush1.bf16.msra.mxu0 %v1411
      %1767 = vmatprep.subr.bf16.mxu0 %v1416
      %1768 = vmatpush1.bf16.msra.mxu0 %v1415
      %1769 = vmatprep.subr.bf16.mxu0 %v1420
      %1770 = vmatpush1.bf16.msra.mxu0 %v1419
      %1771 = vmatprep.subr.bf16.mxu0 %v1424
      %1772 = vmatpush1.bf16.msra.mxu0 %v1423
      %1773 = vmatprep.subr.bf16.mxu0 %v1428
      %1774 = vmatpush1.bf16.msra.mxu0 %v1427
      %1775 = vmatprep.subr.bf16.mxu0 %v1432
      %1776 = vmatpush1.bf16.msra.mxu0 %v1431
      %1777 = vmatprep.subr.bf16.mxu0 %v1436
      %1778 = vmatpush1.bf16.msra.mxu0 %v1435
      %1779 = vmatprep.subr.bf16.mxu0 %v1440
      %1780 = vmatpush1.bf16.msra.mxu0 %v1439
      %1781 = vmatprep.subr.bf16.mxu0 %v1444
      %1782 = vmatpush1.bf16.msra.mxu0 %v1443
      %1783 = vmatprep.subr.bf16.mxu0 %v1448
      %1784 = vmatpush1.bf16.msra.mxu0 %v1447
      %1785 = vmatprep.subr.bf16.mxu0 %v1452
      %1786 = vmatpush1.bf16.msra.mxu0 %v1451
      %1787 = vmatprep.subr.bf16.mxu0 %v1456
      %1788 = vmatpush1.bf16.msra.mxu0 %v1455
      %1789 = vmatprep.subr.bf16.mxu0 %v1460
      %1790 = vmatpush1.bf16.msra.mxu0 %v1459
      %1791 = vmatprep.subr.bf16.mxu0 %v1464
      %1792 = vmatpush1.bf16.msra.mxu0 %v1463
      %1793 = vmatprep.subr.bf16.mxu0 %v1468
      %1794 = vmatpush1.bf16.msra.mxu0 %v1467
      %1795 = vmatprep.subr.bf16.mxu0 %v1472
      %1796 = vmatpush1.bf16.msra.mxu0 %v1471
      %1797 = vmatprep.mubr.bf16.mxu0 %v687
      %1798 = vmatmul.mubr.bf16.gmra.mrb[0].mxu0 %v686
      %v1799 = vpop.f32.mrb[0].mxu0
      %v1800 = vadd.f32 %v1757, %v1799
      %v1801 = vpop.f32.mrb[0].mxu0
      %v1802 = vadd.f32 %v1759, %v1801
      %v1803 = vpop.f32.mrb[0].mxu0
      %v1804 = vadd.f32 %v1761, %v1803
      %v1805 = vpop.f32.mrb[0].mxu0
      %v1806 = vadd.f32 %v1763, %v1805
      %1807 = vdwg.mxu0
      %1808 = vmatprep.subr.bf16.mxu0 %v1476
      %1809 = vmatpush1.bf16.msra.mxu0 %v1475
      %1810 = vmatprep.subr.bf16.mxu0 0
      %1811 = vmatpush1.bf16.msra.mxu0 0
      %1812 = vmatprep.subr.bf16.mxu0 0
      %1813 = vmatpush1.bf16.msra.mxu0 0
      %1814 = vmatprep.subr.bf16.mxu0 0
      %1815 = vmatpush1.bf16.msra.mxu0 0
      %1816 = vmatprep.subr.bf16.mxu0 0
      %1817 = vmatpush1.bf16.msra.mxu0 0
      %1818 = vmatprep.subr.bf16.mxu0 0
      %1819 = vmatpush1.bf16.msra.mxu0 0
      %1820 = vmatprep.subr.bf16.mxu0 0
      %1821 = vmatpush1.bf16.msra.mxu0 0
      %1822 = vmatprep.subr.bf16.mxu0 0
      %1823 = vmatpush1.bf16.msra.mxu0 0
      %1824 = vmatprep.subr.bf16.mxu0 0
      %1825 = vmatpush1.bf16.msra.mxu0 0
      %1826 = vmatprep.subr.bf16.mxu0 0
      %1827 = vmatpush1.bf16.msra.mxu0 0
      %1828 = vmatprep.subr.bf16.mxu0 0
      %1829 = vmatpush1.bf16.msra.mxu0 0
      %1830 = vmatprep.subr.bf16.mxu0 0
      %1831 = vmatpush1.bf16.msra.mxu0 0
      %1832 = vmatprep.subr.bf16.mxu0 0
      %1833 = vmatpush1.bf16.msra.mxu0 0
      %1834 = vmatprep.subr.bf16.mxu0 0
      %1835 = vmatpush1.bf16.msra.mxu0 0
      %1836 = vmatprep.subr.bf16.mxu0 0
      %1837 = vmatpush1.bf16.msra.mxu0 0
      %1838 = vmatprep.subr.bf16.mxu0 0
      %1839 = vmatpush1.bf16.msra.mxu0 0
      %1840 = vmatprep.mubr.bf16.mxu0 0
      %1841 = vmatmul.mubr.bf16.gmra.mrb[0].mxu0 %v1677
      %v1842 = vpop.f32.mrb[0].mxu0
      %v1843 = vadd.f32 %v1800, %v1842
      %v1844 = vpop.f32.mrb[0].mxu0
      %v1845 = vadd.f32 %v1802, %v1844
      %v1846 = vpop.f32.mrb[0].mxu0
      %v1847 = vadd.f32 %v1804, %v1846
      %v1848 = vpop.f32.mrb[0].mxu0
      %v1849 = vadd.f32 %v1806, %v1848
      %1850 = vdwg.mxu0
      %1851 = vmatprep.subr.bf16.mxu0 %v1286
      %1852 = vmatpush1.bf16.msra.mxu0 %v1285
      %1853 = vmatprep.subr.bf16.mxu0 %v1290
      %1854 = vmatpush1.bf16.msra.mxu0 %v1289
      %1855 = vmatprep.subr.bf16.mxu0 %v1294
      %1856 = vmatpush1.bf16.msra.mxu0 %v1293
      %1857 = vmatprep.subr.bf16.mxu0 %v1298
      %1858 = vmatpush1.bf16.msra.mxu0 %v1297
      %1859 = vmatprep.subr.bf16.mxu0 %v1302
      %1860 = vmatpush1.bf16.msra.mxu0 %v1301
      %1861 = vmatprep.subr.bf16.mxu0 %v1306
      %1862 = vmatpush1.bf16.msra.mxu0 %v1305
      %1863 = vmatprep.subr.bf16.mxu0 %v1310
      %1864 = vmatpush1.bf16.msra.mxu0 %v1309
      %1865 = vmatprep.subr.bf16.mxu0 %v1314
      %1866 = vmatpush1.bf16.msra.mxu0 %v1313
      %1867 = vmatprep.subr.bf16.mxu0 %v1318
      %1868 = vmatpush1.bf16.msra.mxu0 %v1317
      %1869 = vmatprep.subr.bf16.mxu0 %v1322
      %1870 = vmatpush1.bf16.msra.mxu0 %v1321
      %1871 = vmatprep.subr.bf16.mxu0 %v1326
      %1872 = vmatpush1.bf16.msra.mxu0 %v1325
      %1873 = vmatprep.subr.bf16.mxu0 %v1330
      %1874 = vmatpush1.bf16.msra.mxu0 %v1329
      %1875 = vmatprep.subr.bf16.mxu0 %v1334
      %1876 = vmatpush1.bf16.msra.mxu0 %v1333
      %1877 = vmatprep.subr.bf16.mxu0 %v1338
      %1878 = vmatpush1.bf16.msra.mxu0 %v1337
      %1879 = vmatprep.subr.bf16.mxu0 %v1342
      %1880 = vmatpush1.bf16.msra.mxu0 %v1341
      %1881 = vmatprep.subr.bf16.mxu0 %v1346
      %1882 = vmatpush1.bf16.msra.mxu0 %v1345
      %1883 = vmatprep.mubr.bf16.mxu0 %v683
      %1884 = vmatmul.mubr.bf16.gmra.mrb[0].mxu0 %v682
      %v1885 = vpop.f32.mrb[0].mxu0
      %v1886 = vadd.f32 %v651, %v1885
      %v1887 = vpop.f32.mrb[0].mxu0
      %v1888 = vadd.f32 %v655, %v1887
      %v1889 = vpop.f32.mrb[0].mxu0
      %v1890 = vadd.f32 %v651, %v1889
      %v1891 = vpop.f32.mrb[0].mxu0
      %v1892 = vadd.f32 %v655, %v1891
      %1893 = vdwg.mxu0
      %1894 = vmatprep.subr.bf16.mxu0 %v1350
      %1895 = vmatpush1.bf16.msra.mxu0 %v1349
      %1896 = vmatprep.subr.bf16.mxu0 %v1354
      %1897 = vmatpush1.bf16.msra.mxu0 %v1353
      %1898 = vmatprep.subr.bf16.mxu0 %v1358
      %1899 = vmatpush1.bf16.msra.mxu0 %v1357
      %1900 = vmatprep.subr.bf16.mxu0 %v1362
      %1901 = vmatpush1.bf16.msra.mxu0 %v1361
      %1902 = vmatprep.subr.bf16.mxu0 %v1366
      %1903 = vmatpush1.bf16.msra.mxu0 %v1365
      %1904 = vmatprep.subr.bf16.mxu0 %v1370
      %1905 = vmatpush1.bf16.msra.mxu0 %v1369
      %1906 = vmatprep.subr.bf16.mxu0 %v1374
      %1907 = vmatpush1.bf16.msra.mxu0 %v1373
      %1908 = vmatprep.subr.bf16.mxu0 %v1378
      %1909 = vmatpush1.bf16.msra.mxu0 %v1377
      %1910 = vmatprep.subr.bf16.mxu0 %v1382
      %1911 = vmatpush1.bf16.msra.mxu0 %v1381
      %1912 = vmatprep.subr.bf16.mxu0 %v1386
      %1913 = vmatpush1.bf16.msra.mxu0 %v1385
      %1914 = vmatprep.subr.bf16.mxu0 %v1390
      %1915 = vmatpush1.bf16.msra.mxu0 %v1389
      %1916 = vmatprep.subr.bf16.mxu0 %v1394
      %1917 = vmatpush1.bf16.msra.mxu0 %v1393
      %1918 = vmatprep.subr.bf16.mxu0 %v1398
      %1919 = vmatpush1.bf16.msra.mxu0 %v1397
      %1920 = vmatprep.subr.bf16.mxu0 %v1402
      %1921 = vmatpush1.bf16.msra.mxu0 %v1401
      %1922 = vmatprep.subr.bf16.mxu0 %v1406
      %1923 = vmatpush1.bf16.msra.mxu0 %v1405
      %1924 = vmatprep.subr.bf16.mxu0 %v1410
      %1925 = vmatpush1.bf16.msra.mxu0 %v1409
      %1926 = vmatprep.mubr.bf16.mxu0 %v685
      %1927 = vmatmul.mubr.bf16.gmra.mrb[0].mxu0 %v684
      %v1928 = vpop.f32.mrb[0].mxu0
      %v1929 = vadd.f32 %v1886, %v1928
      %v1930 = vpop.f32.mrb[0].mxu0
      %v1931 = vadd.f32 %v1888, %v1930
      %v1932 = vpop.f32.mrb[0].mxu0
      %v1933 = vadd.f32 %v1890, %v1932
      %v1934 = vpop.f32.mrb[0].mxu0
      %v1935 = vadd.f32 %v1892, %v1934
      %1936 = vdwg.mxu0
      %1937 = vmatprep.subr.bf16.mxu0 %v1414
      %1938 = vmatpush1.bf16.msra.mxu0 %v1413
      %1939 = vmatprep.subr.bf16.mxu0 %v1418
      %1940 = vmatpush1.bf16.msra.mxu0 %v1417
      %1941 = vmatprep.subr.bf16.mxu0 %v1422
      %1942 = vmatpush1.bf16.msra.mxu0 %v1421
      %1943 = vmatprep.subr.bf16.mxu0 %v1426
      %1944 = vmatpush1.bf16.msra.mxu0 %v1425
      %1945 = vmatprep.subr.bf16.mxu0 %v1430
      %1946 = vmatpush1.bf16.msra.mxu0 %v1429
      %1947 = vmatprep.subr.bf16.mxu0 %v1434
      %1948 = vmatpush1.bf16.msra.mxu0 %v1433
      %1949 = vmatprep.subr.bf16.mxu0 %v1438
      %1950 = vmatpush1.bf16.msra.mxu0 %v1437
      %1951 = vmatprep.subr.bf16.mxu0 %v1442
      %1952 = vmatpush1.bf16.msra.mxu0 %v1441
      %1953 = vmatprep.subr.bf16.mxu0 %v1446
      %1954 = vmatpush1.bf16.msra.mxu0 %v1445
      %1955 = vmatprep.subr.bf16.mxu0 %v1450
      %1956 = vmatpush1.bf16.msra.mxu0 %v1449
      %1957 = vmatprep.subr.bf16.mxu0 %v1454
      %1958 = vmatpush1.bf16.msra.mxu0 %v1453
      %1959 = vmatprep.subr.bf16.mxu0 %v1458
      %1960 = vmatpush1.bf16.msra.mxu0 %v1457
      %1961 = vmatprep.subr.bf16.mxu0 %v1462
      %1962 = vmatpush1.bf16.msra.mxu0 %v1461
      %1963 = vmatprep.subr.bf16.mxu0 %v1466
      %1964 = vmatpush1.bf16.msra.mxu0 %v1465
      %1965 = vmatprep.subr.bf16.mxu0 %v1470
      %1966 = vmatpush1.bf16.msra.mxu0 %v1469
      %1967 = vmatprep.subr.bf16.mxu0 %v1474
      %1968 = vmatpush1.bf16.msra.mxu0 %v1473
      %1969 = vmatprep.mubr.bf16.mxu0 %v687
      %1970 = vmatmul.mubr.bf16.gmra.mrb[0].mxu0 %v686
      %v1971 = vpop.f32.mrb[0].mxu0
      %v1972 = vadd.f32 %v1929, %v1971
      %v1973 = vpop.f32.mrb[0].mxu0
      %v1974 = vadd.f32 %v1931, %v1973
      %v1975 = vpop.f32.mrb[0].mxu0
      %v1976 = vadd.f32 %v1933, %v1975
      %v1977 = vpop.f32.mrb[0].mxu0
      %v1978 = vadd.f32 %v1935, %v1977
      %1979 = vdwg.mxu0
      %1980 = vmatprep.subr.bf16.mxu0 %v1478
      %1981 = vmatpush1.bf16.msra.mxu0 %v1477
      %1982 = vmatprep.subr.bf16.mxu0 0
      %1983 = vmatpush1.bf16.msra.mxu0 0
      %1984 = vmatprep.subr.bf16.mxu0 0
      %1985 = vmatpush1.bf16.msra.mxu0 0
      %1986 = vmatprep.subr.bf16.mxu0 0
      %1987 = vmatpush1.bf16.msra.mxu0 0
      %1988 = vmatprep.subr.bf16.mxu0 0
      %1989 = vmatpush1.bf16.msra.mxu0 0
      %1990 = vmatprep.subr.bf16.mxu0 0
      %1991 = vmatpush1.bf16.msra.mxu0 0
      %1992 = vmatprep.subr.bf16.mxu0 0
      %1993 = vmatpush1.bf16.msra.mxu0 0
      %1994 = vmatprep.subr.bf16.mxu0 0
      %1995 = vmatpush1.bf16.msra.mxu0 0
      %1996 = vmatprep.subr.bf16.mxu0 0
      %1997 = vmatpush1.bf16.msra.mxu0 0
      %1998 = vmatprep.subr.bf16.mxu0 0
      %1999 = vmatpush1.bf16.msra.mxu0 0
      %2000 = vmatprep.subr.bf16.mxu0 0
      %2001 = vmatpush1.bf16.msra.mxu0 0
      %2002 = vmatprep.subr.bf16.mxu0 0
      %2003 = vmatpush1.bf16.msra.mxu0 0
      %2004 = vmatprep.subr.bf16.mxu0 0
      %2005 = vmatpush1.bf16.msra.mxu0 0
      %2006 = vmatprep.subr.bf16.mxu0 0
      %2007 = vmatpush1.bf16.msra.mxu0 0
      %2008 = vmatprep.subr.bf16.mxu0 0
      %2009 = vmatpush1.bf16.msra.mxu0 0
      %2010 = vmatprep.subr.bf16.mxu0 0
      %2011 = vmatpush1.bf16.msra.mxu0 0
      %2012 = vmatprep.mubr.bf16.mxu0 0
      %2013 = vmatmul.mubr.bf16.gmra.mrb[0].mxu0 %v1677
      %v2014 = vpop.f32.mrb[0].mxu0
      %v2015 = vadd.f32 %v1972, %v2014
      %v2016 = vpop.f32.mrb[0].mxu0
      %v2017 = vadd.f32 %v1974, %v2016
      %v2018 = vpop.f32.mrb[0].mxu0
      %v2019 = vadd.f32 %v1976, %v2018
      %v2020 = vpop.f32.mrb[0].mxu0
      %v2021 = vadd.f32 %v1978, %v2020
      %2022 = vdwg.mxu0
      %v2023 = vmax.f32 %v1843, 0.0
      %v2024 = vmax.f32 %v1845, 0.0
      %v2025 = vmax.f32 %v2015, 0.0
      %v2026 = vmax.f32 %v2017, 0.0
      %v2027 = vmax.f32 %v1847, 0.0
      %v2028 = vmax.f32 %v1849, 0.0
      %v2029 = vmax.f32 %v2019, 0.0
      %v2030 = vmax.f32 %v2021, 0.0
      %v2031 = vpack.c.bf16 %v2027, %v2023
      %v2032 = vpack.c.bf16 %v2028, %v2024
      %v2033 = vpack.c.bf16 %v2029, %v2025
      %v2034 = vpack.c.bf16 %v2030, %v2026
      %v2035 = vld [vmem:[%s3] sm:$0xff]
      %v2036 = vld [vmem:[%s3 + $0x8] sm:$0xff]
      %v2037 = vld [vmem:[%s3 + $0x10] sm:$0xff]
      %v2038 = vld [vmem:[%s3 + $0x18] sm:$0xff]
      %v2039 = vld [vmem:[%s3 + $0x20] sm:$0xff]
      %v2040 = vld [vmem:[%s3 + $0x28] sm:$0xff]
      %v2041 = vld [vmem:[%s3 + $0x30] sm:$0xff]
      %v2042 = vld [vmem:[%s3 + $0x38] sm:$0xff]
      %v2043 = vld [vmem:[%s3 + $0x40] sm:$0xff]
      %v2044 = vld [vmem:[%s3 + $0x48] sm:$0xff]
      %v2045 = vld [vmem:[%s3 + $0x50] sm:$0xff]
      %v2046 = vld [vmem:[%s3 + $0x58] sm:$0xff]
      %v2047 = vld [vmem:[%s3 + $0x60] sm:$0xff]
      %v2048 = vld [vmem:[%s3 + $0x68] sm:$0xff]
      %v2049 = vld [vmem:[%s3 + $0x70] sm:$0xff]
      %v2050 = vld [vmem:[%s3 + $0x78] sm:$0xff]
      %v2051 = vld [vmem:[%s3 + $0x80] sm:$0xff]
      %v2052 = vld [vmem:[%s3 + $0x88] sm:$0xff]
      %v2053 = vld [vmem:[%s3 + $0x90] sm:$0xff]
      %v2054 = vld [vmem:[%s3 + $0x98] sm:$0xff]
      %v2055 = vld [vmem:[%s3 + $0xa0] sm:$0xff]
      %v2056 = vld [vmem:[%s3 + $0xa8] sm:$0xff]
      %v2057 = vld [vmem:[%s3 + $0xb0] sm:$0xff]
      %v2058 = vld [vmem:[%s3 + $0xb8] sm:$0xff]
      %v2059 = vld [vmem:[%s3 + $0xc0] sm:$0xff]
      %v2060 = vld [vmem:[%s3 + $0xc8] sm:$0xff]
      %v2061 = vld [vmem:[%s3 + $0xd0] sm:$0xff]
      %v2062 = vld [vmem:[%s3 + $0xd8] sm:$0xff]
      %v2063 = vld [vmem:[%s3 + $0xe0] sm:$0xff]
      %v2064 = vld [vmem:[%s3 + $0xe8] sm:$0xff]
      %v2065 = vld [vmem:[%s3 + $0xf0] sm:$0xff]
      %v2066 = vld [vmem:[%s3 + $0xf8] sm:$0xff]
      %v2067 = vld [vmem:[%s3 + $0x100] sm:$0xff]
      %v2068 = vld [vmem:[%s3 + $0x108] sm:$0xff]
      %v2069 = vld [vmem:[%s3 + $0x110] sm:$0xff]
      %v2070 = vld [vmem:[%s3 + $0x118] sm:$0xff]
      %v2071 = vld [vmem:[%s3 + $0x120] sm:$0xff]
      %v2072 = vld [vmem:[%s3 + $0x128] sm:$0xff]
      %v2073 = vld [vmem:[%s3 + $0x130] sm:$0xff]
      %v2074 = vld [vmem:[%s3 + $0x138] sm:$0xff]
      %v2075 = vld [vmem:[%s3 + $0x140] sm:$0xff]
      %v2076 = vld [vmem:[%s3 + $0x148] sm:$0xff]
      %v2077 = vld [vmem:[%s3 + $0x150] sm:$0xff]
      %v2078 = vld [vmem:[%s3 + $0x158] sm:$0xff]
      %v2079 = vld [vmem:[%s3 + $0x160] sm:$0xff]
      %v2080 = vld [vmem:[%s3 + $0x168] sm:$0xff]
      %v2081 = vld [vmem:[%s3 + $0x170] sm:$0xff]
      %v2082 = vld [vmem:[%s3 + $0x178] sm:$0xff]
      %v2083 = vld [vmem:[%s3 + $0x180] sm:$0xff]
      %v2084 = vld [vmem:[%s3 + $0x188] sm:$0xff]
      %v2085 = vld [vmem:[%s4] sm:$0x3]
      %v2087 = vlaneseq
      %v2088 = vshrl.u32 %v2087, 7
      %v2089 = vsub.s32 0, %v2088
      %v2090 = vrot.slane %v2085, %v2089
      %v2091 = vlaneseq
      %v2092 = vshrl.u32 %v2091, 7
      %v2093 = vsub.s32 1, %v2092
      %v2094 = vrot.slane %v2085, %v2093
      %v2147 = vunpack.c.l.b16 %v2035
      %v2148 = vunpack.c.h.b16 %v2035
      %v2149 = vunpack.c.l.b16 %v2036
      %v2150 = vunpack.c.h.b16 %v2036
      %v2151 = vunpack.c.l.b16 %v2037
      %v2152 = vunpack.c.h.b16 %v2037
      %v2153 = vunpack.c.l.b16 %v2038
      %v2154 = vunpack.c.h.b16 %v2038
      %v2155 = vunpack.c.l.b16 %v2039
      %v2156 = vunpack.c.h.b16 %v2039
      %v2157 = vunpack.c.l.b16 %v2040
      %v2158 = vunpack.c.h.b16 %v2040
      %v2159 = vunpack.c.l.b16 %v2041
      %v2160 = vunpack.c.h.b16 %v2041
      %v2161 = vunpack.c.l.b16 %v2042
      %v2162 = vunpack.c.h.b16 %v2042
      %v2163 = vunpack.c.l.b16 %v2043
      %v2164 = vunpack.c.h.b16 %v2043
      %v2165 = vunpack.c.l.b16 %v2044
      %v2166 = vunpack.c.h.b16 %v2044
      %v2167 = vunpack.c.l.b16 %v2045
      %v2168 = vunpack.c.h.b16 %v2045
      %v2169 = vunpack.c.l.b16 %v2046
      %v2170 = vunpack.c.h.b16 %v2046
      %v2171 = vunpack.c.l.b16 %v2047
      %v2172 = vunpack.c.h.b16 %v2047
      %v2173 = vunpack.c.l.b16 %v2048
      %v2174 = vunpack.c.h.b16 %v2048
      %v2175 = vunpack.c.l.b16 %v2049
      %v2176 = vunpack.c.h.b16 %v2049
      %v2177 = vunpack.c.l.b16 %v2050
      %v2178 = vunpack.c.h.b16 %v2050
      %v2179 = vunpack.c.l.b16 %v2051
      %v2180 = vunpack.c.h.b16 %v2051
      %v2181 = vunpack.c.l.b16 %v2052
      %v2182 = vunpack.c.h.b16 %v2052
      %v2183 = vunpack.c.l.b16 %v2053
      %v2184 = vunpack.c.h.b16 %v2053
      %v2185 = vunpack.c.l.b16 %v2054
      %v2186 = vunpack.c.h.b16 %v2054
      %v2187 = vunpack.c.l.b16 %v2055
      %v2188 = vunpack.c.h.b16 %v2055
      %v2189 = vunpack.c.l.b16 %v2056
      %v2190 = vunpack.c.h.b16 %v2056
      %v2191 = vunpack.c.l.b16 %v2057
      %v2192 = vunpack.c.h.b16 %v2057
      %v2193 = vunpack.c.l.b16 %v2058
      %v2194 = vunpack.c.h.b16 %v2058
      %v2195 = vunpack.c.l.b16 %v2059
      %v2196 = vunpack.c.h.b16 %v2059
      %v2197 = vunpack.c.l.b16 %v2060
      %v2198 = vunpack.c.h.b16 %v2060
      %v2199 = vunpack.c.l.b16 %v2061
      %v2200 = vunpack.c.h.b16 %v2061
      %v2201 = vunpack.c.l.b16 %v2062
      %v2202 = vunpack.c.h.b16 %v2062
      %v2203 = vunpack.c.l.b16 %v2063
      %v2204 = vunpack.c.h.b16 %v2063
      %v2205 = vunpack.c.l.b16 %v2064
      %v2206 = vunpack.c.h.b16 %v2064
      %v2207 = vunpack.c.l.b16 %v2065
      %v2208 = vunpack.c.h.b16 %v2065
      %v2209 = vunpack.c.l.b16 %v2066
      %v2210 = vunpack.c.h.b16 %v2066
      %v2211 = vunpack.c.l.b16 %v2067
      %v2212 = vunpack.c.h.b16 %v2067
      %v2213 = vunpack.c.l.b16 %v2068
      %v2214 = vunpack.c.h.b16 %v2068
      %v2215 = vunpack.c.l.b16 %v2069
      %v2216 = vunpack.c.h.b16 %v2069
      %v2217 = vunpack.c.l.b16 %v2070
      %v2218 = vunpack.c.h.b16 %v2070
      %v2219 = vunpack.c.l.b16 %v2071
      %v2220 = vunpack.c.h.b16 %v2071
      %v2221 = vunpack.c.l.b16 %v2072
      %v2222 = vunpack.c.h.b16 %v2072
      %v2223 = vunpack.c.l.b16 %v2073
      %v2224 = vunpack.c.h.b16 %v2073
      %v2225 = vunpack.c.l.b16 %v2074
      %v2226 = vunpack.c.h.b16 %v2074
      %v2227 = vunpack.c.l.b16 %v2075
      %v2228 = vunpack.c.h.b16 %v2075
      %v2229 = vunpack.c.l.b16 %v2076
      %v2230 = vunpack.c.h.b16 %v2076
      %v2231 = vunpack.c.l.b16 %v2077
      %v2232 = vunpack.c.h.b16 %v2077
      %v2233 = vunpack.c.l.b16 %v2078
      %v2234 = vunpack.c.h.b16 %v2078
      %v2235 = vunpack.c.l.b16 %v2079
      %v2236 = vunpack.c.h.b16 %v2079
      %v2237 = vunpack.c.l.b16 %v2080
      %v2238 = vunpack.c.h.b16 %v2080
      %v2239 = vunpack.c.l.b16 %v2081
      %v2240 = vunpack.c.h.b16 %v2081
      %v2241 = vunpack.c.l.b16 %v2082
      %v2242 = vunpack.c.h.b16 %v2082
      %v2243 = vunpack.c.l.b16 %v2083
      %v2244 = vunpack.c.h.b16 %v2083
      %v2245 = vunpack.c.l.b16 %v2084
      %v2246 = vunpack.c.h.b16 %v2084
      %v2247 = vpack.c.b16 %v2149, %v2147
      %v2248 = vpack.c.b16 %v2150, %v2148
      %v2249 = vpack.c.b16 %v2153, %v2151
      %v2250 = vpack.c.b16 %v2154, %v2152
      %v2251 = vpack.c.b16 %v2157, %v2155
      %v2252 = vpack.c.b16 %v2158, %v2156
      %v2253 = vpack.c.b16 %v2161, %v2159
      %v2254 = vpack.c.b16 %v2162, %v2160
      %v2255 = vpack.c.b16 %v2165, %v2163
      %v2256 = vpack.c.b16 %v2166, %v2164
      %v2257 = vpack.c.b16 %v2169, %v2167
      %v2258 = vpack.c.b16 %v2170, %v2168
      %v2259 = vpack.c.b16 %v2173, %v2171
      %v2260 = vpack.c.b16 %v2174, %v2172
      %v2261 = vpack.c.b16 %v2177, %v2175
      %v2262 = vpack.c.b16 %v2178, %v2176
      %v2263 = vpack.c.b16 %v2181, %v2179
      %v2264 = vpack.c.b16 %v2182, %v2180
      %v2265 = vpack.c.b16 %v2185, %v2183
      %v2266 = vpack.c.b16 %v2186, %v2184
      %v2267 = vpack.c.b16 %v2189, %v2187
      %v2268 = vpack.c.b16 %v2190, %v2188
      %v2269 = vpack.c.b16 %v2193, %v2191
      %v2270 = vpack.c.b16 %v2194, %v2192
      %v2271 = vpack.c.b16 %v2197, %v2195
      %v2272 = vpack.c.b16 %v2198, %v2196
      %v2273 = vpack.c.b16 %v2201, %v2199
      %v2274 = vpack.c.b16 %v2202, %v2200
      %v2275 = vpack.c.b16 %v2205, %v2203
      %v2276 = vpack.c.b16 %v2206, %v2204
      %v2277 = vpack.c.b16 %v2209, %v2207
      %v2278 = vpack.c.b16 %v2210, %v2208
      %v2279 = vpack.c.b16 %v2213, %v2211
      %v2280 = vpack.c.b16 %v2214, %v2212
      %v2281 = vpack.c.b16 %v2217, %v2215
      %v2282 = vpack.c.b16 %v2218, %v2216
      %v2283 = vpack.c.b16 %v2221, %v2219
      %v2284 = vpack.c.b16 %v2222, %v2220
      %v2285 = vpack.c.b16 %v2225, %v2223
      %v2286 = vpack.c.b16 %v2226, %v2224
      %v2287 = vpack.c.b16 %v2229, %v2227
      %v2288 = vpack.c.b16 %v2230, %v2228
      %v2289 = vpack.c.b16 %v2233, %v2231
      %v2290 = vpack.c.b16 %v2234, %v2232
      %v2291 = vpack.c.b16 %v2237, %v2235
      %v2292 = vpack.c.b16 %v2238, %v2236
      %v2293 = vpack.c.b16 %v2241, %v2239
      %v2294 = vpack.c.b16 %v2242, %v2240
      %v2295 = vpack.c.b16 %v2245, %v2243
      %v2296 = vpack.c.b16 %v2246, %v2244
      %v2348 = vsel %vm1675, %v2034, 0
      %2350 = vmatprep.subr.bf16.mxu0 %v2248
      %2351 = vmatpush1.bf16.msra.mxu0 %v2247
      %2352 = vmatprep.subr.bf16.mxu0 %v2250
      %2353 = vmatpush1.bf16.msra.mxu0 %v2249
      %2354 = vmatprep.subr.bf16.mxu0 %v2252
      %2355 = vmatpush1.bf16.msra.mxu0 %v2251
      %2356 = vmatprep.subr.bf16.mxu0 %v2254
      %2357 = vmatpush1.bf16.msra.mxu0 %v2253
      %2358 = vmatprep.subr.bf16.mxu0 %v2256
      %2359 = vmatpush1.bf16.msra.mxu0 %v2255
      %2360 = vmatprep.subr.bf16.mxu0 %v2258
      %2361 = vmatpush1.bf16.msra.mxu0 %v2257
      %2362 = vmatprep.subr.bf16.mxu0 %v2260
      %2363 = vmatpush1.bf16.msra.mxu0 %v2259
      %2364 = vmatprep.subr.bf16.mxu0 %v2262
      %2365 = vmatpush1.bf16.msra.mxu0 %v2261
      %2366 = vmatprep.subr.bf16.mxu0 %v2264
      %2367 = vmatpush1.bf16.msra.mxu0 %v2263
      %2368 = vmatprep.subr.bf16.mxu0 %v2266
      %2369 = vmatpush1.bf16.msra.mxu0 %v2265
      %2370 = vmatprep.subr.bf16.mxu0 %v2268
      %2371 = vmatpush1.bf16.msra.mxu0 %v2267
      %2372 = vmatprep.subr.bf16.mxu0 %v2270
      %2373 = vmatpush1.bf16.msra.mxu0 %v2269
      %2374 = vmatprep.subr.bf16.mxu0 %v2272
      %2375 = vmatpush1.bf16.msra.mxu0 %v2271
      %2376 = vmatprep.subr.bf16.mxu0 %v2274
      %2377 = vmatpush1.bf16.msra.mxu0 %v2273
      %2378 = vmatprep.subr.bf16.mxu0 %v2276
      %2379 = vmatpush1.bf16.msra.mxu0 %v2275
      %2380 = vmatprep.subr.bf16.mxu0 %v2278
      %2381 = vmatpush1.bf16.msra.mxu0 %v2277
      %2382 = vmatprep.mubr.bf16.mxu0 %v2032
      %2383 = vmatmul.mubr.bf16.gmra.mrb[0].mxu0 %v2031
      %v2384 = vpop.f32.mrb[0].mxu0
      %v2385 = vadd.f32 %v2090, %v2384
      %v2386 = vpop.f32.mrb[0].mxu0
      %v2387 = vadd.f32 %v2094, %v2386
      %v2388 = vpop.f32.mrb[0].mxu0
      %v2389 = vadd.f32 %v2090, %v2388
      %v2390 = vpop.f32.mrb[0].mxu0
      %v2391 = vadd.f32 %v2094, %v2390
      %2392 = vdwg.mxu0
      %2393 = vmatprep.subr.bf16.mxu0 %v2280
      %2394 = vmatpush1.bf16.msra.mxu0 %v2279
      %2395 = vmatprep.subr.bf16.mxu0 %v2282
      %2396 = vmatpush1.bf16.msra.mxu0 %v2281
      %2397 = vmatprep.subr.bf16.mxu0 %v2284
      %2398 = vmatpush1.bf16.msra.mxu0 %v2283
      %2399 = vmatprep.subr.bf16.mxu0 %v2286
      %2400 = vmatpush1.bf16.msra.mxu0 %v2285
      %2401 = vmatprep.subr.bf16.mxu0 %v2288
      %2402 = vmatpush1.bf16.msra.mxu0 %v2287
      %2403 = vmatprep.subr.bf16.mxu0 %v2290
      %2404 = vmatpush1.bf16.msra.mxu0 %v2289
      %2405 = vmatprep.subr.bf16.mxu0 %v2292
      %2406 = vmatpush1.bf16.msra.mxu0 %v2291
      %2407 = vmatprep.subr.bf16.mxu0 %v2294
      %2408 = vmatpush1.bf16.msra.mxu0 %v2293
      %2409 = vmatprep.subr.bf16.mxu0 %v2296
      %2410 = vmatpush1.bf16.msra.mxu0 %v2295
      %2411 = vmatprep.subr.bf16.mxu0 0
      %2412 = vmatpush1.bf16.msra.mxu0 0
      %2413 = vmatprep.subr.bf16.mxu0 0
      %2414 = vmatpush1.bf16.msra.mxu0 0
      %2415 = vmatprep.subr.bf16.mxu0 0
      %2416 = vmatpush1.bf16.msra.mxu0 0
      %2417 = vmatprep.subr.bf16.mxu0 0
      %2418 = vmatpush1.bf16.msra.mxu0 0
      %2419 = vmatprep.subr.bf16.mxu0 0
      %2420 = vmatpush1.bf16.msra.mxu0 0
      %2421 = vmatprep.subr.bf16.mxu0 0
      %2422 = vmatpush1.bf16.msra.mxu0 0
      %2423 = vmatprep.subr.bf16.mxu0 0
      %2424 = vmatpush1.bf16.msra.mxu0 0
      %2425 = vmatprep.mubr.bf16.mxu0 %v2348
      %2426 = vmatmul.mubr.bf16.gmra.mrb[0].mxu0 %v2033
      %v2427 = vpop.f32.mrb[0].mxu0
      %v2428 = vadd.f32 %v2385, %v2427
      %v2429 = vpop.f32.mrb[0].mxu0
      %v2430 = vadd.f32 %v2387, %v2429
      %v2431 = vpop.f32.mrb[0].mxu0
      %v2432 = vadd.f32 %v2389, %v2431
      %v2433 = vpop.f32.mrb[0].mxu0
      %v2434 = vadd.f32 %v2391, %v2433
      %2435 = vdwg.mxu0
      %2436 = vst [vmem:[%s431] sm:$0xff] %v2428
      %2437 = vst [vmem:[%s431 + $0x8] sm:$0xff] %v2430
      %2438 = vst [vmem:[%s431 + $0x10] sm:$0xff] %v2432
      %2439 = vst [vmem:[%s431 + $0x18] sm:$0xff] %v2434
      %v2440 = vld [vmem:[%s417] sm:$0xff]
      %v2441 = vld [vmem:[%s417 + $0x8] sm:$0xff]
      %v2442 = vmul.f32 %v2440, %v2430
      %v2443 = vmul.f32 %v2441, %v2434
      %v2444 = vadd.f32 %v2442, %v2428
      %v2445 = vadd.f32 %v2443, %v2432
      %v2446 = vpack.c.bf16 %v2445, %v2444
      %v2447 = vld [vmem:[%s5] sm:$0xff]
      %v2448 = vld [vmem:[%s5 + $0x8] sm:$0xff]
      %v2449 = vld [vmem:[%s5 + $0x10] sm:$0xff]
      %v2450 = vld [vmem:[%s5 + $0x18] sm:$0xff]
      %v2451 = vld [vmem:[%s5 + $0x20] sm:$0xff]
      %v2452 = vld [vmem:[%s5 + $0x28] sm:$0xff]
      %v2453 = vld [vmem:[%s5 + $0x30] sm:$0xff]
      %v2454 = vld [vmem:[%s5 + $0x38] sm:$0xff]
      %v2455 = vld [vmem:[%s5 + $0x40] sm:$0xff]
      %v2456 = vld [vmem:[%s5 + $0x48] sm:$0xff]
      %v2457 = vld [vmem:[%s6] sm:$0xf]
      %v2459 = vlaneseq
      %v2460 = vshrl.u32 %v2459, 7
      %v2461 = vsub.s32 0, %v2460
      %v2462 = vrot.slane %v2457, %v2461
      %v2463 = vlaneseq
      %v2464 = vshrl.u32 %v2463, 7
      %v2465 = vsub.s32 1, %v2464
      %v2466 = vrot.slane %v2457, %v2465
      %v2467 = vlaneseq
      %v2468 = vshrl.u32 %v2467, 7
      %v2469 = vsub.s32 2, %v2468
      %v2470 = vrot.slane %v2457, %v2469
      %v2471 = vlaneseq
      %v2472 = vshrl.u32 %v2471, 7
      %v2473 = vsub.s32 3, %v2472
      %v2474 = vrot.slane %v2457, %v2473
      %v2489 = vunpack.c.l.b16 %v2447
      %v2490 = vunpack.c.h.b16 %v2447
      %v2491 = vunpack.c.l.b16 %v2448
      %v2492 = vunpack.c.h.b16 %v2448
      %v2493 = vunpack.c.l.b16 %v2449
      %v2494 = vunpack.c.h.b16 %v2449
      %v2495 = vunpack.c.l.b16 %v2450
      %v2496 = vunpack.c.h.b16 %v2450
      %v2497 = vunpack.c.l.b16 %v2451
      %v2498 = vunpack.c.h.b16 %v2451
      %v2499 = vunpack.c.l.b16 %v2452
      %v2500 = vunpack.c.h.b16 %v2452
      %v2501 = vunpack.c.l.b16 %v2453
      %v2502 = vunpack.c.h.b16 %v2453
      %v2503 = vunpack.c.l.b16 %v2454
      %v2504 = vunpack.c.h.b16 %v2454
      %v2505 = vunpack.c.l.b16 %v2455
      %v2506 = vunpack.c.h.b16 %v2455
      %v2507 = vunpack.c.l.b16 %v2456
      %v2508 = vunpack.c.h.b16 %v2456
      %v2509 = vpack.c.b16 %v2493, %v2489
      %v2510 = vpack.c.b16 %v2494, %v2490
      %v2511 = vpack.c.b16 %v2495, %v2491
      %v2512 = vpack.c.b16 %v2496, %v2492
      %v2513 = vpack.c.b16 %v2501, %v2497
      %v2514 = vpack.c.b16 %v2502, %v2498
      %v2515 = vpack.c.b16 %v2503, %v2499
      %v2516 = vpack.c.b16 %v2504, %v2500
      %v2517 = vpack.c.b16 %v2505, %v2505
      %v2518 = vpack.c.b16 %v2506, %v2506
      %v2519 = vpack.c.b16 %v2507, %v2507
      %v2520 = vpack.c.b16 %v2508, %v2508
      %vm2529 = vcmask 326656
      %v2531 = vsel %vm2529, %v2446, 0
      %vm2533 = vcmask 1043456
      %v2535 = vsel %vm2533, %v2517, 0
      %v2538 = vsel %vm2533, %v2518, 0
      %v2541 = vsel %vm2533, %v2519, 0
      %v2544 = vsel %vm2533, %v2520, 0
      %2546 = vmatprep.subr.bf16.mxu0 %v2510
      %2547 = vmatpush1.bf16.msra.mxu0 %v2509
      %2548 = vmatprep.subr.bf16.mxu0 %v2514
      %2549 = vmatpush1.bf16.msra.mxu0 %v2513
      %2550 = vmatprep.subr.bf16.mxu0 %v2538
      %2551 = vmatpush1.bf16.msra.mxu0 %v2535
      %2552 = vmatprep.subr.bf16.mxu0 0
      %2553 = vmatpush1.bf16.msra.mxu0 0
      %2554 = vmatprep.subr.bf16.mxu0 0
      %2555 = vmatpush1.bf16.msra.mxu0 0
      %2556 = vmatprep.subr.bf16.mxu0 0
      %2557 = vmatpush1.bf16.msra.mxu0 0
      %2558 = vmatprep.subr.bf16.mxu0 0
      %2559 = vmatpush1.bf16.msra.mxu0 0
      %2560 = vmatprep.subr.bf16.mxu0 0
      %2561 = vmatpush1.bf16.msra.mxu0 0
      %2562 = vmatprep.subr.bf16.mxu0 0
      %2563 = vmatpush1.bf16.msra.mxu0 0
      %2564 = vmatprep.subr.bf16.mxu0 0
      %2565 = vmatpush1.bf16.msra.mxu0 0
      %2566 = vmatprep.subr.bf16.mxu0 0
      %2567 = vmatpush1.bf16.msra.mxu0 0
      %2568 = vmatprep.subr.bf16.mxu0 0
      %2569 = vmatpush1.bf16.msra.mxu0 0
      %2570 = vmatprep.subr.bf16.mxu0 0
      %2571 = vmatpush1.bf16.msra.mxu0 0
      %2572 = vmatprep.subr.bf16.mxu0 0
      %2573 = vmatpush1.bf16.msra.mxu0 0
      %2574 = vmatprep.subr.bf16.mxu0 0
      %2575 = vmatpush1.bf16.msra.mxu0 0
      %2576 = vmatprep.subr.bf16.mxu0 0
      %2577 = vmatpush1.bf16.msra.mxu0 0
      %2578 = vmatprep.mubr.bf16.mxu0 0
      %2579 = vmatmul.mubr.bf16.gmra.mrb[0].mxu0 %v2531
      %v2580 = vpop.f32.mrb[0].mxu0
      %v2581 = vadd.f32 %v2462, %v2580
      %v2582 = vpop.f32.mrb[0].mxu0
      %v2583 = vadd.f32 %v2466, %v2582
      %v2584 = vpop.f32.mrb[0].mxu0
      %v2585 = vadd.f32 %v2462, %v2584
      %v2586 = vpop.f32.mrb[0].mxu0
      %v2587 = vadd.f32 %v2466, %v2586
      %2588 = vdwg.mxu0
      %2589 = vmatprep.subr.bf16.mxu0 %v2512
      %2590 = vmatpush1.bf16.msra.mxu0 %v2511
      %2591 = vmatprep.subr.bf16.mxu0 %v2516
      %2592 = vmatpush1.bf16.msra.mxu0 %v2515
      %2593 = vmatprep.subr.bf16.mxu0 %v2544
      %2594 = vmatpush1.bf16.msra.mxu0 %v2541
      %2595 = vmatprep.subr.bf16.mxu0 0
      %2596 = vmatpush1.bf16.msra.mxu0 0
      %2597 = vmatprep.subr.bf16.mxu0 0
      %2598 = vmatpush1.bf16.msra.mxu0 0
      %2599 = vmatprep.subr.bf16.mxu0 0
      %2600 = vmatpush1.bf16.msra.mxu0 0
      %2601 = vmatprep.subr.bf16.mxu0 0
      %2602 = vmatpush1.bf16.msra.mxu0 0
      %2603 = vmatprep.subr.bf16.mxu0 0
      %2604 = vmatpush1.bf16.msra.mxu0 0
      %2605 = vmatprep.subr.bf16.mxu0 0
      %2606 = vmatpush1.bf16.msra.mxu0 0
      %2607 = vmatprep.subr.bf16.mxu0 0
      %2608 = vmatpush1.bf16.msra.mxu0 0
      %2609 = vmatprep.subr.bf16.mxu0 0
      %2610 = vmatpush1.bf16.msra.mxu0 0
      %2611 = vmatprep.subr.bf16.mxu0 0
      %2612 = vmatpush1.bf16.msra.mxu0 0
      %2613 = vmatprep.subr.bf16.mxu0 0
      %2614 = vmatpush1.bf16.msra.mxu0 0
      %2615 = vmatprep.subr.bf16.mxu0 0
      %2616 = vmatpush1.bf16.msra.mxu0 0
      %2617 = vmatprep.subr.bf16.mxu0 0
      %2618 = vmatpush1.bf16.msra.mxu0 0
      %2619 = vmatprep.subr.bf16.mxu0 0
      %2620 = vmatpush1.bf16.msra.mxu0 0
      %2621 = vmatprep.mubr.bf16.mxu0 0
      %2622 = vmatmul.mubr.bf16.gmra.mrb[0].mxu0 %v2531
      %v2623 = vpop.f32.mrb[0].mxu0
      %v2624 = vadd.f32 %v2470, %v2623
      %v2625 = vpop.f32.mrb[0].mxu0
      %v2626 = vadd.f32 %v2474, %v2625
      %v2627 = vpop.f32.mrb[0].mxu0
      %v2628 = vadd.f32 %v2470, %v2627
      %v2629 = vpop.f32.mrb[0].mxu0
      %v2630 = vadd.f32 %v2474, %v2629
      %2631 = vdwg.mxu0
      %v2632 = vmax.f32 %v2581, 0.0
      %v2633 = vmax.f32 %v2583, 0.0
      %v2634 = vmax.f32 %v2624, 0.0
      %v2635 = vmax.f32 %v2626, 0.0
      %v2636 = vmax.f32 %v2585, 0.0
      %v2637 = vmax.f32 %v2587, 0.0
      %v2638 = vmax.f32 %v2628, 0.0
      %v2639 = vmax.f32 %v2630, 0.0
      %v2640 = vpack.c.bf16 %v2636, %v2632
      %v2641 = vpack.c.bf16 %v2637, %v2633
      %v2642 = vpack.c.bf16 %v2638, %v2634
      %v2643 = vpack.c.bf16 %v2639, %v2635
      %v2644 = vld [vmem:[%s7] sm:$0xff]
      %v2645 = vld [vmem:[%s7 + $0x8] sm:$0xff]
      %v2646 = vld [vmem:[%s7 + $0x10] sm:$0xff]
      %v2647 = vld [vmem:[%s7 + $0x18] sm:$0xf]
      %v2648 = vld [vmem:[%s7 + $0x1c] sm:$0xff]
      %v2649 = vld [vmem:[%s7 + $0x24] sm:$0xff]
      %v2650 = vld [vmem:[%s7 + $0x2c] sm:$0xff]
      %v2651 = vld [vmem:[%s7 + $0x34] sm:$0xf]
      %v2652 = vld [vmem:[%s7 + $0x38] sm:$0xff]
      %v2653 = vld [vmem:[%s7 + $0x40] sm:$0xff]
      %v2654 = vld [vmem:[%s7 + $0x48] sm:$0xff]
      %v2655 = vld [vmem:[%s7 + $0x50] sm:$0xf]
      %v2656 = vld [vmem:[%s7 + $0x54] sm:$0xff]
      %v2657 = vld [vmem:[%s7 + $0x5c] sm:$0xff]
      %v2658 = vld [vmem:[%s7 + $0x64] sm:$0xff]
      %v2659 = vld [vmem:[%s7 + $0x6c] sm:$0xf]
      %v2660 = vld [vmem:[%s7 + $0x70] sm:$0xff]
      %v2661 = vld [vmem:[%s7 + $0x78] sm:$0xff]
      %v2662 = vld [vmem:[%s7 + $0x80] sm:$0xff]
      %v2663 = vld [vmem:[%s7 + $0x88] sm:$0xf]
      %v2664 = vld [vmem:[%s7 + $0x8c] sm:$0xff]
      %v2665 = vld [vmem:[%s7 + $0x94] sm:$0xff]
      %v2666 = vld [vmem:[%s7 + $0x9c] sm:$0xff]
      %v2667 = vld [vmem:[%s7 + $0xa4] sm:$0xf]
      %v2668 = vld [vmem:[%s7 + $0xa8] sm:$0xff]
      %v2669 = vld [vmem:[%s7 + $0xb0] sm:$0xff]
      %v2670 = vld [vmem:[%s7 + $0xb8] sm:$0xff]
      %v2671 = vld [vmem:[%s7 + $0xc0] sm:$0xf]
      %v2672 = vld [vmem:[%s7 + $0xc4] sm:$0xff]
      %v2673 = vld [vmem:[%s7 + $0xcc] sm:$0xff]
      %v2674 = vld [vmem:[%s7 + $0xd4] sm:$0xff]
      %v2675 = vld [vmem:[%s7 + $0xdc] sm:$0xf]
      %v2676 = vld [vmem:[%s7 + $0xe0] sm:$0xff]
      %v2677 = vld [vmem:[%s7 + $0xe8] sm:$0xff]
      %v2678 = vld [vmem:[%s7 + $0xf0] sm:$0xff]
      %v2679 = vld [vmem:[%s7 + $0xf8] sm:$0xf]
      %v2680 = vld [vmem:[%s7 + $0xfc] sm:$0xff]
      %v2681 = vld [vmem:[%s7 + $0x104] sm:$0xff]
      %v2682 = vld [vmem:[%s7 + $0x10c] sm:$0xff]
      %v2683 = vld [vmem:[%s7 + $0x114] sm:$0xf]
      %v2684 = vld [vmem:[%s7 + $0x118] sm:$0xff]
      %v2685 = vld [vmem:[%s7 + $0x120] sm:$0xff]
      %v2686 = vld [vmem:[%s7 + $0x128] sm:$0xff]
      %v2687 = vld [vmem:[%s7 + $0x130] sm:$0xf]
      %v2688 = vld [vmem:[%s7 + $0x134] sm:$0xff]
      %v2689 = vld [vmem:[%s7 + $0x13c] sm:$0xff]
      %v2690 = vld [vmem:[%s7 + $0x144] sm:$0xff]
      %v2691 = vld [vmem:[%s7 + $0x14c] sm:$0xf]
      %v2692 = vld [vmem:[%s7 + $0x150] sm:$0xff]
      %v2693 = vld [vmem:[%s7 + $0x158] sm:$0xff]
      %v2694 = vld [vmem:[%s7 + $0x160] sm:$0xff]
      %v2695 = vld [vmem:[%s7 + $0x168] sm:$0xf]
      %v2696 = vld [vmem:[%s7 + $0x16c] sm:$0xff]
      %v2697 = vld [vmem:[%s7 + $0x174] sm:$0xff]
      %v2698 = vld [vmem:[%s7 + $0x17c] sm:$0xff]
      %v2699 = vld [vmem:[%s7 + $0x184] sm:$0xf]
      %v2700 = vld [vmem:[%s7 + $0x188] sm:$0xff]
      %v2701 = vld [vmem:[%s7 + $0x190] sm:$0xff]
      %v2702 = vld [vmem:[%s7 + $0x198] sm:$0xff]
      %v2703 = vld [vmem:[%s7 + $0x1a0] sm:$0xf]
      %v2704 = vld [vmem:[%s7 + $0x1a4] sm:$0xff]
      %v2705 = vld [vmem:[%s7 + $0x1ac] sm:$0xff]
      %v2706 = vld [vmem:[%s7 + $0x1b4] sm:$0xff]
      %v2707 = vld [vmem:[%s7 + $0x1bc] sm:$0xf]
      %v2708 = vld [vmem:[%s7 + $0x1c0] sm:$0xff]
      %v2709 = vld [vmem:[%s7 + $0x1c8] sm:$0xff]
      %v2710 = vld [vmem:[%s7 + $0x1d0] sm:$0xff]
      %v2711 = vld [vmem:[%s7 + $0x1d8] sm:$0xf]
      %v2712 = vld [vmem:[%s7 + $0x1dc] sm:$0xff]
      %v2713 = vld [vmem:[%s7 + $0x1e4] sm:$0xff]
      %v2714 = vld [vmem:[%s7 + $0x1ec] sm:$0xff]
      %v2715 = vld [vmem:[%s7 + $0x1f4] sm:$0xf]
      %v2716 = vld [vmem:[%s7 + $0x1f8] sm:$0xff]
      %v2717 = vld [vmem:[%s7 + $0x200] sm:$0xff]
      %v2718 = vld [vmem:[%s7 + $0x208] sm:$0xff]
      %v2719 = vld [vmem:[%s7 + $0x210] sm:$0xf]
      %v2720 = vld [vmem:[%s7 + $0x214] sm:$0xff]
      %v2721 = vld [vmem:[%s7 + $0x21c] sm:$0xff]
      %v2722 = vld [vmem:[%s7 + $0x224] sm:$0xff]
      %v2723 = vld [vmem:[%s7 + $0x22c] sm:$0xf]
      %v2724 = vld [vmem:[%s7 + $0x230] sm:$0xff]
      %v2725 = vld [vmem:[%s7 + $0x238] sm:$0xff]
      %v2726 = vld [vmem:[%s7 + $0x240] sm:$0xff]
      %v2727 = vld [vmem:[%s7 + $0x248] sm:$0xf]
      %v2728 = vld [vmem:[%s7 + $0x24c] sm:$0xff]
      %v2729 = vld [vmem:[%s7 + $0x254] sm:$0xff]
      %v2730 = vld [vmem:[%s7 + $0x25c] sm:$0xff]
      %v2731 = vld [vmem:[%s7 + $0x264] sm:$0xf]
      %v2732 = vld [vmem:[%s7 + $0x268] sm:$0xff]
      %v2733 = vld [vmem:[%s7 + $0x270] sm:$0xff]
      %v2734 = vld [vmem:[%s7 + $0x278] sm:$0xff]
      %v2735 = vld [vmem:[%s7 + $0x280] sm:$0xf]
      %v2736 = vld [vmem:[%s7 + $0x284] sm:$0xff]
      %v2737 = vld [vmem:[%s7 + $0x28c] sm:$0xff]
      %v2738 = vld [vmem:[%s7 + $0x294] sm:$0xff]
      %v2739 = vld [vmem:[%s7 + $0x29c] sm:$0xf]
      %v2740 = vld [vmem:[%s7 + $0x2a0] sm:$0xff]
      %v2741 = vld [vmem:[%s7 + $0x2a8] sm:$0xff]
      %v2742 = vld [vmem:[%s7 + $0x2b0] sm:$0xff]
      %v2743 = vld [vmem:[%s7 + $0x2b8] sm:$0xf]
      %v2744 = vld [vmem:[%s7 + $0x2bc] sm:$0xff]
      %v2745 = vld [vmem:[%s7 + $0x2c4] sm:$0xff]
      %v2746 = vld [vmem:[%s7 + $0x2cc] sm:$0xff]
      %v2747 = vld [vmem:[%s7 + $0x2d4] sm:$0xf]
      %v2748 = vld [vmem:[%s7 + $0x2d8] sm:$0xff]
      %v2749 = vld [vmem:[%s7 + $0x2e0] sm:$0xff]
      %v2750 = vld [vmem:[%s7 + $0x2e8] sm:$0xff]
      %v2751 = vld [vmem:[%s7 + $0x2f0] sm:$0xf]
      %v2752 = vld [vmem:[%s7 + $0x2f4] sm:$0xff]
      %v2753 = vld [vmem:[%s7 + $0x2fc] sm:$0xff]
      %v2754 = vld [vmem:[%s7 + $0x304] sm:$0xff]
      %v2755 = vld [vmem:[%s7 + $0x30c] sm:$0xf]
      %v2756 = vld [vmem:[%s7 + $0x310] sm:$0xff]
      %v2757 = vld [vmem:[%s7 + $0x318] sm:$0xff]
      %v2758 = vld [vmem:[%s7 + $0x320] sm:$0xff]
      %v2759 = vld [vmem:[%s7 + $0x328] sm:$0xf]
      %v2760 = vld [vmem:[%s7 + $0x32c] sm:$0xff]
      %v2761 = vld [vmem:[%s7 + $0x334] sm:$0xff]
      %v2762 = vld [vmem:[%s7 + $0x33c] sm:$0xff]
      %v2763 = vld [vmem:[%s7 + $0x344] sm:$0xf]
      %v2764 = vld [vmem:[%s7 + $0x348] sm:$0xff]
      %v2765 = vld [vmem:[%s7 + $0x350] sm:$0xff]
      %v2766 = vld [vmem:[%s7 + $0x358] sm:$0xff]
      %v2767 = vld [vmem:[%s7 + $0x360] sm:$0xf]
      %v2768 = vld [vmem:[%s7 + $0x364] sm:$0xff]
      %v2769 = vld [vmem:[%s7 + $0x36c] sm:$0xff]
      %v2770 = vld [vmem:[%s7 + $0x374] sm:$0xff]
      %v2771 = vld [vmem:[%s7 + $0x37c] sm:$0xf]
      %v2772 = vld [vmem:[%s7 + $0x380] sm:$0xff]
      %v2773 = vld [vmem:[%s7 + $0x388] sm:$0xff]
      %v2774 = vld [vmem:[%s7 + $0x390] sm:$0xff]
      %v2775 = vld [vmem:[%s7 + $0x398] sm:$0xf]
      %v2776 = vld [vmem:[%s7 + $0x39c] sm:$0xff]
      %v2777 = vld [vmem:[%s7 + $0x3a4] sm:$0xff]
      %v2778 = vld [vmem:[%s7 + $0x3ac] sm:$0xff]
      %v2779 = vld [vmem:[%s7 + $0x3b4] sm:$0xf]
      %v2780 = vld [vmem:[%s7 + $0x3b8] sm:$0xff]
      %v2781 = vld [vmem:[%s7 + $0x3c0] sm:$0xff]
      %v2782 = vld [vmem:[%s7 + $0x3c8] sm:$0xff]
      %v2783 = vld [vmem:[%s7 + $0x3d0] sm:$0xf]
      %v2784 = vld [vmem:[%s7 + $0x3d4] sm:$0xff]
      %v2785 = vld [vmem:[%s7 + $0x3dc] sm:$0xff]
      %v2786 = vld [vmem:[%s7 + $0x3e4] sm:$0xff]
      %v2787 = vld [vmem:[%s7 + $0x3ec] sm:$0xf]
      %v2788 = vld [vmem:[%s7 + $0x3f0] sm:$0xff]
      %v2789 = vld [vmem:[%s7 + $0x3f8] sm:$0xff]
      %v2790 = vld [vmem:[%s7 + $0x400] sm:$0xff]
      %v2791 = vld [vmem:[%s7 + $0x408] sm:$0xf]
      %v2792 = vld [vmem:[%s7 + $0x40c] sm:$0xff]
      %v2793 = vld [vmem:[%s7 + $0x414] sm:$0xff]
      %v2794 = vld [vmem:[%s7 + $0x41c] sm:$0xff]
      %v2795 = vld [vmem:[%s7 + $0x424] sm:$0xf]
      %v2796 = vld [vmem:[%s7 + $0x428] sm:$0xff]
      %v2797 = vld [vmem:[%s7 + $0x430] sm:$0xff]
      %v2798 = vld [vmem:[%s7 + $0x438] sm:$0xff]
      %v2799 = vld [vmem:[%s7 + $0x440] sm:$0xf]
      %v2800 = vld [vmem:[%s7 + $0x444] sm:$0xff]
      %v2801 = vld [vmem:[%s7 + $0x44c] sm:$0xff]
      %v2802 = vld [vmem:[%s7 + $0x454] sm:$0xff]
      %v2803 = vld [vmem:[%s7 + $0x45c] sm:$0xf]
      %v2804 = vld [vmem:[%s7 + $0x460] sm:$0xff]
      %v2805 = vld [vmem:[%s7 + $0x468] sm:$0xff]
      %v2806 = vld [vmem:[%s7 + $0x470] sm:$0xff]
      %v2807 = vld [vmem:[%s7 + $0x478] sm:$0xf]
      %v2808 = vld [vmem:[%s7 + $0x47c] sm:$0xff]
      %v2809 = vld [vmem:[%s7 + $0x484] sm:$0xff]
      %v2810 = vld [vmem:[%s7 + $0x48c] sm:$0xff]
      %v2811 = vld [vmem:[%s7 + $0x494] sm:$0xf]
      %v2812 = vld [vmem:[%s7 + $0x498] sm:$0xff]
      %v2813 = vld [vmem:[%s7 + $0x4a0] sm:$0xff]
      %v2814 = vld [vmem:[%s7 + $0x4a8] sm:$0xff]
      %v2815 = vld [vmem:[%s7 + $0x4b0] sm:$0xf]
      %v2816 = vld [vmem:[%s7 + $0x4b4] sm:$0xff]
      %v2817 = vld [vmem:[%s7 + $0x4bc] sm:$0xff]
      %v2818 = vld [vmem:[%s7 + $0x4c4] sm:$0xff]
      %v2819 = vld [vmem:[%s7 + $0x4cc] sm:$0xf]
      %v2820 = vld [vmem:[%s7 + $0x4d0] sm:$0xff]
      %v2821 = vld [vmem:[%s7 + $0x4d8] sm:$0xff]
      %v2822 = vld [vmem:[%s7 + $0x4e0] sm:$0xff]
      %v2823 = vld [vmem:[%s7 + $0x4e8] sm:$0xf]
      %v2824 = vld [vmem:[%s7 + $0x4ec] sm:$0xff]
      %v2825 = vld [vmem:[%s7 + $0x4f4] sm:$0xff]
      %v2826 = vld [vmem:[%s7 + $0x4fc] sm:$0xff]
      %v2827 = vld [vmem:[%s7 + $0x504] sm:$0xf]
      %v2828 = vld [vmem:[%s7 + $0x508] sm:$0xff]
      %v2829 = vld [vmem:[%s7 + $0x510] sm:$0xff]
      %v2830 = vld [vmem:[%s7 + $0x518] sm:$0xff]
      %v2831 = vld [vmem:[%s7 + $0x520] sm:$0xf]
      %v2832 = vld [vmem:[%s7 + $0x524] sm:$0xff]
      %v2833 = vld [vmem:[%s7 + $0x52c] sm:$0xff]
      %v2834 = vld [vmem:[%s7 + $0x534] sm:$0xff]
      %v2835 = vld [vmem:[%s7 + $0x53c] sm:$0xf]
      %v2836 = vld [vmem:[%s7 + $0x540] sm:$0xff]
      %v2837 = vld [vmem:[%s7 + $0x548] sm:$0xff]
      %v2838 = vld [vmem:[%s7 + $0x550] sm:$0xff]
      %v2839 = vld [vmem:[%s7 + $0x558] sm:$0xf]
      %v2840 = vld [vmem:[%s7 + $0x55c] sm:$0xff]
      %v2841 = vld [vmem:[%s7 + $0x564] sm:$0xff]
      %v2842 = vld [vmem:[%s7 + $0x56c] sm:$0xff]
      %v2843 = vld [vmem:[%s7 + $0x574] sm:$0xf]
      %v2844 = vld [vmem:[%s8] sm:$0x7f]
      %v2846 = vlaneseq
      %v2847 = vshrl.u32 %v2846, 7
      %v2848 = vsub.s32 0, %v2847
      %v2849 = vrot.slane %v2844, %v2848
      %v2850 = vlaneseq
      %v2851 = vshrl.u32 %v2850, 7
      %v2852 = vsub.s32 1, %v2851
      %v2853 = vrot.slane %v2844, %v2852
      %v2854 = vlaneseq
      %v2855 = vshrl.u32 %v2854, 7
      %v2856 = vsub.s32 2, %v2855
      %v2857 = vrot.slane %v2844, %v2856
      %v2858 = vlaneseq
      %v2859 = vshrl.u32 %v2858, 7
      %v2860 = vsub.s32 3, %v2859
      %v2861 = vrot.slane %v2844, %v2860
      %v2862 = vlaneseq
      %v2863 = vshrl.u32 %v2862, 7
      %v2864 = vsub.s32 4, %v2863
      %v2865 = vrot.slane %v2844, %v2864
      %v2866 = vlaneseq
      %v2867 = vshrl.u32 %v2866, 7
      %v2868 = vsub.s32 5, %v2867
      %v2869 = vrot.slane %v2844, %v2868
      %v2870 = vlaneseq
      %v2871 = vshrl.u32 %v2870, 7
      %v2872 = vsub.s32 6, %v2871
      %v2873 = vrot.slane %v2844, %v2872
      %v3081 = vunpack.c.l.b16 %v2644
      %v3082 = vunpack.c.h.b16 %v2644
      %v3083 = vunpack.c.l.b16 %v2645
      %v3084 = vunpack.c.h.b16 %v2645
      %v3085 = vunpack.c.l.b16 %v2646
      %v3086 = vunpack.c.h.b16 %v2646
      %v3087 = vunpack.c.l.b16 %v2647
      %v3088 = vunpack.c.l.b16 %v2648
      %v3089 = vunpack.c.h.b16 %v2648
      %v3090 = vunpack.c.l.b16 %v2649
      %v3091 = vunpack.c.h.b16 %v2649
      %v3092 = vunpack.c.l.b16 %v2650
      %v3093 = vunpack.c.h.b16 %v2650
      %v3094 = vunpack.c.l.b16 %v2651
      %v3095 = vunpack.c.l.b16 %v2652
      %v3096 = vunpack.c.h.b16 %v2652
      %v3097 = vunpack.c.l.b16 %v2653
      %v3098 = vunpack.c.h.b16 %v2653
      %v3099 = vunpack.c.l.b16 %v2654
      %v3100 = vunpack.c.h.b16 %v2654
      %v3101 = vunpack.c.l.b16 %v2655
      %v3102 = vunpack.c.l.b16 %v2656
      %v3103 = vunpack.c.h.b16 %v2656
      %v3104 = vunpack.c.l.b16 %v2657
      %v3105 = vunpack.c.h.b16 %v2657
      %v3106 = vunpack.c.l.b16 %v2658
      %v3107 = vunpack.c.h.b16 %v2658
      %v3108 = vunpack.c.l.b16 %v2659
      %v3109 = vunpack.c.l.b16 %v2660
      %v3110 = vunpack.c.h.b16 %v2660
      %v3111 = vunpack.c.l.b16 %v2661
      %v3112 = vunpack.c.h.b16 %v2661
      %v3113 = vunpack.c.l.b16 %v2662
      %v3114 = vunpack.c.h.b16 %v2662
      %v3115 = vunpack.c.l.b16 %v2663
      %v3116 = vunpack.c.l.b16 %v2664
      %v3117 = vunpack.c.h.b16 %v2664
      %v3118 = vunpack.c.l.b16 %v2665
      %v3119 = vunpack.c.h.b16 %v2665
      %v3120 = vunpack.c.l.b16 %v2666
      %v3121 = vunpack.c.h.b16 %v2666
      %v3122 = vunpack.c.l.b16 %v2667
      %v3123 = vunpack.c.l.b16 %v2668
      %v3124 = vunpack.c.h.b16 %v2668
      %v3125 = vunpack.c.l.b16 %v2669
      %v3126 = vunpack.c.h.b16 %v2669
      %v3127 = vunpack.c.l.b16 %v2670
      %v3128 = vunpack.c.h.b16 %v2670
      %v3129 = vunpack.c.l.b16 %v2671
      %v3130 = vunpack.c.l.b16 %v2672
      %v3131 = vunpack.c.h.b16 %v2672
      %v3132 = vunpack.c.l.b16 %v2673
      %v3133 = vunpack.c.h.b16 %v2673
      %v3134 = vunpack.c.l.b16 %v2674
      %v3135 = vunpack.c.h.b16 %v2674
      %v3136 = vunpack.c.l.b16 %v2675
      %v3137 = vunpack.c.l.b16 %v2676
      %v3138 = vunpack.c.h.b16 %v2676
      %v3139 = vunpack.c.l.b16 %v2677
      %v3140 = vunpack.c.h.b16 %v2677
      %v3141 = vunpack.c.l.b16 %v2678
      %v3142 = vunpack.c.h.b16 %v2678
      %v3143 = vunpack.c.l.b16 %v2679
      %v3144 = vunpack.c.l.b16 %v2680
      %v3145 = vunpack.c.h.b16 %v2680
      %v3146 = vunpack.c.l.b16 %v2681
      %v3147 = vunpack.c.h.b16 %v2681
      %v3148 = vunpack.c.l.b16 %v2682
      %v3149 = vunpack.c.h.b16 %v2682
      %v3150 = vunpack.c.l.b16 %v2683
      %v3151 = vunpack.c.l.b16 %v2684
      %v3152 = vunpack.c.h.b16 %v2684
      %v3153 = vunpack.c.l.b16 %v2685
      %v3154 = vunpack.c.h.b16 %v2685
      %v3155 = vunpack.c.l.b16 %v2686
      %v3156 = vunpack.c.h.b16 %v2686
      %v3157 = vunpack.c.l.b16 %v2687
      %v3158 = vunpack.c.l.b16 %v2688
      %v3159 = vunpack.c.h.b16 %v2688
      %v3160 = vunpack.c.l.b16 %v2689
      %v3161 = vunpack.c.h.b16 %v2689
      %v3162 = vunpack.c.l.b16 %v2690
      %v3163 = vunpack.c.h.b16 %v2690
      %v3164 = vunpack.c.l.b16 %v2691
      %v3165 = vunpack.c.l.b16 %v2692
      %v3166 = vunpack.c.h.b16 %v2692
      %v3167 = vunpack.c.l.b16 %v2693
      %v3168 = vunpack.c.h.b16 %v2693
      %v3169 = vunpack.c.l.b16 %v2694
      %v3170 = vunpack.c.h.b16 %v2694
      %v3171 = vunpack.c.l.b16 %v2695
      %v3172 = vunpack.c.l.b16 %v2696
      %v3173 = vunpack.c.h.b16 %v2696
      %v3174 = vunpack.c.l.b16 %v2697
      %v3175 = vunpack.c.h.b16 %v2697
      %v3176 = vunpack.c.l.b16 %v2698
      %v3177 = vunpack.c.h.b16 %v2698
      %v3178 = vunpack.c.l.b16 %v2699
      %v3179 = vunpack.c.l.b16 %v2700
      %v3180 = vunpack.c.h.b16 %v2700
      %v3181 = vunpack.c.l.b16 %v2701
      %v3182 = vunpack.c.h.b16 %v2701
      %v3183 = vunpack.c.l.b16 %v2702
      %v3184 = vunpack.c.h.b16 %v2702
      %v3185 = vunpack.c.l.b16 %v2703
      %v3186 = vunpack.c.l.b16 %v2704
      %v3187 = vunpack.c.h.b16 %v2704
      %v3188 = vunpack.c.l.b16 %v2705
      %v3189 = vunpack.c.h.b16 %v2705
      %v3190 = vunpack.c.l.b16 %v2706
      %v3191 = vunpack.c.h.b16 %v2706
      %v3192 = vunpack.c.l.b16 %v2707
      %v3193 = vunpack.c.l.b16 %v2708
      %v3194 = vunpack.c.h.b16 %v2708
      %v3195 = vunpack.c.l.b16 %v2709
      %v3196 = vunpack.c.h.b16 %v2709
      %v3197 = vunpack.c.l.b16 %v2710
      %v3198 = vunpack.c.h.b16 %v2710
      %v3199 = vunpack.c.l.b16 %v2711
      %v3200 = vunpack.c.l.b16 %v2712
      %v3201 = vunpack.c.h.b16 %v2712
      %v3202 = vunpack.c.l.b16 %v2713
      %v3203 = vunpack.c.h.b16 %v2713
      %v3204 = vunpack.c.l.b16 %v2714
      %v3205 = vunpack.c.h.b16 %v2714
      %v3206 = vunpack.c.l.b16 %v2715
      %v3207 = vunpack.c.l.b16 %v2716
      %v3208 = vunpack.c.h.b16 %v2716
      %v3209 = vunpack.c.l.b16 %v2717
      %v3210 = vunpack.c.h.b16 %v2717
      %v3211 = vunpack.c.l.b16 %v2718
      %v3212 = vunpack.c.h.b16 %v2718
      %v3213 = vunpack.c.l.b16 %v2719
      %v3214 = vunpack.c.l.b16 %v2720
      %v3215 = vunpack.c.h.b16 %v2720
      %v3216 = vunpack.c.l.b16 %v2721
      %v3217 = vunpack.c.h.b16 %v2721
      %v3218 = vunpack.c.l.b16 %v2722
      %v3219 = vunpack.c.h.b16 %v2722
      %v3220 = vunpack.c.l.b16 %v2723
      %v3221 = vunpack.c.l.b16 %v2724
      %v3222 = vunpack.c.h.b16 %v2724
      %v3223 = vunpack.c.l.b16 %v2725
      %v3224 = vunpack.c.h.b16 %v2725
      %v3225 = vunpack.c.l.b16 %v2726
      %v3226 = vunpack.c.h.b16 %v2726
      %v3227 = vunpack.c.l.b16 %v2727
      %v3228 = vunpack.c.l.b16 %v2728
      %v3229 = vunpack.c.h.b16 %v2728
      %v3230 = vunpack.c.l.b16 %v2729
      %v3231 = vunpack.c.h.b16 %v2729
      %v3232 = vunpack.c.l.b16 %v2730
      %v3233 = vunpack.c.h.b16 %v2730
      %v3234 = vunpack.c.l.b16 %v2731
      %v3235 = vunpack.c.l.b16 %v2732
      %v3236 = vunpack.c.h.b16 %v2732
      %v3237 = vunpack.c.l.b16 %v2733
      %v3238 = vunpack.c.h.b16 %v2733
      %v3239 = vunpack.c.l.b16 %v2734
      %v3240 = vunpack.c.h.b16 %v2734
      %v3241 = vunpack.c.l.b16 %v2735
      %v3242 = vunpack.c.l.b16 %v2736
      %v3243 = vunpack.c.h.b16 %v2736
      %v3244 = vunpack.c.l.b16 %v2737
      %v3245 = vunpack.c.h.b16 %v2737
      %v3246 = vunpack.c.l.b16 %v2738
      %v3247 = vunpack.c.h.b16 %v2738
      %v3248 = vunpack.c.l.b16 %v2739
      %v3249 = vunpack.c.l.b16 %v2740
      %v3250 = vunpack.c.h.b16 %v2740
      %v3251 = vunpack.c.l.b16 %v2741
      %v3252 = vunpack.c.h.b16 %v2741
      %v3253 = vunpack.c.l.b16 %v2742
      %v3254 = vunpack.c.h.b16 %v2742
      %v3255 = vunpack.c.l.b16 %v2743
      %v3256 = vunpack.c.l.b16 %v2744
      %v3257 = vunpack.c.h.b16 %v2744
      %v3258 = vunpack.c.l.b16 %v2745
      %v3259 = vunpack.c.h.b16 %v2745
      %v3260 = vunpack.c.l.b16 %v2746
      %v3261 = vunpack.c.h.b16 %v2746
      %v3262 = vunpack.c.l.b16 %v2747
      %v3263 = vunpack.c.l.b16 %v2748
      %v3264 = vunpack.c.h.b16 %v2748
      %v3265 = vunpack.c.l.b16 %v2749
      %v3266 = vunpack.c.h.b16 %v2749
      %v3267 = vunpack.c.l.b16 %v2750
      %v3268 = vunpack.c.h.b16 %v2750
      %v3269 = vunpack.c.l.b16 %v2751
      %v3270 = vunpack.c.l.b16 %v2752
      %v3271 = vunpack.c.h.b16 %v2752
      %v3272 = vunpack.c.l.b16 %v2753
      %v3273 = vunpack.c.h.b16 %v2753
      %v3274 = vunpack.c.l.b16 %v2754
      %v3275 = vunpack.c.h.b16 %v2754
      %v3276 = vunpack.c.l.b16 %v2755
      %v3277 = vunpack.c.l.b16 %v2756
      %v3278 = vunpack.c.h.b16 %v2756
      %v3279 = vunpack.c.l.b16 %v2757
      %v3280 = vunpack.c.h.b16 %v2757
      %v3281 = vunpack.c.l.b16 %v2758
      %v3282 = vunpack.c.h.b16 %v2758
      %v3283 = vunpack.c.l.b16 %v2759
      %v3284 = vunpack.c.l.b16 %v2760
      %v3285 = vunpack.c.h.b16 %v2760
      %v3286 = vunpack.c.l.b16 %v2761
      %v3287 = vunpack.c.h.b16 %v2761
      %v3288 = vunpack.c.l.b16 %v2762
      %v3289 = vunpack.c.h.b16 %v2762
      %v3290 = vunpack.c.l.b16 %v2763
      %v3291 = vunpack.c.l.b16 %v2764
      %v3292 = vunpack.c.h.b16 %v2764
      %v3293 = vunpack.c.l.b16 %v2765
      %v3294 = vunpack.c.h.b16 %v2765
      %v3295 = vunpack.c.l.b16 %v2766
      %v3296 = vunpack.c.h.b16 %v2766
      %v3297 = vunpack.c.l.b16 %v2767
      %v3298 = vunpack.c.l.b16 %v2768
      %v3299 = vunpack.c.h.b16 %v2768
      %v3300 = vunpack.c.l.b16 %v2769
      %v3301 = vunpack.c.h.b16 %v2769
      %v3302 = vunpack.c.l.b16 %v2770
      %v3303 = vunpack.c.h.b16 %v2770
      %v3304 = vunpack.c.l.b16 %v2771
      %v3305 = vunpack.c.l.b16 %v2772
      %v3306 = vunpack.c.h.b16 %v2772
      %v3307 = vunpack.c.l.b16 %v2773
      %v3308 = vunpack.c.h.b16 %v2773
      %v3309 = vunpack.c.l.b16 %v2774
      %v3310 = vunpack.c.h.b16 %v2774
      %v3311 = vunpack.c.l.b16 %v2775
      %v3312 = vunpack.c.l.b16 %v2776
      %v3313 = vunpack.c.h.b16 %v2776
      %v3314 = vunpack.c.l.b16 %v2777
      %v3315 = vunpack.c.h.b16 %v2777
      %v3316 = vunpack.c.l.b16 %v2778
      %v3317 = vunpack.c.h.b16 %v2778
      %v3318 = vunpack.c.l.b16 %v2779
      %v3319 = vunpack.c.l.b16 %v2780
      %v3320 = vunpack.c.h.b16 %v2780
      %v3321 = vunpack.c.l.b16 %v2781
      %v3322 = vunpack.c.h.b16 %v2781
      %v3323 = vunpack.c.l.b16 %v2782
      %v3324 = vunpack.c.h.b16 %v2782
      %v3325 = vunpack.c.l.b16 %v2783
      %v3326 = vunpack.c.l.b16 %v2784
      %v3327 = vunpack.c.h.b16 %v2784
      %v3328 = vunpack.c.l.b16 %v2785
      %v3329 = vunpack.c.h.b16 %v2785
      %v3330 = vunpack.c.l.b16 %v2786
      %v3331 = vunpack.c.h.b16 %v2786
      %v3332 = vunpack.c.l.b16 %v2787
      %v3333 = vunpack.c.l.b16 %v2788
      %v3334 = vunpack.c.h.b16 %v2788
      %v3335 = vunpack.c.l.b16 %v2789
      %v3336 = vunpack.c.h.b16 %v2789
      %v3337 = vunpack.c.l.b16 %v2790
      %v3338 = vunpack.c.h.b16 %v2790
      %v3339 = vunpack.c.l.b16 %v2791
      %v3340 = vunpack.c.l.b16 %v2792
      %v3341 = vunpack.c.h.b16 %v2792
      %v3342 = vunpack.c.l.b16 %v2793
      %v3343 = vunpack.c.h.b16 %v2793
      %v3344 = vunpack.c.l.b16 %v2794
      %v3345 = vunpack.c.h.b16 %v2794
      %v3346 = vunpack.c.l.b16 %v2795
      %v3347 = vunpack.c.l.b16 %v2796
      %v3348 = vunpack.c.h.b16 %v2796
      %v3349 = vunpack.c.l.b16 %v2797
      %v3350 = vunpack.c.h.b16 %v2797
      %v3351 = vunpack.c.l.b16 %v2798
      %v3352 = vunpack.c.h.b16 %v2798
      %v3353 = vunpack.c.l.b16 %v2799
      %v3354 = vunpack.c.l.b16 %v2800
      %v3355 = vunpack.c.h.b16 %v2800
      %v3356 = vunpack.c.l.b16 %v2801
      %v3357 = vunpack.c.h.b16 %v2801
      %v3358 = vunpack.c.l.b16 %v2802
      %v3359 = vunpack.c.h.b16 %v2802
      %v3360 = vunpack.c.l.b16 %v2803
      %v3361 = vunpack.c.l.b16 %v2804
      %v3362 = vunpack.c.h.b16 %v2804
      %v3363 = vunpack.c.l.b16 %v2805
      %v3364 = vunpack.c.h.b16 %v2805
      %v3365 = vunpack.c.l.b16 %v2806
      %v3366 = vunpack.c.h.b16 %v2806
      %v3367 = vunpack.c.l.b16 %v2807
      %v3368 = vunpack.c.l.b16 %v2808
      %v3369 = vunpack.c.h.b16 %v2808
      %v3370 = vunpack.c.l.b16 %v2809
      %v3371 = vunpack.c.h.b16 %v2809
      %v3372 = vunpack.c.l.b16 %v2810
      %v3373 = vunpack.c.h.b16 %v2810
      %v3374 = vunpack.c.l.b16 %v2811
      %v3375 = vunpack.c.l.b16 %v2812
      %v3376 = vunpack.c.h.b16 %v2812
      %v3377 = vunpack.c.l.b16 %v2813
      %v3378 = vunpack.c.h.b16 %v2813
      %v3379 = vunpack.c.l.b16 %v2814
      %v3380 = vunpack.c.h.b16 %v2814
      %v3381 = vunpack.c.l.b16 %v2815
      %v3382 = vunpack.c.l.b16 %v2816
      %v3383 = vunpack.c.h.b16 %v2816
      %v3384 = vunpack.c.l.b16 %v2817
      %v3385 = vunpack.c.h.b16 %v2817
      %v3386 = vunpack.c.l.b16 %v2818
      %v3387 = vunpack.c.h.b16 %v2818
      %v3388 = vunpack.c.l.b16 %v2819
      %v3389 = vunpack.c.l.b16 %v2820
      %v3390 = vunpack.c.h.b16 %v2820
      %v3391 = vunpack.c.l.b16 %v2821
      %v3392 = vunpack.c.h.b16 %v2821
      %v3393 = vunpack.c.l.b16 %v2822
      %v3394 = vunpack.c.h.b16 %v2822
      %v3395 = vunpack.c.l.b16 %v2823
      %v3396 = vunpack.c.l.b16 %v2824
      %v3397 = vunpack.c.h.b16 %v2824
      %v3398 = vunpack.c.l.b16 %v2825
      %v3399 = vunpack.c.h.b16 %v2825
      %v3400 = vunpack.c.l.b16 %v2826
      %v3401 = vunpack.c.h.b16 %v2826
      %v3402 = vunpack.c.l.b16 %v2827
      %v3403 = vunpack.c.l.b16 %v2828
      %v3404 = vunpack.c.h.b16 %v2828
      %v3405 = vunpack.c.l.b16 %v2829
      %v3406 = vunpack.c.h.b16 %v2829
      %v3407 = vunpack.c.l.b16 %v2830
      %v3408 = vunpack.c.h.b16 %v2830
      %v3409 = vunpack.c.l.b16 %v2831
      %v3410 = vunpack.c.l.b16 %v2832
      %v3411 = vunpack.c.h.b16 %v2832
      %v3412 = vunpack.c.l.b16 %v2833
      %v3413 = vunpack.c.h.b16 %v2833
      %v3414 = vunpack.c.l.b16 %v2834
      %v3415 = vunpack.c.h.b16 %v2834
      %v3416 = vunpack.c.l.b16 %v2835
      %v3417 = vunpack.c.l.b16 %v2836
      %v3418 = vunpack.c.h.b16 %v2836
      %v3419 = vunpack.c.l.b16 %v2837
      %v3420 = vunpack.c.h.b16 %v2837
      %v3421 = vunpack.c.l.b16 %v2838
      %v3422 = vunpack.c.h.b16 %v2838
      %v3423 = vunpack.c.l.b16 %v2839
      %v3424 = vunpack.c.l.b16 %v2840
      %v3425 = vunpack.c.h.b16 %v2840
      %v3426 = vunpack.c.l.b16 %v2841
      %v3427 = vunpack.c.h.b16 %v2841
      %v3428 = vunpack.c.l.b16 %v2842
      %v3429 = vunpack.c.h.b16 %v2842
      %v3430 = vunpack.c.l.b16 %v2843
      %v3431 = vpack.c.b16 %v3088, %v3081
      %v3432 = vpack.c.b16 %v3089, %v3082
      %v3433 = vpack.c.b16 %v3090, %v3083
      %v3434 = vpack.c.b16 %v3091, %v3084
      %v3435 = vpack.c.b16 %v3092, %v3085
      %v3436 = vpack.c.b16 %v3093, %v3086
      %v3437 = vpack.c.b16 %v3094, %v3087
      %v3438 = vpack.c.b16 %v3102, %v3095
      %v3439 = vpack.c.b16 %v3103, %v3096
      %v3440 = vpack.c.b16 %v3104, %v3097
      %v3441 = vpack.c.b16 %v3105, %v3098
      %v3442 = vpack.c.b16 %v3106, %v3099
      %v3443 = vpack.c.b16 %v3107, %v3100
      %v3444 = vpack.c.b16 %v3108, %v3101
      %v3445 = vpack.c.b16 %v3116, %v3109
      %v3446 = vpack.c.b16 %v3117, %v3110
      %v3447 = vpack.c.b16 %v3118, %v3111
      %v3448 = vpack.c.b16 %v3119, %v3112
      %v3449 = vpack.c.b16 %v3120, %v3113
      %v3450 = vpack.c.b16 %v3121, %v3114
      %v3451 = vpack.c.b16 %v3122, %v3115
      %v3452 = vpack.c.b16 %v3130, %v3123
      %v3453 = vpack.c.b16 %v3131, %v3124
      %v3454 = vpack.c.b16 %v3132, %v3125
      %v3455 = vpack.c.b16 %v3133, %v3126
      %v3456 = vpack.c.b16 %v3134, %v3127
      %v3457 = vpack.c.b16 %v3135, %v3128
      %v3458 = vpack.c.b16 %v3136, %v3129
      %v3459 = vpack.c.b16 %v3144, %v3137
      %v3460 = vpack.c.b16 %v3145, %v3138
      %v3461 = vpack.c.b16 %v3146, %v3139
      %v3462 = vpack.c.b16 %v3147, %v3140
      %v3463 = vpack.c.b16 %v3148, %v3141
      %v3464 = vpack.c.b16 %v3149, %v3142
      %v3465 = vpack.c.b16 %v3150, %v3143
      %v3466 = vpack.c.b16 %v3158, %v3151
      %v3467 = vpack.c.b16 %v3159, %v3152
      %v3468 = vpack.c.b16 %v3160, %v3153
      %v3469 = vpack.c.b16 %v3161, %v3154
      %v3470 = vpack.c.b16 %v3162, %v3155
      %v3471 = vpack.c.b16 %v3163, %v3156
      %v3472 = vpack.c.b16 %v3164, %v3157
      %v3473 = vpack.c.b16 %v3172, %v3165
      %v3474 = vpack.c.b16 %v3173, %v3166
      %v3475 = vpack.c.b16 %v3174, %v3167
      %v3476 = vpack.c.b16 %v3175, %v3168
      %v3477 = vpack.c.b16 %v3176, %v3169
      %v3478 = vpack.c.b16 %v3177, %v3170
      %v3479 = vpack.c.b16 %v3178, %v3171
      %v3480 = vpack.c.b16 %v3186, %v3179
      %v3481 = vpack.c.b16 %v3187, %v3180
      %v3482 = vpack.c.b16 %v3188, %v3181
      %v3483 = vpack.c.b16 %v3189, %v3182
      %v3484 = vpack.c.b16 %v3190, %v3183
      %v3485 = vpack.c.b16 %v3191, %v3184
      %v3486 = vpack.c.b16 %v3192, %v3185
      %v3487 = vpack.c.b16 %v3200, %v3193
      %v3488 = vpack.c.b16 %v3201, %v3194
      %v3489 = vpack.c.b16 %v3202, %v3195
      %v3490 = vpack.c.b16 %v3203, %v3196
      %v3491 = vpack.c.b16 %v3204, %v3197
      %v3492 = vpack.c.b16 %v3205, %v3198
      %v3493 = vpack.c.b16 %v3206, %v3199
      %v3494 = vpack.c.b16 %v3214, %v3207
      %v3495 = vpack.c.b16 %v3215, %v3208
      %v3496 = vpack.c.b16 %v3216, %v3209
      %v3497 = vpack.c.b16 %v3217, %v3210
      %v3498 = vpack.c.b16 %v3218, %v3211
      %v3499 = vpack.c.b16 %v3219, %v3212
      %v3500 = vpack.c.b16 %v3220, %v3213
      %v3501 = vpack.c.b16 %v3228, %v3221
      %v3502 = vpack.c.b16 %v3229, %v3222
      %v3503 = vpack.c.b16 %v3230, %v3223
      %v3504 = vpack.c.b16 %v3231, %v3224
      %v3505 = vpack.c.b16 %v3232, %v3225
      %v3506 = vpack.c.b16 %v3233, %v3226
      %v3507 = vpack.c.b16 %v3234, %v3227
      %v3508 = vpack.c.b16 %v3242, %v3235
      %v3509 = vpack.c.b16 %v3243, %v3236
      %v3510 = vpack.c.b16 %v3244, %v3237
      %v3511 = vpack.c.b16 %v3245, %v3238
      %v3512 = vpack.c.b16 %v3246, %v3239
      %v3513 = vpack.c.b16 %v3247, %v3240
      %v3514 = vpack.c.b16 %v3248, %v3241
      %v3515 = vpack.c.b16 %v3256, %v3249
      %v3516 = vpack.c.b16 %v3257, %v3250
      %v3517 = vpack.c.b16 %v3258, %v3251
      %v3518 = vpack.c.b16 %v3259, %v3252
      %v3519 = vpack.c.b16 %v3260, %v3253
      %v3520 = vpack.c.b16 %v3261, %v3254
      %v3521 = vpack.c.b16 %v3262, %v3255
      %v3522 = vpack.c.b16 %v3270, %v3263
      %v3523 = vpack.c.b16 %v3271, %v3264
      %v3524 = vpack.c.b16 %v3272, %v3265
      %v3525 = vpack.c.b16 %v3273, %v3266
      %v3526 = vpack.c.b16 %v3274, %v3267
      %v3527 = vpack.c.b16 %v3275, %v3268
      %v3528 = vpack.c.b16 %v3276, %v3269
      %v3529 = vpack.c.b16 %v3284, %v3277
      %v3530 = vpack.c.b16 %v3285, %v3278
      %v3531 = vpack.c.b16 %v3286, %v3279
      %v3532 = vpack.c.b16 %v3287, %v3280
      %v3533 = vpack.c.b16 %v3288, %v3281
      %v3534 = vpack.c.b16 %v3289, %v3282
      %v3535 = vpack.c.b16 %v3290, %v3283
      %v3536 = vpack.c.b16 %v3298, %v3291
      %v3537 = vpack.c.b16 %v3299, %v3292
      %v3538 = vpack.c.b16 %v3300, %v3293
      %v3539 = vpack.c.b16 %v3301, %v3294
      %v3540 = vpack.c.b16 %v3302, %v3295
      %v3541 = vpack.c.b16 %v3303, %v3296
      %v3542 = vpack.c.b16 %v3304, %v3297
      %v3543 = vpack.c.b16 %v3312, %v3305
      %v3544 = vpack.c.b16 %v3313, %v3306
      %v3545 = vpack.c.b16 %v3314, %v3307
      %v3546 = vpack.c.b16 %v3315, %v3308
      %v3547 = vpack.c.b16 %v3316, %v3309
      %v3548 = vpack.c.b16 %v3317, %v3310
      %v3549 = vpack.c.b16 %v3318, %v3311
      %v3550 = vpack.c.b16 %v3326, %v3319
      %v3551 = vpack.c.b16 %v3327, %v3320
      %v3552 = vpack.c.b16 %v3328, %v3321
      %v3553 = vpack.c.b16 %v3329, %v3322
      %v3554 = vpack.c.b16 %v3330, %v3323
      %v3555 = vpack.c.b16 %v3331, %v3324
      %v3556 = vpack.c.b16 %v3332, %v3325
      %v3557 = vpack.c.b16 %v3340, %v3333
      %v3558 = vpack.c.b16 %v3341, %v3334
      %v3559 = vpack.c.b16 %v3342, %v3335
      %v3560 = vpack.c.b16 %v3343, %v3336
      %v3561 = vpack.c.b16 %v3344, %v3337
      %v3562 = vpack.c.b16 %v3345, %v3338
      %v3563 = vpack.c.b16 %v3346, %v3339
      %v3564 = vpack.c.b16 %v3354, %v3347
      %v3565 = vpack.c.b16 %v3355, %v3348
      %v3566 = vpack.c.b16 %v3356, %v3349
      %v3567 = vpack.c.b16 %v3357, %v3350
      %v3568 = vpack.c.b16 %v3358, %v3351
      %v3569 = vpack.c.b16 %v3359, %v3352
      %v3570 = vpack.c.b16 %v3360, %v3353
      %v3571 = vpack.c.b16 %v3368, %v3361
      %v3572 = vpack.c.b16 %v3369, %v3362
      %v3573 = vpack.c.b16 %v3370, %v3363
      %v3574 = vpack.c.b16 %v3371, %v3364
      %v3575 = vpack.c.b16 %v3372, %v3365
      %v3576 = vpack.c.b16 %v3373, %v3366
      %v3577 = vpack.c.b16 %v3374, %v3367
      %v3578 = vpack.c.b16 %v3382, %v3375
      %v3579 = vpack.c.b16 %v3383, %v3376
      %v3580 = vpack.c.b16 %v3384, %v3377
      %v3581 = vpack.c.b16 %v3385, %v3378
      %v3582 = vpack.c.b16 %v3386, %v3379
      %v3583 = vpack.c.b16 %v3387, %v3380
      %v3584 = vpack.c.b16 %v3388, %v3381
      %v3585 = vpack.c.b16 %v3396, %v3389
      %v3586 = vpack.c.b16 %v3397, %v3390
      %v3587 = vpack.c.b16 %v3398, %v3391
      %v3588 = vpack.c.b16 %v3399, %v3392
      %v3589 = vpack.c.b16 %v3400, %v3393
      %v3590 = vpack.c.b16 %v3401, %v3394
      %v3591 = vpack.c.b16 %v3402, %v3395
      %v3592 = vpack.c.b16 %v3410, %v3403
      %v3593 = vpack.c.b16 %v3411, %v3404
      %v3594 = vpack.c.b16 %v3412, %v3405
      %v3595 = vpack.c.b16 %v3413, %v3406
      %v3596 = vpack.c.b16 %v3414, %v3407
      %v3597 = vpack.c.b16 %v3415, %v3408
      %v3598 = vpack.c.b16 %v3416, %v3409
      %v3599 = vpack.c.b16 %v3424, %v3417
      %v3600 = vpack.c.b16 %v3425, %v3418
      %v3601 = vpack.c.b16 %v3426, %v3419
      %v3602 = vpack.c.b16 %v3427, %v3420
      %v3603 = vpack.c.b16 %v3428, %v3421
      %v3604 = vpack.c.b16 %v3429, %v3422
      %v3605 = vpack.c.b16 %v3430, %v3423
      %v3782 = vsel %vm1675, %v2643, 0
      %3784 = vmatprep.subr.bf16.mxu0 %v3432
      %3785 = vmatpush1.bf16.msra.mxu0 %v3431
      %3786 = vmatprep.subr.bf16.mxu0 %v3439
      %3787 = vmatpush1.bf16.msra.mxu0 %v3438
      %3788 = vmatprep.subr.bf16.mxu0 %v3446
      %3789 = vmatpush1.bf16.msra.mxu0 %v3445
      %3790 = vmatprep.subr.bf16.mxu0 %v3453
      %3791 = vmatpush1.bf16.msra.mxu0 %v3452
      %3792 = vmatprep.subr.bf16.mxu0 %v3460
      %3793 = vmatpush1.bf16.msra.mxu0 %v3459
      %3794 = vmatprep.subr.bf16.mxu0 %v3467
      %3795 = vmatpush1.bf16.msra.mxu0 %v3466
      %3796 = vmatprep.subr.bf16.mxu0 %v3474
      %3797 = vmatpush1.bf16.msra.mxu0 %v3473
      %3798 = vmatprep.subr.bf16.mxu0 %v3481
      %3799 = vmatpush1.bf16.msra.mxu0 %v3480
      %3800 = vmatprep.subr.bf16.mxu0 %v3488
      %3801 = vmatpush1.bf16.msra.mxu0 %v3487
      %3802 = vmatprep.subr.bf16.mxu0 %v3495
      %3803 = vmatpush1.bf16.msra.mxu0 %v3494
      %3804 = vmatprep.subr.bf16.mxu0 %v3502
      %3805 = vmatpush1.bf16.msra.mxu0 %v3501
      %3806 = vmatprep.subr.bf16.mxu0 %v3509
      %3807 = vmatpush1.bf16.msra.mxu0 %v3508
      %3808 = vmatprep.subr.bf16.mxu0 %v3516
      %3809 = vmatpush1.bf16.msra.mxu0 %v3515
      %3810 = vmatprep.subr.bf16.mxu0 %v3523
      %3811 = vmatpush1.bf16.msra.mxu0 %v3522
      %3812 = vmatprep.subr.bf16.mxu0 %v3530
      %3813 = vmatpush1.bf16.msra.mxu0 %v3529
      %3814 = vmatprep.subr.bf16.mxu0 %v3537
      %3815 = vmatpush1.bf16.msra.mxu0 %v3536
      %3816 = vmatprep.mubr.bf16.mxu0 %v2641
      %3817 = vmatmul.mubr.bf16.gmra.mrb[0].mxu0 %v2640
      %v3818 = vpop.f32.mrb[0].mxu0
      %v3819 = vadd.f32 %v2849, %v3818
      %v3820 = vpop.f32.mrb[0].mxu0
      %v3821 = vadd.f32 %v2853, %v3820
      %v3822 = vpop.f32.mrb[0].mxu0
      %v3823 = vadd.f32 %v2849, %v3822
      %v3824 = vpop.f32.mrb[0].mxu0
      %v3825 = vadd.f32 %v2853, %v3824
      %3826 = vdwg.mxu0
      %3827 = vmatprep.subr.bf16.mxu0 %v3544
      %3828 = vmatpush1.bf16.msra.mxu0 %v3543
      %3829 = vmatprep.subr.bf16.mxu0 %v3551
      %3830 = vmatpush1.bf16.msra.mxu0 %v3550
      %3831 = vmatprep.subr.bf16.mxu0 %v3558
      %3832 = vmatpush1.bf16.msra.mxu0 %v3557
      %3833 = vmatprep.subr.bf16.mxu0 %v3565
      %3834 = vmatpush1.bf16.msra.mxu0 %v3564
      %3835 = vmatprep.subr.bf16.mxu0 %v3572
      %3836 = vmatpush1.bf16.msra.mxu0 %v3571
      %3837 = vmatprep.subr.bf16.mxu0 %v3579
      %3838 = vmatpush1.bf16.msra.mxu0 %v3578
      %3839 = vmatprep.subr.bf16.mxu0 %v3586
      %3840 = vmatpush1.bf16.msra.mxu0 %v3585
      %3841 = vmatprep.subr.bf16.mxu0 %v3593
      %3842 = vmatpush1.bf16.msra.mxu0 %v3592
      %3843 = vmatprep.subr.bf16.mxu0 %v3600
      %3844 = vmatpush1.bf16.msra.mxu0 %v3599
      %3845 = vmatprep.subr.bf16.mxu0 0
      %3846 = vmatpush1.bf16.msra.mxu0 0
      %3847 = vmatprep.subr.bf16.mxu0 0
      %3848 = vmatpush1.bf16.msra.mxu0 0
      %3849 = vmatprep.subr.bf16.mxu0 0
      %3850 = vmatpush1.bf16.msra.mxu0 0
      %3851 = vmatprep.subr.bf16.mxu0 0
      %3852 = vmatpush1.bf16.msra.mxu0 0
      %3853 = vmatprep.subr.bf16.mxu0 0
      %3854 = vmatpush1.bf16.msra.mxu0 0
      %3855 = vmatprep.subr.bf16.mxu0 0
      %3856 = vmatpush1.bf16.msra.mxu0 0
      %3857 = vmatprep.subr.bf16.mxu0 0
      %3858 = vmatpush1.bf16.msra.mxu0 0
      %3859 = vmatprep.mubr.bf16.mxu0 %v3782
      %3860 = vmatmul.mubr.bf16.gmra.mrb[0].mxu0 %v2642
      %v3861 = vpop.f32.mrb[0].mxu0
      %v3862 = vadd.f32 %v3819, %v3861
      %v3863 = vpop.f32.mrb[0].mxu0
      %v3864 = vadd.f32 %v3821, %v3863
      %v3865 = vpop.f32.mrb[0].mxu0
      %v3866 = vadd.f32 %v3823, %v3865
      %v3867 = vpop.f32.mrb[0].mxu0
      %v3868 = vadd.f32 %v3825, %v3867
      %3869 = vdwg.mxu0
      %3870 = vmatprep.subr.bf16.mxu0 %v3434
      %3871 = vmatpush1.bf16.msra.mxu0 %v3433
      %3872 = vmatprep.subr.bf16.mxu0 %v3441
      %3873 = vmatpush1.bf16.msra.mxu0 %v3440
      %3874 = vmatprep.subr.bf16.mxu0 %v3448
      %3875 = vmatpush1.bf16.msra.mxu0 %v3447
      %3876 = vmatprep.subr.bf16.mxu0 %v3455
      %3877 = vmatpush1.bf16.msra.mxu0 %v3454
      %3878 = vmatprep.subr.bf16.mxu0 %v3462
      %3879 = vmatpush1.bf16.msra.mxu0 %v3461
      %3880 = vmatprep.subr.bf16.mxu0 %v3469
      %3881 = vmatpush1.bf16.msra.mxu0 %v3468
      %3882 = vmatprep.subr.bf16.mxu0 %v3476
      %3883 = vmatpush1.bf16.msra.mxu0 %v3475
      %3884 = vmatprep.subr.bf16.mxu0 %v3483
      %3885 = vmatpush1.bf16.msra.mxu0 %v3482
      %3886 = vmatprep.subr.bf16.mxu0 %v3490
      %3887 = vmatpush1.bf16.msra.mxu0 %v3489
      %3888 = vmatprep.subr.bf16.mxu0 %v3497
      %3889 = vmatpush1.bf16.msra.mxu0 %v3496
      %3890 = vmatprep.subr.bf16.mxu0 %v3504
      %3891 = vmatpush1.bf16.msra.mxu0 %v3503
      %3892 = vmatprep.subr.bf16.mxu0 %v3511
      %3893 = vmatpush1.bf16.msra.mxu0 %v3510
      %3894 = vmatprep.subr.bf16.mxu0 %v3518
      %3895 = vmatpush1.bf16.msra.mxu0 %v3517
      %3896 = vmatprep.subr.bf16.mxu0 %v3525
      %3897 = vmatpush1.bf16.msra.mxu0 %v3524
      %3898 = vmatprep.subr.bf16.mxu0 %v3532
      %3899 = vmatpush1.bf16.msra.mxu0 %v3531
      %3900 = vmatprep.subr.bf16.mxu0 %v3539
      %3901 = vmatpush1.bf16.msra.mxu0 %v3538
      %3902 = vmatprep.mubr.bf16.mxu0 %v2641
      %3903 = vmatmul.mubr.bf16.gmra.mrb[0].mxu0 %v2640
      %v3904 = vpop.f32.mrb[0].mxu0
      %v3905 = vadd.f32 %v2857, %v3904
      %v3906 = vpop.f32.mrb[0].mxu0
      %v3907 = vadd.f32 %v2861, %v3906
      %v3908 = vpop.f32.mrb[0].mxu0
      %v3909 = vadd.f32 %v2857, %v3908
      %v3910 = vpop.f32.mrb[0].mxu0
      %v3911 = vadd.f32 %v2861, %v3910
      %3912 = vdwg.mxu0
      %3913 = vmatprep.subr.bf16.mxu0 %v3546
      %3914 = vmatpush1.bf16.msra.mxu0 %v3545
      %3915 = vmatprep.subr.bf16.mxu0 %v3553
      %3916 = vmatpush1.bf16.msra.mxu0 %v3552
      %3917 = vmatprep.subr.bf16.mxu0 %v3560
      %3918 = vmatpush1.bf16.msra.mxu0 %v3559
      %3919 = vmatprep.subr.bf16.mxu0 %v3567
      %3920 = vmatpush1.bf16.msra.mxu0 %v3566
      %3921 = vmatprep.subr.bf16.mxu0 %v3574
      %3922 = vmatpush1.bf16.msra.mxu0 %v3573
      %3923 = vmatprep.subr.bf16.mxu0 %v3581
      %3924 = vmatpush1.bf16.msra.mxu0 %v3580
      %3925 = vmatprep.subr.bf16.mxu0 %v3588
      %3926 = vmatpush1.bf16.msra.mxu0 %v3587
      %3927 = vmatprep.subr.bf16.mxu0 %v3595
      %3928 = vmatpush1.bf16.msra.mxu0 %v3594
      %3929 = vmatprep.subr.bf16.mxu0 %v3602
      %3930 = vmatpush1.bf16.msra.mxu0 %v3601
      %3931 = vmatprep.subr.bf16.mxu0 0
      %3932 = vmatpush1.bf16.msra.mxu0 0
      %3933 = vmatprep.subr.bf16.mxu0 0
      %3934 = vmatpush1.bf16.msra.mxu0 0
      %3935 = vmatprep.subr.bf16.mxu0 0
      %3936 = vmatpush1.bf16.msra.mxu0 0
      %3937 = vmatprep.subr.bf16.mxu0 0
      %3938 = vmatpush1.bf16.msra.mxu0 0
      %3939 = vmatprep.subr.bf16.mxu0 0
      %3940 = vmatpush1.bf16.msra.mxu0 0
      %3941 = vmatprep.subr.bf16.mxu0 0
      %3942 = vmatpush1.bf16.msra.mxu0 0
      %3943 = vmatprep.subr.bf16.mxu0 0
      %3944 = vmatpush1.bf16.msra.mxu0 0
      %3945 = vmatprep.mubr.bf16.mxu0 %v3782
      %3946 = vmatmul.mubr.bf16.gmra.mrb[0].mxu0 %v2642
      %v3947 = vpop.f32.mrb[0].mxu0
      %v3948 = vadd.f32 %v3905, %v3947
      %v3949 = vpop.f32.mrb[0].mxu0
      %v3950 = vadd.f32 %v3907, %v3949
      %v3951 = vpop.f32.mrb[0].mxu0
      %v3952 = vadd.f32 %v3909, %v3951
      %v3953 = vpop.f32.mrb[0].mxu0
      %v3954 = vadd.f32 %v3911, %v3953
      %3955 = vdwg.mxu0
      %3956 = vmatprep.subr.bf16.mxu0 %v3436
      %3957 = vmatpush1.bf16.msra.mxu0 %v3435
      %3958 = vmatprep.subr.bf16.mxu0 %v3443
      %3959 = vmatpush1.bf16.msra.mxu0 %v3442
      %3960 = vmatprep.subr.bf16.mxu0 %v3450
      %3961 = vmatpush1.bf16.msra.mxu0 %v3449
      %3962 = vmatprep.subr.bf16.mxu0 %v3457
      %3963 = vmatpush1.bf16.msra.mxu0 %v3456
      %3964 = vmatprep.subr.bf16.mxu0 %v3464
      %3965 = vmatpush1.bf16.msra.mxu0 %v3463
      %3966 = vmatprep.subr.bf16.mxu0 %v3471
      %3967 = vmatpush1.bf16.msra.mxu0 %v3470
      %3968 = vmatprep.subr.bf16.mxu0 %v3478
      %3969 = vmatpush1.bf16.msra.mxu0 %v3477
      %3970 = vmatprep.subr.bf16.mxu0 %v3485
      %3971 = vmatpush1.bf16.msra.mxu0 %v3484
      %3972 = vmatprep.subr.bf16.mxu0 %v3492
      %3973 = vmatpush1.bf16.msra.mxu0 %v3491
      %3974 = vmatprep.subr.bf16.mxu0 %v3499
      %3975 = vmatpush1.bf16.msra.mxu0 %v3498
      %3976 = vmatprep.subr.bf16.mxu0 %v3506
      %3977 = vmatpush1.bf16.msra.mxu0 %v3505
      %3978 = vmatprep.subr.bf16.mxu0 %v3513
      %3979 = vmatpush1.bf16.msra.mxu0 %v3512
      %3980 = vmatprep.subr.bf16.mxu0 %v3520
      %3981 = vmatpush1.bf16.msra.mxu0 %v3519
      %3982 = vmatprep.subr.bf16.mxu0 %v3527
      %3983 = vmatpush1.bf16.msra.mxu0 %v3526
      %3984 = vmatprep.subr.bf16.mxu0 %v3534
      %3985 = vmatpush1.bf16.msra.mxu0 %v3533
      %3986 = vmatprep.subr.bf16.mxu0 %v3541
      %3987 = vmatpush1.bf16.msra.mxu0 %v3540
      %3988 = vmatprep.mubr.bf16.mxu0 %v2641
      %3989 = vmatmul.mubr.bf16.gmra.mrb[0].mxu0 %v2640
      %v3990 = vpop.f32.mrb[0].mxu0
      %v3991 = vadd.f32 %v2865, %v3990
      %v3992 = vpop.f32.mrb[0].mxu0
      %v3993 = vadd.f32 %v2869, %v3992
      %v3994 = vpop.f32.mrb[0].mxu0
      %v3995 = vadd.f32 %v2865, %v3994
      %v3996 = vpop.f32.mrb[0].mxu0
      %v3997 = vadd.f32 %v2869, %v3996
      %3998 = vdwg.mxu0
      %3999 = vmatprep.subr.bf16.mxu0 %v3548
      %4000 = vmatpush1.bf16.msra.mxu0 %v3547
      %4001 = vmatprep.subr.bf16.mxu0 %v3555
      %4002 = vmatpush1.bf16.msra.mxu0 %v3554
      %4003 = vmatprep.subr.bf16.mxu0 %v3562
      %4004 = vmatpush1.bf16.msra.mxu0 %v3561
      %4005 = vmatprep.subr.bf16.mxu0 %v3569
      %4006 = vmatpush1.bf16.msra.mxu0 %v3568
      %4007 = vmatprep.subr.bf16.mxu0 %v3576
      %4008 = vmatpush1.bf16.msra.mxu0 %v3575
      %4009 = vmatprep.subr.bf16.mxu0 %v3583
      %4010 = vmatpush1.bf16.msra.mxu0 %v3582
      %4011 = vmatprep.subr.bf16.mxu0 %v3590
      %4012 = vmatpush1.bf16.msra.mxu0 %v3589
      %4013 = vmatprep.subr.bf16.mxu0 %v3597
      %4014 = vmatpush1.bf16.msra.mxu0 %v3596
      %4015 = vmatprep.subr.bf16.mxu0 %v3604
      %4016 = vmatpush1.bf16.msra.mxu0 %v3603
      %4017 = vmatprep.subr.bf16.mxu0 0
      %4018 = vmatpush1.bf16.msra.mxu0 0
      %4019 = vmatprep.subr.bf16.mxu0 0
      %4020 = vmatpush1.bf16.msra.mxu0 0
      %4021 = vmatprep.subr.bf16.mxu0 0
      %4022 = vmatpush1.bf16.msra.mxu0 0
      %4023 = vmatprep.subr.bf16.mxu0 0
      %4024 = vmatpush1.bf16.msra.mxu0 0
      %4025 = vmatprep.subr.bf16.mxu0 0
      %4026 = vmatpush1.bf16.msra.mxu0 0
      %4027 = vmatprep.subr.bf16.mxu0 0
      %4028 = vmatpush1.bf16.msra.mxu0 0
      %4029 = vmatprep.subr.bf16.mxu0 0
      %4030 = vmatpush1.bf16.msra.mxu0 0
      %4031 = vmatprep.mubr.bf16.mxu0 %v3782
      %4032 = vmatmul.mubr.bf16.gmra.mrb[0].mxu0 %v2642
      %v4033 = vpop.f32.mrb[0].mxu0
      %v4034 = vadd.f32 %v3991, %v4033
      %v4035 = vpop.f32.mrb[0].mxu0
      %v4036 = vadd.f32 %v3993, %v4035
      %v4037 = vpop.f32.mrb[0].mxu0
      %v4038 = vadd.f32 %v3995, %v4037
      %v4039 = vpop.f32.mrb[0].mxu0
      %v4040 = vadd.f32 %v3997, %v4039
      %4041 = vdwg.mxu0
      %4042 = vmatprep.subr.bf16.mxu0 0
      %4043 = vmatpush1.bf16.msra.mxu0 %v3437
      %4044 = vmatprep.subr.bf16.mxu0 0
      %4045 = vmatpush1.bf16.msra.mxu0 %v3444
      %4046 = vmatprep.subr.bf16.mxu0 0
      %4047 = vmatpush1.bf16.msra.mxu0 %v3451
      %4048 = vmatprep.subr.bf16.mxu0 0
      %4049 = vmatpush1.bf16.msra.mxu0 %v3458
      %4050 = vmatprep.subr.bf16.mxu0 0
      %4051 = vmatpush1.bf16.msra.mxu0 %v3465
      %4052 = vmatprep.subr.bf16.mxu0 0
      %4053 = vmatpush1.bf16.msra.mxu0 %v3472
      %4054 = vmatprep.subr.bf16.mxu0 0
      %4055 = vmatpush1.bf16.msra.mxu0 %v3479
      %4056 = vmatprep.subr.bf16.mxu0 0
      %4057 = vmatpush1.bf16.msra.mxu0 %v3486
      %4058 = vmatprep.subr.bf16.mxu0 0
      %4059 = vmatpush1.bf16.msra.mxu0 %v3493
      %4060 = vmatprep.subr.bf16.mxu0 0
      %4061 = vmatpush1.bf16.msra.mxu0 %v3500
      %4062 = vmatprep.subr.bf16.mxu0 0
      %4063 = vmatpush1.bf16.msra.mxu0 %v3507
      %4064 = vmatprep.subr.bf16.mxu0 0
      %4065 = vmatpush1.bf16.msra.mxu0 %v3514
      %4066 = vmatprep.subr.bf16.mxu0 0
      %4067 = vmatpush1.bf16.msra.mxu0 %v3521
      %4068 = vmatprep.subr.bf16.mxu0 0
      %4069 = vmatpush1.bf16.msra.mxu0 %v3528
      %4070 = vmatprep.subr.bf16.mxu0 0
      %4071 = vmatpush1.bf16.msra.mxu0 %v3535
      %4072 = vmatprep.subr.bf16.mxu0 0
      %4073 = vmatpush1.bf16.msra.mxu0 %v3542
      %4074 = vmatprep.mubr.bf16.mxu0 %v2641
      %4075 = vmatmul.mubr.bf16.gmra.mrb[0].mxu0 %v2640
      %v4076 = vpop.f32.mrb[0].mxu0
      %v4077 = vadd.f32 %v2873, %v4076
      %v4078 = vpop.f32.mrb[0].mxu0
      %v4079 = vpop.f32.mrb[0].mxu0
      %v4080 = vadd.f32 %v2873, %v4079
      %v4081 = vpop.f32.mrb[0].mxu0
      %4082 = vdwg.mxu0
      %4083 = vmatprep.subr.bf16.mxu0 0
      %4084 = vmatpush1.bf16.msra.mxu0 %v3549
      %4085 = vmatprep.subr.bf16.mxu0 0
      %4086 = vmatpush1.bf16.msra.mxu0 %v3556
      %4087 = vmatprep.subr.bf16.mxu0 0
      %4088 = vmatpush1.bf16.msra.mxu0 %v3563
      %4089 = vmatprep.subr.bf16.mxu0 0
      %4090 = vmatpush1.bf16.msra.mxu0 %v3570
      %4091 = vmatprep.subr.bf16.mxu0 0
      %4092 = vmatpush1.bf16.msra.mxu0 %v3577
      %4093 = vmatprep.subr.bf16.mxu0 0
      %4094 = vmatpush1.bf16.msra.mxu0 %v3584
      %4095 = vmatprep.subr.bf16.mxu0 0
      %4096 = vmatpush1.bf16.msra.mxu0 %v3591
      %4097 = vmatprep.subr.bf16.mxu0 0
      %4098 = vmatpush1.bf16.msra.mxu0 %v3598
      %4099 = vmatprep.subr.bf16.mxu0 0
      %4100 = vmatpush1.bf16.msra.mxu0 %v3605
      %4101 = vmatprep.subr.bf16.mxu0 0
      %4102 = vmatpush1.bf16.msra.mxu0 0
      %4103 = vmatprep.subr.bf16.mxu0 0
      %4104 = vmatpush1.bf16.msra.mxu0 0
      %4105 = vmatprep.subr.bf16.mxu0 0
      %4106 = vmatpush1.bf16.msra.mxu0 0
      %4107 = vmatprep.subr.bf16.mxu0 0
      %4108 = vmatpush1.bf16.msra.mxu0 0
      %4109 = vmatprep.subr.bf16.mxu0 0
      %4110 = vmatpush1.bf16.msra.mxu0 0
      %4111 = vmatprep.subr.bf16.mxu0 0
      %4112 = vmatpush1.bf16.msra.mxu0 0
      %4113 = vmatprep.subr.bf16.mxu0 0
      %4114 = vmatpush1.bf16.msra.mxu0 0
      %4115 = vmatprep.mubr.bf16.mxu0 %v3782
      %4116 = vmatmul.mubr.bf16.gmra.mrb[0].mxu0 %v2642
      %v4117 = vpop.f32.mrb[0].mxu0
      %v4118 = vadd.f32 %v4077, %v4117
      %v4119 = vpop.f32.mrb[0].mxu0
      %v4120 = vpop.f32.mrb[0].mxu0
      %v4121 = vadd.f32 %v4080, %v4120
      %v4122 = vpop.f32.mrb[0].mxu0
      %4123 = vdwg.mxu0
      %v4124 = vsub.f32 0.0, %v3862
      %v4125 = vsub.f32 0.0, %v3864
      %v4126 = vsub.f32 0.0, %v3948
      %v4127 = vsub.f32 0.0, %v3950
      %v4128 = vsub.f32 0.0, %v4034
      %v4129 = vsub.f32 0.0, %v4036
      %v4130 = vsub.f32 0.0, %v4118
      %v4131 = vsub.f32 0.0, %v3866
      %v4132 = vsub.f32 0.0, %v3868
      %v4133 = vsub.f32 0.0, %v3952
      %v4134 = vsub.f32 0.0, %v3954
      %v4135 = vsub.f32 0.0, %v4038
      %v4136 = vsub.f32 0.0, %v4040
      %v4137 = vsub.f32 0.0, %v4121
      %v4138 = vmul.f32 %v4124, 1.442695
      %v4139 = vpow.pop %v4138
      %v4140 = vmul.f32 %v4125, 1.442695
      %v4141 = vpow.pop %v4140
      %v4142 = vmul.f32 %v4126, 1.442695
      %v4143 = vpow.pop %v4142
      %v4144 = vmul.f32 %v4127, 1.442695
      %v4145 = vpow.pop %v4144
      %v4146 = vmul.f32 %v4128, 1.442695
      %v4147 = vpow.pop %v4146
      %v4148 = vmul.f32 %v4129, 1.442695
      %v4149 = vpow.pop %v4148
      %v4150 = vmul.f32 %v4130, 1.442695
      %v4151 = vpow.pop %v4150
      %v4152 = vmul.f32 %v4131, 1.442695
      %v4153 = vpow.pop %v4152
      %v4154 = vmul.f32 %v4132, 1.442695
      %v4155 = vpow.pop %v4154
      %v4156 = vmul.f32 %v4133, 1.442695
      %v4157 = vpow.pop %v4156
      %v4158 = vmul.f32 %v4134, 1.442695
      %v4159 = vpow.pop %v4158
      %v4160 = vmul.f32 %v4135, 1.442695
      %v4161 = vpow.pop %v4160
      %v4162 = vmul.f32 %v4136, 1.442695
      %v4163 = vpow.pop %v4162
      %v4164 = vmul.f32 %v4137, 1.442695
      %v4165 = vpow.pop %v4164
      %v4166 = vadd.f32 %v4139, 1.0
      %v4167 = vadd.f32 %v4141, 1.0
      %v4168 = vadd.f32 %v4143, 1.0
      %v4169 = vadd.f32 %v4145, 1.0
      %v4170 = vadd.f32 %v4147, 1.0
      %v4171 = vadd.f32 %v4149, 1.0
      %v4172 = vadd.f32 %v4151, 1.0
      %v4173 = vadd.f32 %v4153, 1.0
      %v4174 = vadd.f32 %v4155, 1.0
      %v4175 = vadd.f32 %v4157, 1.0
      %v4176 = vadd.f32 %v4159, 1.0
      %v4177 = vadd.f32 %v4161, 1.0
      %v4178 = vadd.f32 %v4163, 1.0
      %v4179 = vadd.f32 %v4165, 1.0
      %v4180 = vrcp.pop %v4166
      %v4181 = vmul.f32 1.0, %v4180
      %v4182 = vrcp.pop %v4167
      %v4183 = vmul.f32 1.0, %v4182
      %v4184 = vrcp.pop %v4168
      %v4185 = vmul.f32 1.0, %v4184
      %v4186 = vrcp.pop %v4169
      %v4187 = vmul.f32 1.0, %v4186
      %v4188 = vrcp.pop %v4170
      %v4189 = vmul.f32 1.0, %v4188
      %v4190 = vrcp.pop %v4171
      %v4191 = vmul.f32 1.0, %v4190
      %v4192 = vrcp.pop %v4172
      %v4193 = vmul.f32 1.0, %v4192
      %v4194 = vrcp.pop %v4173
      %v4195 = vmul.f32 1.0, %v4194
      %v4196 = vrcp.pop %v4174
      %v4197 = vmul.f32 1.0, %v4196
      %v4198 = vrcp.pop %v4175
      %v4199 = vmul.f32 1.0, %v4198
      %v4200 = vrcp.pop %v4176
      %v4201 = vmul.f32 1.0, %v4200
      %v4202 = vrcp.pop %v4177
      %v4203 = vmul.f32 1.0, %v4202
      %v4204 = vrcp.pop %v4178
      %v4205 = vmul.f32 1.0, %v4204
      %v4206 = vrcp.pop %v4179
      %v4207 = vmul.f32 1.0, %v4206
      %v4208 = vpack.c.bf16 %v4195, %v4181
      %v4209 = vpack.c.bf16 %v4197, %v4183
      %v4210 = vpack.c.bf16 %v4199, %v4185
      %v4211 = vpack.c.bf16 %v4201, %v4187
      %v4212 = vpack.c.bf16 %v4203, %v4189
      %v4213 = vpack.c.bf16 %v4205, %v4191
      %v4214 = vpack.c.bf16 %v4207, %v4193
      %v4222 = vunpack.c.l.b16 %v4208
      %v4223 = vunpack.c.l.b16 %v4209
      %v4224 = vunpack.c.l.b16 %v4210
      %v4225 = vunpack.c.l.b16 %v4211
      %v4226 = vunpack.c.l.b16 %v4212
      %v4227 = vunpack.c.l.b16 %v4213
      %v4228 = vunpack.c.l.b16 %v4214
      %v4229 = vunpack.c.h.b16 %v4208
      %v4230 = vunpack.c.h.b16 %v4209
      %v4231 = vunpack.c.h.b16 %v4210
      %v4232 = vunpack.c.h.b16 %v4211
      %v4233 = vunpack.c.h.b16 %v4212
      %v4234 = vunpack.c.h.b16 %v4213
      %v4235 = vunpack.c.h.b16 %v4214
      %v4236 = vpack.c.b16 %v4223, %v4222
      %v4237 = vpack.c.b16 %v4225, %v4224
      %v4238 = vpack.c.b16 %v4227, %v4226
      %v4239 = vpack.c.b16 %v4228, %v4228
      %v4240 = vpack.c.b16 %v4230, %v4229
      %v4241 = vpack.c.b16 %v4232, %v4231
      %v4242 = vpack.c.b16 %v4234, %v4233
      %v4243 = vpack.c.b16 %v4235, %v4235
      %4252 = vst [vmem:[%s424] sm:$0xff] %v4236
      %4253 = vst [vmem:[%s424 + $0x8] sm:$0xff] %v4237
      %4254 = vst [vmem:[%s424 + $0x10] sm:$0xff] %v4238
      %vm4255 = vcmask 125952
      %4256 = vst.msk [vmem:[%s424 + $0x18] sm:$0xf] %vm4255, %v4239
      %4257 = vst [vmem:[%s424 + $0x1c] sm:$0xff] %v4240
      %4258 = vst [vmem:[%s424 + $0x24] sm:$0xff] %v4241
      %4259 = vst [vmem:[%s424 + $0x2c] sm:$0xff] %v4242
      %4260 = vst.msk [vmem:[%s424 + $0x34] sm:$0xf] %vm4255, %v4243
      %s4261 = smul.u32 2, %s23
      %p4262 = scmp.lt.s32.totalorder %s4261, 3
      %s4263 = scalar_select %p4262, %s4261, 3
      %s4264 = smul.addr %s4263, 7
      %s4265 = smul.addr %s4264, 4
      %s4266 = scalar_lea.vmem %s10, %s4265
      %s4267 = smul.u32 2, %s23
      %p4268 = scmp.lt.s32.totalorder %s4267, 3
      %s4269 = scalar_select %p4268, %s4267, 3
      %s4270 = smul.addr %s4269, 2
      %s4271 = smul.addr %s4270, 8
      %s4272 = scalar_lea.vmem %s11, %s4271
      // Predicated region
      $region61: #{vae_dnn_forward.1} parent=59 // pred_check
        %p4273 = pneg %p261
      $region62: #{vae_dnn_forward.1} parent=59 // pred_check_branch
        %4275 = sbr.rel (%p4273) target = $region64
      $region63: #{vae_dnn_forward.1} parent=59 // pred_region
        %s4276 = smul.u32 2, %s23
      $region64: #{vae_dnn_forward.1} parent=59 // pred_fallthru
        _
      // Predicated region
      $region65: #{vae_dnn_forward.1} parent=59 // pred_check
        %p4277 = pneg %p287
      $region66: #{vae_dnn_forward.1} parent=59 // pred_check_branch
        %4279 = sbr.rel (%p4277) target = $region68
      $region67: #{vae_dnn_forward.1} parent=59 // pred_region
        %s4280 = smul.u32 2, %s23
      $region68: #{vae_dnn_forward.1} parent=59 // pred_fallthru
        _
    $region60: #{vae_dnn_forward.1} parent=5 // pred_fallthru
      _
    %p4281 = scmp.le.s32.totalorder 2, %s18
    // Predicated region
    $region69: #{vae_dnn_forward.1} parent=5 // pred_check
      %p4282 = pneg %p4281
    $region70: #{vae_dnn_forward.1} parent=5 // pred_check_branch
      %4284 = sbr.rel (%p4282) target = $region72
    $region71: #{vae_dnn_forward.1} parent=5 // pred_region
      %s4285 = ssub.s32 %s18, 2
      // Predicated region
      $region73: #{vae_dnn_forward.1} parent=71 // pred_check
        %p4286 = pneg %p267
      $region74: #{vae_dnn_forward.1} parent=71 // pred_check_branch
        %4288 = sbr.rel (%p4286) target = $region76
      $region75: #{vae_dnn_forward.1} parent=71 // pred_region
        %s4289 = smul.u32 2, %s24
        %p4290 = scmp.lt.s32.totalorder %s4289, 3
        %s4291 = scalar_select %p4290, %s4289, 3
        %s4292 = smul.addr %s4291, 7
        %s4293 = smul.addr %s4292, 4
        %s4294 = scalar_lea.vmem %s10, %s4293
      $region76: #{vae_dnn_forward.1} parent=71 // pred_fallthru
        _
      // Predicated region
      $region77: #{vae_dnn_forward.1} parent=71 // pred_check
        %p4295 = pneg %p293
      $region78: #{vae_dnn_forward.1} parent=71 // pred_check_branch
        %4297 = sbr.rel (%p4295) target = $region80
      $region79: #{vae_dnn_forward.1} parent=71 // pred_region
        %s4298 = smul.u32 2, %s24
        %p4299 = scmp.lt.s32.totalorder %s4298, 3
        %s4300 = scalar_select %p4299, %s4298, 3
        %s4301 = smul.addr %s4300, 2
        %s4302 = smul.addr %s4301, 8
        %s4303 = scalar_lea.vmem %s11, %s4302
      $region80: #{vae_dnn_forward.1} parent=71 // pred_fallthru
        _
    $region72: #{vae_dnn_forward.1} parent=5 // pred_fallthru
      _
  $region6: #{vae_dnn_forward.1} parent=0 // loop_footer
    %s22 = sadd.s32 1, %s18
  $region7: #{vae_dnn_forward.1} parent=0 // loop_footer_branch
    %17 = sbr.rel target = $region3
  $region8: #{vae_dnn_forward.1} parent=0 // loop_exit
    _

</llo_original>
